<compile_context>
chip_gen: v6e
topology: v6e:2x2x1
jax: 0.10.0
libtpu: 0.0.40
codegen_flags: <defaults>
</compile_context>

<pallas_src>
import functools

import jax
import jax.numpy as jnp
from jax.experimental import pallas as pl
from jax.experimental.pallas import tpu as pltpu

NUM_FEATURES = 1280   # efficientnet_b0 num_features
STEM_COUT = 32        # conv_stem output channels
HEAD_OUT = 1 + 3 + 4  # energy_loss(1) + alpha(3) + q0(4)
OUT_PAD = 128         # lane-dense padded head-output width


def _round_up(a, m):
    return ((a + m - 1) // m) * m


# ---------------------------------------------------------------------------
# Fused Pallas kernel: chunked stem matmul + SiLU + on-the-fly pool,
# then projection + SiLU + fused heads, all in one grid step per batch tile.
# ---------------------------------------------------------------------------
def _fused_forward_kernel(p_ref, ws_ref, wp_ref, wh_ref, bh_ref, o_ref,
                          pooled_ref, *, tb, howo):
    inv_hw = 1.0 / float(howo)

    # Chunk over the tb batch rows of this tile: per chunk the f32 stem
    # activation is only (howo, 32) (~8 vregs), and the global-average-pool
    # is accumulated immediately, so the full stem activation is never
    # materialized in registers or written back to HBM.
    for b in range(tb):                                            # static unroll
        p = p_ref[pl.ds(b * howo, howo), :]                        # (howo, 9) bf16
        s = jnp.dot(p, ws_ref[...],
                    preferred_element_type=jnp.float32)            # (howo, 32) f32
        act = s * jax.nn.sigmoid(s)                                # SiLU (stem), f32
        pooled_ref[pl.ds(b, 1), :] = (
            jnp.sum(act, axis=0, keepdims=True) * inv_hw)          # (1, 32) f32

    pooled = pooled_ref[...].astype(jnp.bfloat16)                  # (tb, 32)

    # Stand-in backbone tail: 32 -> 1280 projection + SiLU.
    h = jnp.dot(pooled, wp_ref[...],
                preferred_element_type=jnp.float32)                # (tb, 1280) f32
    h = h * jax.nn.sigmoid(h)

    # Three heads fused into one lane-dense (1280, 128) matmul + bias
    # (columns >= 8 are zero padding).
    o_ref[...] = (
        jnp.dot(h.astype(jnp.bfloat16), wh_ref[...],
                preferred_element_type=jnp.float32)
        + bh_ref[...]
    )                                                              # (tb, 128) f32


# ---------------------------------------------------------------------------
# Wrapper
# ---------------------------------------------------------------------------
def multi_head_classifier_forward(x, params):
    """Forward pass mirroring MultiHeadClassifier.forward (efficientnet path).

    x: (B, 1, H, W) float32 (NCHW, like the PyTorch module).
    params: output of prepare_params() (TPU-layout weights).
    """
    B, C, H, W = x.shape
    assert C == 1
    Ho, Wo = H // 2, W // 2
    HoWo = Ho * Wo

    # Batch tile: one grid step processes TB pooled rows.  8 at toy batch
    # (one f32 sublane tile), growing toward 128 to fill the MXU M dimension
    # of the 32->1280 projection as B grows.
    TB = min(128, _round_up(B, 8))
    Bp = _round_up(B, TB)
    num_tiles = Bp // TB

    # --- XLA glue: im2col patch extraction for the 3x3 stride-2 conv_stem ---
    xs = x[:, 0, :, :]                               # (B, H, W)
    if Bp != B:
        xs = jnp.pad(xs, ((0, Bp - B), (0, 0), (0, 0)))   # zero batch padding
    xp = jnp.pad(xs, ((0, 0), (1, 1), (1, 1)))       # pad=1
    cols = []
    for ki in range(3):                              # ki-outer, kj-inner matches
        for kj in range(3):                          # w_stem.reshape(32, 9)
            cols.append(xp[:, ki:ki + 2 * Ho:2, kj:kj + 2 * Wo:2])
    patches = (jnp.stack(cols, axis=-1)
               .reshape(Bp * HoWo, 9)
               .astype(jnp.bfloat16))                # (Bp*HoWo, 9)

    kernel = functools.partial(_fused_forward_kernel, tb=TB, howo=HoWo)

    fused = pl.pallas_call(
        kernel,
        out_shape=jax.ShapeDtypeStruct((Bp, OUT_PAD), jnp.float32),
        grid=(num_tiles,),
        in_specs=[
            pl.BlockSpec((TB * HoWo, 9), lambda i: (i, 0)),          # patches tile
            pl.BlockSpec((9, STEM_COUT), lambda i: (0, 0)),          # w_stem (resident)
            pl.BlockSpec((STEM_COUT, NUM_FEATURES), lambda i: (0, 0)),  # w_proj (resident)
            pl.BlockSpec((NUM_FEATURES, OUT_PAD), lambda i: (0, 0)),    # w_heads (resident)
            pl.BlockSpec((1, OUT_PAD), lambda i: (0, 0)),               # b_heads (resident)
        ],
        out_specs=pl.BlockSpec((TB, OUT_PAD), lambda i: (i, 0)),
        scratch_shapes=[pltpu.VMEM((TB, STEM_COUT), jnp.float32)],   # pooled accumulator
        compiler_params=pltpu.CompilerParams(
            dimension_semantics=("parallel",),
        ),
    )(patches, params["w_stem"], params["w_proj"],
      params["w_heads"], params["b_heads"])

    fused = fused[:B, :HEAD_OUT]                     # drop batch + lane padding
    return {
        "energy_loss_output": fused[:, 0:1],          # Linear(1280, 1)
        "alpha_output": fused[:, 1:4],                # Linear(1280, 3)
        "q0_output": fused[:, 4:8],                   # Linear(1280, 4)
    }


# ---------------------------------------------------------------------------
# Parameter init (PyTorch-layout) and one-time TPU layout prep
# ---------------------------------------------------------------------------
def init_params(key):
    k_stem, k_proj, k_eh, k_ah, k_qh, k_b = jax.random.split(key, 6)
    # conv_stem: (out=32, in=1, 3, 3), no bias
    w_stem = jax.random.normal(k_stem, (STEM_COUT, 1, 3, 3), jnp.float32) * 0.1
    # stand-in backbone tail projection 32 -> 1280
    w_proj = jax.random.normal(k_proj, (STEM_COUT, NUM_FEATURES), jnp.float32) * 0.05
    # heads (Linear(num_features, {1,3,4})) concatenated column-wise
    w_energy = jax.random.normal(k_eh, (NUM_FEATURES, 1), jnp.float32) * 0.02
    w_alpha = jax.random.normal(k_ah, (NUM_FEATURES, 3), jnp.float32) * 0.02
    w_q0 = jax.random.normal(k_qh, (NUM_FEATURES, 4), jnp.float32) * 0.02
    w_heads = jnp.concatenate([w_energy, w_alpha, w_q0], axis=1)      # (1280, 8)
    b_heads = jax.random.normal(k_b, (1, HEAD_OUT), jnp.float32) * 0.01
    return {
        "w_stem": w_stem,
        "w_proj": w_proj,
        "w_heads": w_heads,
        "b_heads": b_heads,
    }


def prepare_params(raw):
    """One-time layout prep (outside jit): transpose/cast/lane-pad weights."""
    w_stem = raw["w_stem"].reshape(STEM_COUT, 9).T.astype(jnp.bfloat16)   # (9, 32)
    w_proj = raw["w_proj"].astype(jnp.bfloat16)                           # (32, 1280)
    w_heads = jnp.pad(raw["w_heads"].astype(jnp.bfloat16),
                      ((0, 0), (0, OUT_PAD - HEAD_OUT)))                  # (1280, 128)
    b_heads = jnp.pad(raw["b_heads"].astype(jnp.float32),
                      ((0, 0), (0, OUT_PAD - HEAD_OUT)))                  # (1, 128)
    return {
        "w_stem": w_stem,
        "w_proj": w_proj,
        "w_heads": w_heads,
        "b_heads": b_heads,
    }


if __name__ == "__main__":
    key = jax.random.PRNGKey(0)
    k_x, k_p = jax.random.split(key)
    # Input matching the module default input_shape=(1, 32, 32), batch=2 (NCHW).
    x = jax.random.normal(k_x, (2, 1, 32, 32), jnp.float32)
    params = prepare_params(init_params(k_p))

    out = jax.jit(multi_head_classifier_forward)(x, params)
    out = jax.block_until_ready(out)

    assert out["energy_loss_output"].shape == (2, 1)
    assert out["alpha_output"].shape == (2, 3)
    assert out["q0_output"].shape == (2, 4)
    print("KERNEL_OK")
</pallas_src>

<mosaic_0001>
module attributes {stable_mosaic.version = 11 : i64} {
  func.func @_fused_forward_kernel(%arg0: i32, %arg1: memref<2048x9xbf16, #tpu.memory_space<vmem>>, %arg2: memref<9x32xbf16, #tpu.memory_space<vmem>>, %arg3: memref<32x1280xbf16, #tpu.memory_space<vmem>>, %arg4: memref<1280x128xbf16, #tpu.memory_space<vmem>>, %arg5: memref<1x128xf32, #tpu.memory_space<vmem>>, %arg6: memref<8x128xf32, #tpu.memory_space<vmem>>, %arg7: memref<8x32xf32, #tpu.memory_space<vmem>>) attributes {dimension_semantics = [#tpu.dimension_semantics<parallel>], iteration_bounds = array<i64: 1>, scalar_prefetch = 0 : i64, scratch_operands = 1 : i64, tpu.core_type = #tpu.core_type<tc>, window_params = [{transform_indices = @transform_0, window_bounds = array<i64: 2048, 9>}, {pipeline_mode = #tpu.pipeline_mode<synchronous>, transform_indices = @transform_1, window_bounds = array<i64: 9, 32>}, {pipeline_mode = #tpu.pipeline_mode<synchronous>, transform_indices = @transform_2, window_bounds = array<i64: 32, 1280>}, {pipeline_mode = #tpu.pipeline_mode<synchronous>, transform_indices = @transform_3, window_bounds = array<i64: 1280, 128>}, {pipeline_mode = #tpu.pipeline_mode<synchronous>, transform_indices = @transform_4, window_bounds = array<i64: 1, 128>}, {transform_indices = @transform_5, window_bounds = array<i64: 8, 128>}]} {
    %c0 = arith.constant 0 : index
    %c0_0 = arith.constant 0 : index
    %0 = vector.load %arg1[%c0, %c0_0] : memref<2048x9xbf16, #tpu.memory_space<vmem>>, vector<256x9xbf16>
    %c0_1 = arith.constant 0 : index
    %c0_2 = arith.constant 0 : index
    %1 = vector.load %arg2[%c0_1, %c0_2] : memref<9x32xbf16, #tpu.memory_space<vmem>>, vector<9x32xbf16>
    %cst = arith.constant dense<0.000000e+00> : vector<256x32xf32>
    %2 = tpu.matmul %0, %1, %cst {dimension_numbers = #tpu.dot_dimension_numbers<[1], [0], [0], [1], [0, 0, 1, 1], [], []>} : vector<256x9xbf16>, vector<9x32xbf16>, vector<256x32xf32> -> vector<256x32xf32>
    %3 = arith.negf %2 : vector<256x32xf32>
    %4 = math.exp %3 : vector<256x32xf32>
    %cst_3 = arith.constant 1.000000e+00 : f32
    %5 = vector.broadcast %cst_3 : f32 to vector<256x32xf32>
    %6 = arith.addf %5, %4 : vector<256x32xf32>
    %7 = arith.divf %5, %6 : vector<256x32xf32>
    %8 = arith.mulf %2, %7 : vector<256x32xf32>
    %cst_4 = arith.constant dense<0.000000e+00> : vector<32xf32>
    %9 = vector.multi_reduction <add>, %8, %cst_4 [0] : vector<256x32xf32> to vector<32xf32>
    %10 = vector.shape_cast %9 : vector<32xf32> to vector<1x32xf32>
    %cst_5 = arith.constant 3.906250e-03 : f32
    %11 = vector.broadcast %cst_5 : f32 to vector<1x32xf32>
    %12 = arith.mulf %10, %11 : vector<1x32xf32>
    %c0_6 = arith.constant 0 : index
    %c0_7 = arith.constant 0 : index
    %13 = vector.load %arg7[%c0_6, %c0_7] : memref<8x32xf32, #tpu.memory_space<vmem>>, vector<1x32xf32>
    tpu.vector_store %arg7[%c0_6, %c0_7], %12 {strides = array<i32>} : memref<8x32xf32, #tpu.memory_space<vmem>>, vector<1x32xf32>,
    %c256 = arith.constant 256 : index
    %c0_8 = arith.constant 0 : index
    %14 = vector.load %arg1[%c256, %c0_8] : memref<2048x9xbf16, #tpu.memory_space<vmem>>, vector<256x9xbf16>
    %c0_9 = arith.constant 0 : index
    %c0_10 = arith.constant 0 : index
    %15 = vector.load %arg2[%c0_9, %c0_10] : memref<9x32xbf16, #tpu.memory_space<vmem>>, vector<9x32xbf16>
    %cst_11 = arith.constant dense<0.000000e+00> : vector<256x32xf32>
    %16 = tpu.matmul %14, %15, %cst_11 {dimension_numbers = #tpu.dot_dimension_numbers<[1], [0], [0], [1], [0, 0, 1, 1], [], []>} : vector<256x9xbf16>, vector<9x32xbf16>, vector<256x32xf32> -> vector<256x32xf32>
    %17 = arith.negf %16 : vector<256x32xf32>
    %18 = math.exp %17 : vector<256x32xf32>
    %cst_12 = arith.constant 1.000000e+00 : f32
    %19 = vector.broadcast %cst_12 : f32 to vector<256x32xf32>
    %20 = arith.addf %19, %18 : vector<256x32xf32>
    %21 = arith.divf %19, %20 : vector<256x32xf32>
    %22 = arith.mulf %16, %21 : vector<256x32xf32>
    %cst_13 = arith.constant dense<0.000000e+00> : vector<32xf32>
    %23 = vector.multi_reduction <add>, %22, %cst_13 [0] : vector<256x32xf32> to vector<32xf32>
    %24 = vector.shape_cast %23 : vector<32xf32> to vector<1x32xf32>
    %cst_14 = arith.constant 3.906250e-03 : f32
    %25 = vector.broadcast %cst_14 : f32 to vector<1x32xf32>
    %26 = arith.mulf %24, %25 : vector<1x32xf32>
    %c1 = arith.constant 1 : index
    %c0_15 = arith.constant 0 : index
    %27 = vector.load %arg7[%c1, %c0_15] : memref<8x32xf32, #tpu.memory_space<vmem>>, vector<1x32xf32>
    tpu.vector_store %arg7[%c1, %c0_15], %26 {strides = array<i32>} : memref<8x32xf32, #tpu.memory_space<vmem>>, vector<1x32xf32>,
    %c512 = arith.constant 512 : index
    %c0_16 = arith.constant 0 : index
    %28 = vector.load %arg1[%c512, %c0_16] : memref<2048x9xbf16, #tpu.memory_space<vmem>>, vector<256x9xbf16>
    %c0_17 = arith.constant 0 : index
    %c0_18 = arith.constant 0 : index
    %29 = vector.load %arg2[%c0_17, %c0_18] : memref<9x32xbf16, #tpu.memory_space<vmem>>, vector<9x32xbf16>
    %cst_19 = arith.constant dense<0.000000e+00> : vector<256x32xf32>
    %30 = tpu.matmul %28, %29, %cst_19 {dimension_numbers = #tpu.dot_dimension_numbers<[1], [0], [0], [1], [0, 0, 1, 1], [], []>} : vector<256x9xbf16>, vector<9x32xbf16>, vector<256x32xf32> -> vector<256x32xf32>
    %31 = arith.negf %30 : vector<256x32xf32>
    %32 = math.exp %31 : vector<256x32xf32>
    %cst_20 = arith.constant 1.000000e+00 : f32
    %33 = vector.broadcast %cst_20 : f32 to vector<256x32xf32>
    %34 = arith.addf %33, %32 : vector<256x32xf32>
    %35 = arith.divf %33, %34 : vector<256x32xf32>
    %36 = arith.mulf %30, %35 : vector<256x32xf32>
    %cst_21 = arith.constant dense<0.000000e+00> : vector<32xf32>
    %37 = vector.multi_reduction <add>, %36, %cst_21 [0] : vector<256x32xf32> to vector<32xf32>
    %38 = vector.shape_cast %37 : vector<32xf32> to vector<1x32xf32>
    %cst_22 = arith.constant 3.906250e-03 : f32
    %39 = vector.broadcast %cst_22 : f32 to vector<1x32xf32>
    %40 = arith.mulf %38, %39 : vector<1x32xf32>
    %c2 = arith.constant 2 : index
    %c0_23 = arith.constant 0 : index
    %41 = vector.load %arg7[%c2, %c0_23] : memref<8x32xf32, #tpu.memory_space<vmem>>, vector<1x32xf32>
    tpu.vector_store %arg7[%c2, %c0_23], %40 {strides = array<i32>} : memref<8x32xf32, #tpu.memory_space<vmem>>, vector<1x32xf32>,
    %c768 = arith.constant 768 : index
    %c0_24 = arith.constant 0 : index
    %42 = vector.load %arg1[%c768, %c0_24] : memref<2048x9xbf16, #tpu.memory_space<vmem>>, vector<256x9xbf16>
    %c0_25 = arith.constant 0 : index
    %c0_26 = arith.constant 0 : index
    %43 = vector.load %arg2[%c0_25, %c0_26] : memref<9x32xbf16, #tpu.memory_space<vmem>>, vector<9x32xbf16>
    %cst_27 = arith.constant dense<0.000000e+00> : vector<256x32xf32>
    %44 = tpu.matmul %42, %43, %cst_27 {dimension_numbers = #tpu.dot_dimension_numbers<[1], [0], [0], [1], [0, 0, 1, 1], [], []>} : vector<256x9xbf16>, vector<9x32xbf16>, vector<256x32xf32> -> vector<256x32xf32>
    %45 = arith.negf %44 : vector<256x32xf32>
    %46 = math.exp %45 : vector<256x32xf32>
    %cst_28 = arith.constant 1.000000e+00 : f32
    %47 = vector.broadcast %cst_28 : f32 to vector<256x32xf32>
    %48 = arith.addf %47, %46 : vector<256x32xf32>
    %49 = arith.divf %47, %48 : vector<256x32xf32>
    %50 = arith.mulf %44, %49 : vector<256x32xf32>
    %cst_29 = arith.constant dense<0.000000e+00> : vector<32xf32>
    %51 = vector.multi_reduction <add>, %50, %cst_29 [0] : vector<256x32xf32> to vector<32xf32>
    %52 = vector.shape_cast %51 : vector<32xf32> to vector<1x32xf32>
    %cst_30 = arith.constant 3.906250e-03 : f32
    %53 = vector.broadcast %cst_30 : f32 to vector<1x32xf32>
    %54 = arith.mulf %52, %53 : vector<1x32xf32>
    %c3 = arith.constant 3 : index
    %c0_31 = arith.constant 0 : index
    %55 = vector.load %arg7[%c3, %c0_31] : memref<8x32xf32, #tpu.memory_space<vmem>>, vector<1x32xf32>
    tpu.vector_store %arg7[%c3, %c0_31], %54 {strides = array<i32>} : memref<8x32xf32, #tpu.memory_space<vmem>>, vector<1x32xf32>,
    %c1024 = arith.constant 1024 : index
    %c0_32 = arith.constant 0 : index
    %56 = vector.load %arg1[%c1024, %c0_32] : memref<2048x9xbf16, #tpu.memory_space<vmem>>, vector<256x9xbf16>
    %c0_33 = arith.constant 0 : index
    %c0_34 = arith.constant 0 : index
    %57 = vector.load %arg2[%c0_33, %c0_34] : memref<9x32xbf16, #tpu.memory_space<vmem>>, vector<9x32xbf16>
    %cst_35 = arith.constant dense<0.000000e+00> : vector<256x32xf32>
    %58 = tpu.matmul %56, %57, %cst_35 {dimension_numbers = #tpu.dot_dimension_numbers<[1], [0], [0], [1], [0, 0, 1, 1], [], []>} : vector<256x9xbf16>, vector<9x32xbf16>, vector<256x32xf32> -> vector<256x32xf32>
    %59 = arith.negf %58 : vector<256x32xf32>
    %60 = math.exp %59 : vector<256x32xf32>
    %cst_36 = arith.constant 1.000000e+00 : f32
    %61 = vector.broadcast %cst_36 : f32 to vector<256x32xf32>
    %62 = arith.addf %61, %60 : vector<256x32xf32>
    %63 = arith.divf %61, %62 : vector<256x32xf32>
    %64 = arith.mulf %58, %63 : vector<256x32xf32>
    %cst_37 = arith.constant dense<0.000000e+00> : vector<32xf32>
    %65 = vector.multi_reduction <add>, %64, %cst_37 [0] : vector<256x32xf32> to vector<32xf32>
    %66 = vector.shape_cast %65 : vector<32xf32> to vector<1x32xf32>
    %cst_38 = arith.constant 3.906250e-03 : f32
    %67 = vector.broadcast %cst_38 : f32 to vector<1x32xf32>
    %68 = arith.mulf %66, %67 : vector<1x32xf32>
    %c4 = arith.constant 4 : index
    %c0_39 = arith.constant 0 : index
    %69 = vector.load %arg7[%c4, %c0_39] : memref<8x32xf32, #tpu.memory_space<vmem>>, vector<1x32xf32>
    tpu.vector_store %arg7[%c4, %c0_39], %68 {strides = array<i32>} : memref<8x32xf32, #tpu.memory_space<vmem>>, vector<1x32xf32>,
    %c1280 = arith.constant 1280 : index
    %c0_40 = arith.constant 0 : index
    %70 = vector.load %arg1[%c1280, %c0_40] : memref<2048x9xbf16, #tpu.memory_space<vmem>>, vector<256x9xbf16>
    %c0_41 = arith.constant 0 : index
    %c0_42 = arith.constant 0 : index
    %71 = vector.load %arg2[%c0_41, %c0_42] : memref<9x32xbf16, #tpu.memory_space<vmem>>, vector<9x32xbf16>
    %cst_43 = arith.constant dense<0.000000e+00> : vector<256x32xf32>
    %72 = tpu.matmul %70, %71, %cst_43 {dimension_numbers = #tpu.dot_dimension_numbers<[1], [0], [0], [1], [0, 0, 1, 1], [], []>} : vector<256x9xbf16>, vector<9x32xbf16>, vector<256x32xf32> -> vector<256x32xf32>
    %73 = arith.negf %72 : vector<256x32xf32>
    %74 = math.exp %73 : vector<256x32xf32>
    %cst_44 = arith.constant 1.000000e+00 : f32
    %75 = vector.broadcast %cst_44 : f32 to vector<256x32xf32>
    %76 = arith.addf %75, %74 : vector<256x32xf32>
    %77 = arith.divf %75, %76 : vector<256x32xf32>
    %78 = arith.mulf %72, %77 : vector<256x32xf32>
    %cst_45 = arith.constant dense<0.000000e+00> : vector<32xf32>
    %79 = vector.multi_reduction <add>, %78, %cst_45 [0] : vector<256x32xf32> to vector<32xf32>
    %80 = vector.shape_cast %79 : vector<32xf32> to vector<1x32xf32>
    %cst_46 = arith.constant 3.906250e-03 : f32
    %81 = vector.broadcast %cst_46 : f32 to vector<1x32xf32>
    %82 = arith.mulf %80, %81 : vector<1x32xf32>
    %c5 = arith.constant 5 : index
    %c0_47 = arith.constant 0 : index
    %83 = vector.load %arg7[%c5, %c0_47] : memref<8x32xf32, #tpu.memory_space<vmem>>, vector<1x32xf32>
    tpu.vector_store %arg7[%c5, %c0_47], %82 {strides = array<i32>} : memref<8x32xf32, #tpu.memory_space<vmem>>, vector<1x32xf32>,
    %c1536 = arith.constant 1536 : index
    %c0_48 = arith.constant 0 : index
    %84 = vector.load %arg1[%c1536, %c0_48] : memref<2048x9xbf16, #tpu.memory_space<vmem>>, vector<256x9xbf16>
    %c0_49 = arith.constant 0 : index
    %c0_50 = arith.constant 0 : index
    %85 = vector.load %arg2[%c0_49, %c0_50] : memref<9x32xbf16, #tpu.memory_space<vmem>>, vector<9x32xbf16>
    %cst_51 = arith.constant dense<0.000000e+00> : vector<256x32xf32>
    %86 = tpu.matmul %84, %85, %cst_51 {dimension_numbers = #tpu.dot_dimension_numbers<[1], [0], [0], [1], [0, 0, 1, 1], [], []>} : vector<256x9xbf16>, vector<9x32xbf16>, vector<256x32xf32> -> vector<256x32xf32>
    %87 = arith.negf %86 : vector<256x32xf32>
    %88 = math.exp %87 : vector<256x32xf32>
    %cst_52 = arith.constant 1.000000e+00 : f32
    %89 = vector.broadcast %cst_52 : f32 to vector<256x32xf32>
    %90 = arith.addf %89, %88 : vector<256x32xf32>
    %91 = arith.divf %89, %90 : vector<256x32xf32>
    %92 = arith.mulf %86, %91 : vector<256x32xf32>
    %cst_53 = arith.constant dense<0.000000e+00> : vector<32xf32>
    %93 = vector.multi_reduction <add>, %92, %cst_53 [0] : vector<256x32xf32> to vector<32xf32>
    %94 = vector.shape_cast %93 : vector<32xf32> to vector<1x32xf32>
    %cst_54 = arith.constant 3.906250e-03 : f32
    %95 = vector.broadcast %cst_54 : f32 to vector<1x32xf32>
    %96 = arith.mulf %94, %95 : vector<1x32xf32>
    %c6 = arith.constant 6 : index
    %c0_55 = arith.constant 0 : index
    %97 = vector.load %arg7[%c6, %c0_55] : memref<8x32xf32, #tpu.memory_space<vmem>>, vector<1x32xf32>
    tpu.vector_store %arg7[%c6, %c0_55], %96 {strides = array<i32>} : memref<8x32xf32, #tpu.memory_space<vmem>>, vector<1x32xf32>,
    %c1792 = arith.constant 1792 : index
    %c0_56 = arith.constant 0 : index
    %98 = vector.load %arg1[%c1792, %c0_56] : memref<2048x9xbf16, #tpu.memory_space<vmem>>, vector<256x9xbf16>
    %c0_57 = arith.constant 0 : index
    %c0_58 = arith.constant 0 : index
    %99 = vector.load %arg2[%c0_57, %c0_58] : memref<9x32xbf16, #tpu.memory_space<vmem>>, vector<9x32xbf16>
    %cst_59 = arith.constant dense<0.000000e+00> : vector<256x32xf32>
    %100 = tpu.matmul %98, %99, %cst_59 {dimension_numbers = #tpu.dot_dimension_numbers<[1], [0], [0], [1], [0, 0, 1, 1], [], []>} : vector<256x9xbf16>, vector<9x32xbf16>, vector<256x32xf32> -> vector<256x32xf32>
    %101 = arith.negf %100 : vector<256x32xf32>
    %102 = math.exp %101 : vector<256x32xf32>
    %cst_60 = arith.constant 1.000000e+00 : f32
    %103 = vector.broadcast %cst_60 : f32 to vector<256x32xf32>
    %104 = arith.addf %103, %102 : vector<256x32xf32>
    %105 = arith.divf %103, %104 : vector<256x32xf32>
    %106 = arith.mulf %100, %105 : vector<256x32xf32>
    %cst_61 = arith.constant dense<0.000000e+00> : vector<32xf32>
    %107 = vector.multi_reduction <add>, %106, %cst_61 [0] : vector<256x32xf32> to vector<32xf32>
    %108 = vector.shape_cast %107 : vector<32xf32> to vector<1x32xf32>
    %cst_62 = arith.constant 3.906250e-03 : f32
    %109 = vector.broadcast %cst_62 : f32 to vector<1x32xf32>
    %110 = arith.mulf %108, %109 : vector<1x32xf32>
    %c7 = arith.constant 7 : index
    %c0_63 = arith.constant 0 : index
    %111 = vector.load %arg7[%c7, %c0_63] : memref<8x32xf32, #tpu.memory_space<vmem>>, vector<1x32xf32>
    tpu.vector_store %arg7[%c7, %c0_63], %110 {strides = array<i32>} : memref<8x32xf32, #tpu.memory_space<vmem>>, vector<1x32xf32>,
    %c0_64 = arith.constant 0 : index
    %c0_65 = arith.constant 0 : index
    %112 = vector.load %arg7[%c0_64, %c0_65] : memref<8x32xf32, #tpu.memory_space<vmem>>, vector<8x32xf32>
    %113 = arith.truncf %112 : vector<8x32xf32> to vector<8x32xbf16>
    %c0_66 = arith.constant 0 : index
    %c0_67 = arith.constant 0 : index
    %114 = vector.load %arg3[%c0_66, %c0_67] : memref<32x1280xbf16, #tpu.memory_space<vmem>>, vector<32x1280xbf16>
    %cst_68 = arith.constant dense<0.000000e+00> : vector<8x1280xf32>
    %115 = tpu.matmul %113, %114, %cst_68 {dimension_numbers = #tpu.dot_dimension_numbers<[1], [0], [0], [1], [0, 0, 1, 1], [], []>} : vector<8x32xbf16>, vector<32x1280xbf16>, vector<8x1280xf32> -> vector<8x1280xf32>
    %116 = arith.negf %115 : vector<8x1280xf32>
    %117 = math.exp %116 : vector<8x1280xf32>
    %cst_69 = arith.constant 1.000000e+00 : f32
    %118 = vector.broadcast %cst_69 : f32 to vector<8x1280xf32>
    %119 = arith.addf %118, %117 : vector<8x1280xf32>
    %120 = arith.divf %118, %119 : vector<8x1280xf32>
    %121 = arith.mulf %115, %120 : vector<8x1280xf32>
    %122 = arith.truncf %121 : vector<8x1280xf32> to vector<8x1280xbf16>
    %c0_70 = arith.constant 0 : index
    %c0_71 = arith.constant 0 : index
    %123 = vector.load %arg4[%c0_70, %c0_71] : memref<1280x128xbf16, #tpu.memory_space<vmem>>, vector<1280x128xbf16>
    %cst_72 = arith.constant dense<0.000000e+00> : vector<8x128xf32>
    %124 = tpu.matmul %122, %123, %cst_72 {dimension_numbers = #tpu.dot_dimension_numbers<[1], [0], [0], [1], [0, 0, 1, 1], [], []>} : vector<8x1280xbf16>, vector<1280x128xbf16>, vector<8x128xf32> -> vector<8x128xf32>
    %c0_73 = arith.constant 0 : index
    %c0_74 = arith.constant 0 : index
    %125 = vector.load %arg5[%c0_73, %c0_74] : memref<1x128xf32, #tpu.memory_space<vmem>>, vector<1x128xf32>
    %126 = vector.broadcast %125 : vector<1x128xf32> to vector<8x128xf32>
    %127 = arith.addf %124, %126 : vector<8x128xf32>
    %c0_75 = arith.constant 0 : index
    %c0_76 = arith.constant 0 : index
    %128 = vector.load %arg6[%c0_75, %c0_76] : memref<8x128xf32, #tpu.memory_space<vmem>>, vector<8x128xf32>
    tpu.vector_store %arg6[%c0_75, %c0_76], %127 {strides = array<i32>} : memref<8x128xf32, #tpu.memory_space<vmem>>, vector<8x128xf32>,
    return
  }
  func.func @transform_0(%arg0: i32) -> (i32, i32) {
    %c0_i32 = arith.constant 0 : i32
    %c0_i32_0 = arith.constant 0 : i32
    return %arg0, %c0_i32 : i32, i32
  }
  func.func @transform_1(%arg0: i32) -> (i32, i32) {
    %c0_i32 = arith.constant 0 : i32
    %c0_i32_0 = arith.constant 0 : i32
    %c0_i32_1 = arith.constant 0 : i32
    return %c0_i32, %c0_i32_0 : i32, i32
  }
  func.func @transform_2(%arg0: i32) -> (i32, i32) {
    %c0_i32 = arith.constant 0 : i32
    %c0_i32_0 = arith.constant 0 : i32
    %c0_i32_1 = arith.constant 0 : i32
    return %c0_i32, %c0_i32_0 : i32, i32
  }
  func.func @transform_3(%arg0: i32) -> (i32, i32) {
    %c0_i32 = arith.constant 0 : i32
    %c0_i32_0 = arith.constant 0 : i32
    %c0_i32_1 = arith.constant 0 : i32
    return %c0_i32, %c0_i32_0 : i32, i32
  }
  func.func @transform_4(%arg0: i32) -> (i32, i32) {
    %c0_i32 = arith.constant 0 : i32
    %c0_i32_0 = arith.constant 0 : i32
    %c0_i32_1 = arith.constant 0 : i32
    return %c0_i32, %c0_i32_0 : i32, i32
  }
  func.func @transform_5(%arg0: i32) -> (i32, i32) {
    %c0_i32 = arith.constant 0 : i32
    %c0_i32_0 = arith.constant 0 : i32
    return %arg0, %c0_i32 : i32, i32
  }
}

</mosaic_0001>

<llo_original>
// kernel: multi_head_classifier_forward.1
$region0: #{multi_head_classifier_forward.1}
  #allocation0 [shape = 'u32[]', space=smem, size = 0x4, offset = 0x4, fixed_abs, tag = 'smem constant byte address 0x4 - core index']
  #allocation1 [shape = 'u32[144,128]{1,0:T(1,128)}', space=vmem, size = 0x12000, scoped, tag = 'internal scratch']
  #allocation2 [shape = 'f32[8,32]{1,0:T(8,128)}', space=vmem, size = 0x1000, scoped, tag = 'scratch operand']
  %s0 = inlined_call_operand.vmem [shape: bf16[2048,9], index: 0, kind: input, shape index: {}]
  %s1 = inlined_call_operand.vmem [shape: bf16[9,32], index: 1, kind: input, shape index: {}]
  %s2 = inlined_call_operand.vmem [shape: bf16[32,1280], index: 2, kind: input, shape index: {}]
  %s3 = inlined_call_operand.vmem [shape: bf16[1280,128], index: 3, kind: input, shape index: {}]
  %s4 = inlined_call_operand.vmem [shape: f32[1,128], index: 4, kind: input, shape index: {}]
  %s5 = inlined_call_operand.vmem [shape: f32[8,128], index: 5, kind: output, shape index: {}]
  %s6 = sld [smem:[#allocation0]]
  $region30: #{multi_head_classifier_forward.1} parent=0
    _
  %s8 = ssub.s32 1, %s6
  %s9 = scalar_select 0, %s8, %s6
  // Predicated region
  $region2: #{multi_head_classifier_forward.1} parent=0 // pred_check
    _
  $region3: #{multi_head_classifier_forward.1} parent=0 // pred_check_branch
    %11 = sbr.rel (0) target = $region5
  $region4: #{multi_head_classifier_forward.1} parent=0 // pred_region
    _
  $region5: #{multi_head_classifier_forward.1} parent=0 // pred_fallthru
    _
  // Predicated region
  $region6: #{multi_head_classifier_forward.1} parent=0 // pred_check
    _
  $region7: #{multi_head_classifier_forward.1} parent=0 // pred_check_branch
    %13 = sbr.rel (0) target = $region9
  $region8: #{multi_head_classifier_forward.1} parent=0 // pred_region
    _
  $region9: #{multi_head_classifier_forward.1} parent=0 // pred_fallthru
    _
  // Predicated region
  $region10: #{multi_head_classifier_forward.1} parent=0 // pred_check
    _
  $region11: #{multi_head_classifier_forward.1} parent=0 // pred_check_branch
    %15 = sbr.rel (0) target = $region13
  $region12: #{multi_head_classifier_forward.1} parent=0 // pred_region
    _
  $region13: #{multi_head_classifier_forward.1} parent=0 // pred_fallthru
    _
  // Predicated region
  $region14: #{multi_head_classifier_forward.1} parent=0 // pred_check
    _
  $region15: #{multi_head_classifier_forward.1} parent=0 // pred_check_branch
    %17 = sbr.rel (0) target = $region17
  $region16: #{multi_head_classifier_forward.1} parent=0 // pred_region
    _
  $region17: #{multi_head_classifier_forward.1} parent=0 // pred_fallthru
    _
  // Predicated region
  $region18: #{multi_head_classifier_forward.1} parent=0 // pred_check
    _
  $region19: #{multi_head_classifier_forward.1} parent=0 // pred_check_branch
    %19 = sbr.rel (0) target = $region21
  $region20: #{multi_head_classifier_forward.1} parent=0 // pred_region
    _
  $region21: #{multi_head_classifier_forward.1} parent=0 // pred_fallthru
    _
  %v21 = vld [vmem:[%s0] sm:$0xf]
  %v22 = vld [vmem:[%s0 + $0x4] sm:$0xf]
  %v23 = vld [vmem:[%s0 + $0x8] sm:$0xf]
  %v24 = vld [vmem:[%s0 + $0xc] sm:$0xf]
  %v25 = vld [vmem:[%s0 + $0x10] sm:$0xf]
  %v26 = vld [vmem:[%s0 + $0x14] sm:$0xf]
  %v27 = vld [vmem:[%s0 + $0x18] sm:$0xf]
  %v28 = vld [vmem:[%s0 + $0x1c] sm:$0xf]
  %v29 = vld [vmem:[%s0 + $0x20] sm:$0xf]
  %v30 = vld [vmem:[%s0 + $0x24] sm:$0xf]
  %v31 = vld [vmem:[%s0 + $0x28] sm:$0xf]
  %v32 = vld [vmem:[%s0 + $0x2c] sm:$0xf]
  %v33 = vld [vmem:[%s0 + $0x30] sm:$0xf]
  %v34 = vld [vmem:[%s0 + $0x34] sm:$0xf]
  %v35 = vld [vmem:[%s0 + $0x38] sm:$0xf]
  %v36 = vld [vmem:[%s0 + $0x3c] sm:$0xf]
  %v37 = vld [vmem:[%s0 + $0x40] sm:$0xf]
  %v38 = vld [vmem:[%s0 + $0x44] sm:$0xf]
  %v39 = vld [vmem:[%s0 + $0x48] sm:$0xf]
  %v40 = vld [vmem:[%s0 + $0x4c] sm:$0xf]
  %v41 = vld [vmem:[%s0 + $0x50] sm:$0xf]
  %v42 = vld [vmem:[%s0 + $0x54] sm:$0xf]
  %v43 = vld [vmem:[%s0 + $0x58] sm:$0xf]
  %v44 = vld [vmem:[%s0 + $0x5c] sm:$0xf]
  %v45 = vld [vmem:[%s0 + $0x60] sm:$0xf]
  %v46 = vld [vmem:[%s0 + $0x64] sm:$0xf]
  %v47 = vld [vmem:[%s0 + $0x68] sm:$0xf]
  %v48 = vld [vmem:[%s0 + $0x6c] sm:$0xf]
  %v49 = vld [vmem:[%s0 + $0x70] sm:$0xf]
  %v50 = vld [vmem:[%s0 + $0x74] sm:$0xf]
  %v51 = vld [vmem:[%s0 + $0x78] sm:$0xf]
  %v52 = vld [vmem:[%s0 + $0x7c] sm:$0xf]
  %v53 = vld [vmem:[%s1] sm:$0xf]
  %v54 = vld [vmem:[%s1 + $0x4] sm:$0x1]
  %v87 = vunpack.c.l.b16 %v21
  %v88 = vunpack.c.l.b16 %v22
  %v89 = vunpack.c.l.b16 %v23
  %v90 = vunpack.c.l.b16 %v24
  %v91 = vunpack.c.l.b16 %v25
  %v92 = vunpack.c.l.b16 %v26
  %v93 = vunpack.c.l.b16 %v27
  %v94 = vunpack.c.l.b16 %v28
  %v95 = vunpack.c.l.b16 %v29
  %v96 = vunpack.c.l.b16 %v30
  %v97 = vunpack.c.l.b16 %v31
  %v98 = vunpack.c.l.b16 %v32
  %v99 = vunpack.c.l.b16 %v33
  %v100 = vunpack.c.l.b16 %v34
  %v101 = vunpack.c.l.b16 %v35
  %v102 = vunpack.c.l.b16 %v36
  %v103 = vunpack.c.l.b16 %v37
  %v104 = vunpack.c.l.b16 %v38
  %v105 = vunpack.c.l.b16 %v39
  %v106 = vunpack.c.l.b16 %v40
  %v107 = vunpack.c.l.b16 %v41
  %v108 = vunpack.c.l.b16 %v42
  %v109 = vunpack.c.l.b16 %v43
  %v110 = vunpack.c.l.b16 %v44
  %v111 = vunpack.c.l.b16 %v45
  %v112 = vunpack.c.l.b16 %v46
  %v113 = vunpack.c.l.b16 %v47
  %v114 = vunpack.c.l.b16 %v48
  %v115 = vunpack.c.l.b16 %v49
  %v116 = vunpack.c.l.b16 %v50
  %v117 = vunpack.c.l.b16 %v51
  %v118 = vunpack.c.l.b16 %v52
  %v119 = vpack.c.b16 %v88, %v87
  %v120 = vpack.c.b16 %v90, %v89
  %v121 = vpack.c.b16 %v92, %v91
  %v122 = vpack.c.b16 %v94, %v93
  %v123 = vpack.c.b16 %v96, %v95
  %v124 = vpack.c.b16 %v98, %v97
  %v125 = vpack.c.b16 %v100, %v99
  %v126 = vpack.c.b16 %v102, %v101
  %v127 = vpack.c.b16 %v104, %v103
  %v128 = vpack.c.b16 %v106, %v105
  %v129 = vpack.c.b16 %v108, %v107
  %v130 = vpack.c.b16 %v110, %v109
  %v131 = vpack.c.b16 %v112, %v111
  %v132 = vpack.c.b16 %v114, %v113
  %v133 = vpack.c.b16 %v116, %v115
  %v134 = vpack.c.b16 %v118, %v117
  %v137 = vunpack.c.l.b16 %v53
  %v138 = vunpack.c.l.b16 %v54
  %v139 = vpack.c.b16 %v138, %v137
  %vm140 = vcmask 72704
  %v142 = vsel %vm140, %v119, 0
  %v145 = vsel %vm140, %v120, 0
  %v148 = vsel %vm140, %v121, 0
  %v151 = vsel %vm140, %v122, 0
  %v154 = vsel %vm140, %v123, 0
  %v157 = vsel %vm140, %v124, 0
  %v160 = vsel %vm140, %v125, 0
  %v163 = vsel %vm140, %v126, 0
  %v166 = vsel %vm140, %v127, 0
  %v169 = vsel %vm140, %v128, 0
  %v172 = vsel %vm140, %v129, 0
  %v175 = vsel %vm140, %v130, 0
  %v178 = vsel %vm140, %v131, 0
  %v181 = vsel %vm140, %v132, 0
  %v184 = vsel %vm140, %v133, 0
  %v187 = vsel %vm140, %v134, 0
  %vm189 = vcmask 1043456
  %vm190 = vcmask 1044480
  %v191 = vsel %vm189, 4294967295, 65535
  %v192 = vsel %vm190, %v191, 0
  %v194 = vand.u32 %v139, %v192
  %196 = vmatprep.subr.bf16.mxu0 0
  %197 = vmatpush1.bf16.msra.mxu0 0
  %198 = vmatprep.subr.bf16.mxu0 0
  %199 = vmatpush1.bf16.msra.mxu0 0
  %200 = vmatprep.subr.bf16.mxu0 0
  %201 = vmatpush1.bf16.msra.mxu0 0
  %202 = vmatprep.subr.bf16.mxu0 0
  %203 = vmatpush1.bf16.msra.mxu0 0
  %204 = vmatprep.subr.bf16.mxu0 0
  %205 = vmatpush1.bf16.msra.mxu0 0
  %206 = vmatprep.subr.bf16.mxu0 0
  %207 = vmatpush1.bf16.msra.mxu0 0
  %208 = vmatprep.subr.bf16.mxu0 0
  %209 = vmatpush1.bf16.msra.mxu0 0
  %210 = vmatprep.subr.bf16.mxu0 0
  %211 = vmatpush1.bf16.msra.mxu0 %v194
  %212 = vmatprep.subr.bf16.mxu0 0
  %213 = vmatpush2.bf16.msra.mxu0 0
  %214 = vmatprep.subr.bf16.mxu0 0
  %215 = vmatpush2.bf16.msra.mxu0 0
  %216 = vmatprep.subr.bf16.mxu0 0
  %217 = vmatpush2.bf16.msra.mxu0 0
  %218 = vmatprep.subr.bf16.mxu0 0
  %219 = vmatpush2.bf16.msra.mxu0 0
  %220 = vmatprep.subr.bf16.mxu0 0
  %221 = vmatpush2.bf16.msra.mxu0 0
  %222 = vmatprep.subr.bf16.mxu0 0
  %223 = vmatpush2.bf16.msra.mxu0 0
  %224 = vmatprep.subr.bf16.mxu0 0
  %225 = vmatpush2.bf16.msra.mxu0 0
  %226 = vmatprep.subr.bf16.mxu0 0
  %227 = vmatpush2.bf16.msra.mxu0 0
  %228 = vmatprep.mubr.bf16.mxu0 0
  %229 = vmatmul.mubr.bf16.gmra.mxu0 %v142
  %v230 = vpop.f32.mrf.mxu0
  %v231 = vadd.f32 0.0, %v230
  %v232 = vpop.f32.mrf.mxu0
  %v233 = vpop.f32.mrf.mxu0
  %v234 = vadd.f32 0.0, %v233
  %v235 = vpop.f32.mrf.mxu0
  %236 = vmatprep.mubr.bf16.mxu0 0
  %237 = vmatmul.mubr.bf16.gmra.mxu0 %v145
  %v238 = vpop.f32.mrf.mxu0
  %v239 = vadd.f32 0.0, %v238
  %v240 = vpop.f32.mrf.mxu0
  %v241 = vpop.f32.mrf.mxu0
  %v242 = vadd.f32 0.0, %v241
  %v243 = vpop.f32.mrf.mxu0
  %244 = vmatprep.mubr.bf16.mxu0 0
  %245 = vmatmul.mubr.bf16.gmra.mxu0 %v148
  %v246 = vpop.f32.mrf.mxu0
  %v247 = vadd.f32 0.0, %v246
  %v248 = vpop.f32.mrf.mxu0
  %v249 = vpop.f32.mrf.mxu0
  %v250 = vadd.f32 0.0, %v249
  %v251 = vpop.f32.mrf.mxu0
  %252 = vmatprep.mubr.bf16.mxu0 0
  %253 = vmatmul.mubr.bf16.gmra.mxu0 %v151
  %v254 = vpop.f32.mrf.mxu0
  %v255 = vadd.f32 0.0, %v254
  %v256 = vpop.f32.mrf.mxu0
  %v257 = vpop.f32.mrf.mxu0
  %v258 = vadd.f32 0.0, %v257
  %v259 = vpop.f32.mrf.mxu0
  %260 = vmatprep.mubr.bf16.mxu0 0
  %261 = vmatmul.mubr.bf16.gmra.mxu0 %v154
  %v262 = vpop.f32.mrf.mxu0
  %v263 = vadd.f32 0.0, %v262
  %v264 = vpop.f32.mrf.mxu0
  %v265 = vpop.f32.mrf.mxu0
  %v266 = vadd.f32 0.0, %v265
  %v267 = vpop.f32.mrf.mxu0
  %268 = vmatprep.mubr.bf16.mxu0 0
  %269 = vmatmul.mubr.bf16.gmra.mxu0 %v157
  %v270 = vpop.f32.mrf.mxu0
  %v271 = vadd.f32 0.0, %v270
  %v272 = vpop.f32.mrf.mxu0
  %v273 = vpop.f32.mrf.mxu0
  %v274 = vadd.f32 0.0, %v273
  %v275 = vpop.f32.mrf.mxu0
  %276 = vmatprep.mubr.bf16.mxu0 0
  %277 = vmatmul.mubr.bf16.gmra.mxu0 %v160
  %v278 = vpop.f32.mrf.mxu0
  %v279 = vadd.f32 0.0, %v278
  %v280 = vpop.f32.mrf.mxu0
  %v281 = vpop.f32.mrf.mxu0
  %v282 = vadd.f32 0.0, %v281
  %v283 = vpop.f32.mrf.mxu0
  %284 = vmatprep.mubr.bf16.mxu0 0
  %285 = vmatmul.mubr.bf16.gmra.mxu0 %v163
  %v286 = vpop.f32.mrf.mxu0
  %v287 = vadd.f32 0.0, %v286
  %v288 = vpop.f32.mrf.mxu0
  %v289 = vpop.f32.mrf.mxu0
  %v290 = vadd.f32 0.0, %v289
  %v291 = vpop.f32.mrf.mxu0
  %292 = vmatprep.mubr.bf16.mxu0 0
  %293 = vmatmul.mubr.bf16.gmra.mxu0 %v166
  %v294 = vpop.f32.mrf.mxu0
  %v295 = vadd.f32 0.0, %v294
  %v296 = vpop.f32.mrf.mxu0
  %v297 = vpop.f32.mrf.mxu0
  %v298 = vadd.f32 0.0, %v297
  %v299 = vpop.f32.mrf.mxu0
  %300 = vmatprep.mubr.bf16.mxu0 0
  %301 = vmatmul.mubr.bf16.gmra.mxu0 %v169
  %v302 = vpop.f32.mrf.mxu0
  %v303 = vadd.f32 0.0, %v302
  %v304 = vpop.f32.mrf.mxu0
  %v305 = vpop.f32.mrf.mxu0
  %v306 = vadd.f32 0.0, %v305
  %v307 = vpop.f32.mrf.mxu0
  %308 = vmatprep.mubr.bf16.mxu0 0
  %309 = vmatmul.mubr.bf16.gmra.mxu0 %v172
  %v310 = vpop.f32.mrf.mxu0
  %v311 = vadd.f32 0.0, %v310
  %v312 = vpop.f32.mrf.mxu0
  %v313 = vpop.f32.mrf.mxu0
  %v314 = vadd.f32 0.0, %v313
  %v315 = vpop.f32.mrf.mxu0
  %316 = vmatprep.mubr.bf16.mxu0 0
  %317 = vmatmul.mubr.bf16.gmra.mxu0 %v175
  %v318 = vpop.f32.mrf.mxu0
  %v319 = vadd.f32 0.0, %v318
  %v320 = vpop.f32.mrf.mxu0
  %v321 = vpop.f32.mrf.mxu0
  %v322 = vadd.f32 0.0, %v321
  %v323 = vpop.f32.mrf.mxu0
  %324 = vmatprep.mubr.bf16.mxu0 0
  %325 = vmatmul.mubr.bf16.gmra.mxu0 %v178
  %v326 = vpop.f32.mrf.mxu0
  %v327 = vadd.f32 0.0, %v326
  %v328 = vpop.f32.mrf.mxu0
  %v329 = vpop.f32.mrf.mxu0
  %v330 = vadd.f32 0.0, %v329
  %v331 = vpop.f32.mrf.mxu0
  %332 = vmatprep.mubr.bf16.mxu0 0
  %333 = vmatmul.mubr.bf16.gmra.mxu0 %v181
  %v334 = vpop.f32.mrf.mxu0
  %v335 = vadd.f32 0.0, %v334
  %v336 = vpop.f32.mrf.mxu0
  %v337 = vpop.f32.mrf.mxu0
  %v338 = vadd.f32 0.0, %v337
  %v339 = vpop.f32.mrf.mxu0
  %340 = vmatprep.mubr.bf16.mxu0 0
  %341 = vmatmul.mubr.bf16.gmra.mxu0 %v184
  %v342 = vpop.f32.mrf.mxu0
  %v343 = vadd.f32 0.0, %v342
  %v344 = vpop.f32.mrf.mxu0
  %v345 = vpop.f32.mrf.mxu0
  %v346 = vadd.f32 0.0, %v345
  %v347 = vpop.f32.mrf.mxu0
  %348 = vmatprep.mubr.bf16.mxu0 0
  %349 = vmatmul.mubr.bf16.gmra.mxu0 %v187
  %v350 = vpop.f32.mrf.mxu0
  %v351 = vadd.f32 0.0, %v350
  %v352 = vpop.f32.mrf.mxu0
  %v353 = vpop.f32.mrf.mxu0
  %v354 = vadd.f32 0.0, %v353
  %v355 = vpop.f32.mrf.mxu0
  %356 = vdwg.mxu0
  %v357 = vxor.u32 %v231, 2147483648
  %v358 = vxor.u32 %v234, 2147483648
  %v359 = vxor.u32 %v239, 2147483648
  %v360 = vxor.u32 %v242, 2147483648
  %v361 = vxor.u32 %v247, 2147483648
  %v362 = vxor.u32 %v250, 2147483648
  %v363 = vxor.u32 %v255, 2147483648
  %v364 = vxor.u32 %v258, 2147483648
  %v365 = vxor.u32 %v263, 2147483648
  %v366 = vxor.u32 %v266, 2147483648
  %v367 = vxor.u32 %v271, 2147483648
  %v368 = vxor.u32 %v274, 2147483648
  %v369 = vxor.u32 %v279, 2147483648
  %v370 = vxor.u32 %v282, 2147483648
  %v371 = vxor.u32 %v287, 2147483648
  %v372 = vxor.u32 %v290, 2147483648
  %v373 = vxor.u32 %v295, 2147483648
  %v374 = vxor.u32 %v298, 2147483648
  %v375 = vxor.u32 %v303, 2147483648
  %v376 = vxor.u32 %v306, 2147483648
  %v377 = vxor.u32 %v311, 2147483648
  %v378 = vxor.u32 %v314, 2147483648
  %v379 = vxor.u32 %v319, 2147483648
  %v380 = vxor.u32 %v322, 2147483648
  %v381 = vxor.u32 %v327, 2147483648
  %v382 = vxor.u32 %v330, 2147483648
  %v383 = vxor.u32 %v335, 2147483648
  %v384 = vxor.u32 %v338, 2147483648
  %v385 = vxor.u32 %v343, 2147483648
  %v386 = vxor.u32 %v346, 2147483648
  %v387 = vxor.u32 %v351, 2147483648
  %v388 = vxor.u32 %v354, 2147483648
  %v389 = vmul.f32 %v357, 1.442695
  %v390 = vpow.pop %v389
  %v391 = vmul.f32 %v358, 1.442695
  %v392 = vpow.pop %v391
  %v393 = vmul.f32 %v359, 1.442695
  %v394 = vpow.pop %v393
  %v395 = vmul.f32 %v360, 1.442695
  %v396 = vpow.pop %v395
  %v397 = vmul.f32 %v361, 1.442695
  %v398 = vpow.pop %v397
  %v399 = vmul.f32 %v362, 1.442695
  %v400 = vpow.pop %v399
  %v401 = vmul.f32 %v363, 1.442695
  %v402 = vpow.pop %v401
  %v403 = vmul.f32 %v364, 1.442695
  %v404 = vpow.pop %v403
  %v405 = vmul.f32 %v365, 1.442695
  %v406 = vpow.pop %v405
  %v407 = vmul.f32 %v366, 1.442695
  %v408 = vpow.pop %v407
  %v409 = vmul.f32 %v367, 1.442695
  %v410 = vpow.pop %v409
  %v411 = vmul.f32 %v368, 1.442695
  %v412 = vpow.pop %v411
  %v413 = vmul.f32 %v369, 1.442695
  %v414 = vpow.pop %v413
  %v415 = vmul.f32 %v370, 1.442695
  %v416 = vpow.pop %v415
  %v417 = vmul.f32 %v371, 1.442695
  %v418 = vpow.pop %v417
  %v419 = vmul.f32 %v372, 1.442695
  %v420 = vpow.pop %v419
  %v421 = vmul.f32 %v373, 1.442695
  %v422 = vpow.pop %v421
  %v423 = vmul.f32 %v374, 1.442695
  %v424 = vpow.pop %v423
  %v425 = vmul.f32 %v375, 1.442695
  %v426 = vpow.pop %v425
  %v427 = vmul.f32 %v376, 1.442695
  %v428 = vpow.pop %v427
  %v429 = vmul.f32 %v377, 1.442695
  %v430 = vpow.pop %v429
  %v431 = vmul.f32 %v378, 1.442695
  %v432 = vpow.pop %v431
  %v433 = vmul.f32 %v379, 1.442695
  %v434 = vpow.pop %v433
  %v435 = vmul.f32 %v380, 1.442695
  %v436 = vpow.pop %v435
  %v437 = vmul.f32 %v381, 1.442695
  %v438 = vpow.pop %v437
  %v439 = vmul.f32 %v382, 1.442695
  %v440 = vpow.pop %v439
  %v441 = vmul.f32 %v383, 1.442695
  %v442 = vpow.pop %v441
  %v443 = vmul.f32 %v384, 1.442695
  %v444 = vpow.pop %v443
  %v445 = vmul.f32 %v385, 1.442695
  %v446 = vpow.pop %v445
  %v447 = vmul.f32 %v386, 1.442695
  %v448 = vpow.pop %v447
  %v449 = vmul.f32 %v387, 1.442695
  %v450 = vpow.pop %v449
  %v451 = vmul.f32 %v388, 1.442695
  %v452 = vpow.pop %v451
  %v453 = vadd.f32 %v390, 1.0
  %v454 = vadd.f32 %v392, 1.0
  %v455 = vadd.f32 %v394, 1.0
  %v456 = vadd.f32 %v396, 1.0
  %v457 = vadd.f32 %v398, 1.0
  %v458 = vadd.f32 %v400, 1.0
  %v459 = vadd.f32 %v402, 1.0
  %v460 = vadd.f32 %v404, 1.0
  %v461 = vadd.f32 %v406, 1.0
  %v462 = vadd.f32 %v408, 1.0
  %v463 = vadd.f32 %v410, 1.0
  %v464 = vadd.f32 %v412, 1.0
  %v465 = vadd.f32 %v414, 1.0
  %v466 = vadd.f32 %v416, 1.0
  %v467 = vadd.f32 %v418, 1.0
  %v468 = vadd.f32 %v420, 1.0
  %v469 = vadd.f32 %v422, 1.0
  %v470 = vadd.f32 %v424, 1.0
  %v471 = vadd.f32 %v426, 1.0
  %v472 = vadd.f32 %v428, 1.0
  %v473 = vadd.f32 %v430, 1.0
  %v474 = vadd.f32 %v432, 1.0
  %v475 = vadd.f32 %v434, 1.0
  %v476 = vadd.f32 %v436, 1.0
  %v477 = vadd.f32 %v438, 1.0
  %v478 = vadd.f32 %v440, 1.0
  %v479 = vadd.f32 %v442, 1.0
  %v480 = vadd.f32 %v444, 1.0
  %v481 = vadd.f32 %v446, 1.0
  %v482 = vadd.f32 %v448, 1.0
  %v483 = vadd.f32 %v450, 1.0
  %v484 = vadd.f32 %v452, 1.0
  %v485 = vrcp.pop %v453
  %v486 = vmul.f32 1.0, %v485
  %v487 = vrcp.pop %v454
  %v488 = vmul.f32 1.0, %v487
  %v489 = vrcp.pop %v455
  %v490 = vmul.f32 1.0, %v489
  %v491 = vrcp.pop %v456
  %v492 = vmul.f32 1.0, %v491
  %v493 = vrcp.pop %v457
  %v494 = vmul.f32 1.0, %v493
  %v495 = vrcp.pop %v458
  %v496 = vmul.f32 1.0, %v495
  %v497 = vrcp.pop %v459
  %v498 = vmul.f32 1.0, %v497
  %v499 = vrcp.pop %v460
  %v500 = vmul.f32 1.0, %v499
  %v501 = vrcp.pop %v461
  %v502 = vmul.f32 1.0, %v501
  %v503 = vrcp.pop %v462
  %v504 = vmul.f32 1.0, %v503
  %v505 = vrcp.pop %v463
  %v506 = vmul.f32 1.0, %v505
  %v507 = vrcp.pop %v464
  %v508 = vmul.f32 1.0, %v507
  %v509 = vrcp.pop %v465
  %v510 = vmul.f32 1.0, %v509
  %v511 = vrcp.pop %v466
  %v512 = vmul.f32 1.0, %v511
  %v513 = vrcp.pop %v467
  %v514 = vmul.f32 1.0, %v513
  %v515 = vrcp.pop %v468
  %v516 = vmul.f32 1.0, %v515
  %v517 = vrcp.pop %v469
  %v518 = vmul.f32 1.0, %v517
  %v519 = vrcp.pop %v470
  %v520 = vmul.f32 1.0, %v519
  %v521 = vrcp.pop %v471
  %v522 = vmul.f32 1.0, %v521
  %v523 = vrcp.pop %v472
  %v524 = vmul.f32 1.0, %v523
  %v525 = vrcp.pop %v473
  %v526 = vmul.f32 1.0, %v525
  %v527 = vrcp.pop %v474
  %v528 = vmul.f32 1.0, %v527
  %v529 = vrcp.pop %v475
  %v530 = vmul.f32 1.0, %v529
  %v531 = vrcp.pop %v476
  %v532 = vmul.f32 1.0, %v531
  %v533 = vrcp.pop %v477
  %v534 = vmul.f32 1.0, %v533
  %v535 = vrcp.pop %v478
  %v536 = vmul.f32 1.0, %v535
  %v537 = vrcp.pop %v479
  %v538 = vmul.f32 1.0, %v537
  %v539 = vrcp.pop %v480
  %v540 = vmul.f32 1.0, %v539
  %v541 = vrcp.pop %v481
  %v542 = vmul.f32 1.0, %v541
  %v543 = vrcp.pop %v482
  %v544 = vmul.f32 1.0, %v543
  %v545 = vrcp.pop %v483
  %v546 = vmul.f32 1.0, %v545
  %v547 = vrcp.pop %v484
  %v548 = vmul.f32 1.0, %v547
  %v549 = vmul.f32 %v231, %v486
  %v550 = vmul.f32 %v234, %v488
  %v551 = vmul.f32 %v239, %v490
  %v552 = vmul.f32 %v242, %v492
  %v553 = vmul.f32 %v247, %v494
  %v554 = vmul.f32 %v250, %v496
  %v555 = vmul.f32 %v255, %v498
  %v556 = vmul.f32 %v258, %v500
  %v557 = vmul.f32 %v263, %v502
  %v558 = vmul.f32 %v266, %v504
  %v559 = vmul.f32 %v271, %v506
  %v560 = vmul.f32 %v274, %v508
  %v561 = vmul.f32 %v279, %v510
  %v562 = vmul.f32 %v282, %v512
  %v563 = vmul.f32 %v287, %v514
  %v564 = vmul.f32 %v290, %v516
  %v565 = vmul.f32 %v295, %v518
  %v566 = vmul.f32 %v298, %v520
  %v567 = vmul.f32 %v303, %v522
  %v568 = vmul.f32 %v306, %v524
  %v569 = vmul.f32 %v311, %v526
  %v570 = vmul.f32 %v314, %v528
  %v571 = vmul.f32 %v319, %v530
  %v572 = vmul.f32 %v322, %v532
  %v573 = vmul.f32 %v327, %v534
  %v574 = vmul.f32 %v330, %v536
  %v575 = vmul.f32 %v335, %v538
  %v576 = vmul.f32 %v338, %v540
  %v577 = vmul.f32 %v343, %v542
  %v578 = vmul.f32 %v346, %v544
  %v579 = vmul.f32 %v351, %v546
  %v580 = vmul.f32 %v354, %v548
  %vm581 = vcmask 261120
  %v582 = vsel %vm581, %v549, 0.0
  %v583 = vsel %vm581, %v550, 0.0
  %v584 = vadd.f32 %v582, %v583
  %v585 = vsel %vm581, %v551, 0.0
  %v586 = vadd.f32 %v584, %v585
  %v587 = vsel %vm581, %v552, 0.0
  %v588 = vadd.f32 %v586, %v587
  %v589 = vsel %vm581, %v553, 0.0
  %v590 = vadd.f32 %v588, %v589
  %v591 = vsel %vm581, %v554, 0.0
  %v592 = vadd.f32 %v590, %v591
  %v593 = vsel %vm581, %v555, 0.0
  %v594 = vadd.f32 %v592, %v593
  %v595 = vsel %vm581, %v556, 0.0
  %v596 = vadd.f32 %v594, %v595
  %v597 = vsel %vm581, %v557, 0.0
  %v598 = vadd.f32 %v596, %v597
  %v599 = vsel %vm581, %v558, 0.0
  %v600 = vadd.f32 %v598, %v599
  %v601 = vsel %vm581, %v559, 0.0
  %v602 = vadd.f32 %v600, %v601
  %v603 = vsel %vm581, %v560, 0.0
  %v604 = vadd.f32 %v602, %v603
  %v605 = vsel %vm581, %v561, 0.0
  %v606 = vadd.f32 %v604, %v605
  %v607 = vsel %vm581, %v562, 0.0
  %v608 = vadd.f32 %v606, %v607
  %v609 = vsel %vm581, %v563, 0.0
  %v610 = vadd.f32 %v608, %v609
  %v611 = vsel %vm581, %v564, 0.0
  %v612 = vadd.f32 %v610, %v611
  %v613 = vsel %vm581, %v565, 0.0
  %v614 = vadd.f32 %v612, %v613
  %v615 = vsel %vm581, %v566, 0.0
  %v616 = vadd.f32 %v614, %v615
  %v617 = vsel %vm581, %v567, 0.0
  %v618 = vadd.f32 %v616, %v617
  %v619 = vsel %vm581, %v568, 0.0
  %v620 = vadd.f32 %v618, %v619
  %v621 = vsel %vm581, %v569, 0.0
  %v622 = vadd.f32 %v620, %v621
  %v623 = vsel %vm581, %v570, 0.0
  %v624 = vadd.f32 %v622, %v623
  %v625 = vsel %vm581, %v571, 0.0
  %v626 = vadd.f32 %v624, %v625
  %v627 = vsel %vm581, %v572, 0.0
  %v628 = vadd.f32 %v626, %v627
  %v629 = vsel %vm581, %v573, 0.0
  %v630 = vadd.f32 %v628, %v629
  %v631 = vsel %vm581, %v574, 0.0
  %v632 = vadd.f32 %v630, %v631
  %v633 = vsel %vm581, %v575, 0.0
  %v634 = vadd.f32 %v632, %v633
  %v635 = vsel %vm581, %v576, 0.0
  %v636 = vadd.f32 %v634, %v635
  %v637 = vsel %vm581, %v577, 0.0
  %v638 = vadd.f32 %v636, %v637
  %v639 = vsel %vm581, %v578, 0.0
  %v640 = vadd.f32 %v638, %v639
  %v641 = vsel %vm581, %v579, 0.0
  %v642 = vadd.f32 %v640, %v641
  %v643 = vsel %vm581, %v580, 0.0
  %v644 = vadd.f32 %v642, %v643
  %v645 = vrot.slane %v644, 4
  %v646 = vadd.f32 %v644, %v645
  %v647 = vrot.slane %v646, 2
  %v648 = vadd.f32 %v646, %v647
  %v649 = vrot.slane %v648, 1
  %v650 = vadd.f32 %v648, %v649
  %v651 = vmul.f32 %v650, 0.00390625
  %vm652 = vcmask 253952
  %653 = vst.msk [vmem:[#allocation2] sm:$0x1] %vm652, %v651
  %v654 = vld [vmem:[%s0 + $0x80] sm:$0xf]
  %v655 = vld [vmem:[%s0 + $0x84] sm:$0xf]
  %v656 = vld [vmem:[%s0 + $0x88] sm:$0xf]
  %v657 = vld [vmem:[%s0 + $0x8c] sm:$0xf]
  %v658 = vld [vmem:[%s0 + $0x90] sm:$0xf]
  %v659 = vld [vmem:[%s0 + $0x94] sm:$0xf]
  %v660 = vld [vmem:[%s0 + $0x98] sm:$0xf]
  %v661 = vld [vmem:[%s0 + $0x9c] sm:$0xf]
  %v662 = vld [vmem:[%s0 + $0xa0] sm:$0xf]
  %v663 = vld [vmem:[%s0 + $0xa4] sm:$0xf]
  %v664 = vld [vmem:[%s0 + $0xa8] sm:$0xf]
  %v665 = vld [vmem:[%s0 + $0xac] sm:$0xf]
  %v666 = vld [vmem:[%s0 + $0xb0] sm:$0xf]
  %v667 = vld [vmem:[%s0 + $0xb4] sm:$0xf]
  %v668 = vld [vmem:[%s0 + $0xb8] sm:$0xf]
  %v669 = vld [vmem:[%s0 + $0xbc] sm:$0xf]
  %v670 = vld [vmem:[%s0 + $0xc0] sm:$0xf]
  %v671 = vld [vmem:[%s0 + $0xc4] sm:$0xf]
  %v672 = vld [vmem:[%s0 + $0xc8] sm:$0xf]
  %v673 = vld [vmem:[%s0 + $0xcc] sm:$0xf]
  %v674 = vld [vmem:[%s0 + $0xd0] sm:$0xf]
  %v675 = vld [vmem:[%s0 + $0xd4] sm:$0xf]
  %v676 = vld [vmem:[%s0 + $0xd8] sm:$0xf]
  %v677 = vld [vmem:[%s0 + $0xdc] sm:$0xf]
  %v678 = vld [vmem:[%s0 + $0xe0] sm:$0xf]
  %v679 = vld [vmem:[%s0 + $0xe4] sm:$0xf]
  %v680 = vld [vmem:[%s0 + $0xe8] sm:$0xf]
  %v681 = vld [vmem:[%s0 + $0xec] sm:$0xf]
  %v682 = vld [vmem:[%s0 + $0xf0] sm:$0xf]
  %v683 = vld [vmem:[%s0 + $0xf4] sm:$0xf]
  %v684 = vld [vmem:[%s0 + $0xf8] sm:$0xf]
  %v685 = vld [vmem:[%s0 + $0xfc] sm:$0xf]
  %v686 = vld [vmem:[%s1] sm:$0xf]
  %v687 = vld [vmem:[%s1 + $0x4] sm:$0x1]
  %v720 = vunpack.c.l.b16 %v654
  %v721 = vunpack.c.l.b16 %v655
  %v722 = vunpack.c.l.b16 %v656
  %v723 = vunpack.c.l.b16 %v657
  %v724 = vunpack.c.l.b16 %v658
  %v725 = vunpack.c.l.b16 %v659
  %v726 = vunpack.c.l.b16 %v660
  %v727 = vunpack.c.l.b16 %v661
  %v728 = vunpack.c.l.b16 %v662
  %v729 = vunpack.c.l.b16 %v663
  %v730 = vunpack.c.l.b16 %v664
  %v731 = vunpack.c.l.b16 %v665
  %v732 = vunpack.c.l.b16 %v666
  %v733 = vunpack.c.l.b16 %v667
  %v734 = vunpack.c.l.b16 %v668
  %v735 = vunpack.c.l.b16 %v669
  %v736 = vunpack.c.l.b16 %v670
  %v737 = vunpack.c.l.b16 %v671
  %v738 = vunpack.c.l.b16 %v672
  %v739 = vunpack.c.l.b16 %v673
  %v740 = vunpack.c.l.b16 %v674
  %v741 = vunpack.c.l.b16 %v675
  %v742 = vunpack.c.l.b16 %v676
  %v743 = vunpack.c.l.b16 %v677
  %v744 = vunpack.c.l.b16 %v678
  %v745 = vunpack.c.l.b16 %v679
  %v746 = vunpack.c.l.b16 %v680
  %v747 = vunpack.c.l.b16 %v681
  %v748 = vunpack.c.l.b16 %v682
  %v749 = vunpack.c.l.b16 %v683
  %v750 = vunpack.c.l.b16 %v684
  %v751 = vunpack.c.l.b16 %v685
  %v752 = vpack.c.b16 %v721, %v720
  %v753 = vpack.c.b16 %v723, %v722
  %v754 = vpack.c.b16 %v725, %v724
  %v755 = vpack.c.b16 %v727, %v726
  %v756 = vpack.c.b16 %v729, %v728
  %v757 = vpack.c.b16 %v731, %v730
  %v758 = vpack.c.b16 %v733, %v732
  %v759 = vpack.c.b16 %v735, %v734
  %v760 = vpack.c.b16 %v737, %v736
  %v761 = vpack.c.b16 %v739, %v738
  %v762 = vpack.c.b16 %v741, %v740
  %v763 = vpack.c.b16 %v743, %v742
  %v764 = vpack.c.b16 %v745, %v744
  %v765 = vpack.c.b16 %v747, %v746
  %v766 = vpack.c.b16 %v749, %v748
  %v767 = vpack.c.b16 %v751, %v750
  %v770 = vunpack.c.l.b16 %v686
  %v771 = vunpack.c.l.b16 %v687
  %v772 = vpack.c.b16 %v771, %v770
  %v774 = vsel %vm140, %v752, 0
  %v777 = vsel %vm140, %v753, 0
  %v780 = vsel %vm140, %v754, 0
  %v783 = vsel %vm140, %v755, 0
  %v786 = vsel %vm140, %v756, 0
  %v789 = vsel %vm140, %v757, 0
  %v792 = vsel %vm140, %v758, 0
  %v795 = vsel %vm140, %v759, 0
  %v798 = vsel %vm140, %v760, 0
  %v801 = vsel %vm140, %v761, 0
  %v804 = vsel %vm140, %v762, 0
  %v807 = vsel %vm140, %v763, 0
  %v810 = vsel %vm140, %v764, 0
  %v813 = vsel %vm140, %v765, 0
  %v816 = vsel %vm140, %v766, 0
  %v819 = vsel %vm140, %v767, 0
  %v822 = vand.u32 %v772, %v192
  %824 = vmatprep.subr.bf16.mxu0 0
  %825 = vmatpush1.bf16.msra.mxu0 0
  %826 = vmatprep.subr.bf16.mxu0 0
  %827 = vmatpush1.bf16.msra.mxu0 0
  %828 = vmatprep.subr.bf16.mxu0 0
  %829 = vmatpush1.bf16.msra.mxu0 0
  %830 = vmatprep.subr.bf16.mxu0 0
  %831 = vmatpush1.bf16.msra.mxu0 0
  %832 = vmatprep.subr.bf16.mxu0 0
  %833 = vmatpush1.bf16.msra.mxu0 0
  %834 = vmatprep.subr.bf16.mxu0 0
  %835 = vmatpush1.bf16.msra.mxu0 0
  %836 = vmatprep.subr.bf16.mxu0 0
  %837 = vmatpush1.bf16.msra.mxu0 0
  %838 = vmatprep.subr.bf16.mxu0 0
  %839 = vmatpush1.bf16.msra.mxu0 %v822
  %840 = vmatprep.subr.bf16.mxu0 0
  %841 = vmatpush2.bf16.msra.mxu0 0
  %842 = vmatprep.subr.bf16.mxu0 0
  %843 = vmatpush2.bf16.msra.mxu0 0
  %844 = vmatprep.subr.bf16.mxu0 0
  %845 = vmatpush2.bf16.msra.mxu0 0
  %846 = vmatprep.subr.bf16.mxu0 0
  %847 = vmatpush2.bf16.msra.mxu0 0
  %848 = vmatprep.subr.bf16.mxu0 0
  %849 = vmatpush2.bf16.msra.mxu0 0
  %850 = vmatprep.subr.bf16.mxu0 0
  %851 = vmatpush2.bf16.msra.mxu0 0
  %852 = vmatprep.subr.bf16.mxu0 0
  %853 = vmatpush2.bf16.msra.mxu0 0
  %854 = vmatprep.subr.bf16.mxu0 0
  %855 = vmatpush2.bf16.msra.mxu0 0
  %856 = vmatprep.mubr.bf16.mxu0 0
  %857 = vmatmul.mubr.bf16.gmra.mxu0 %v774
  %v858 = vpop.f32.mrf.mxu0
  %v859 = vadd.f32 0.0, %v858
  %v860 = vpop.f32.mrf.mxu0
  %v861 = vpop.f32.mrf.mxu0
  %v862 = vadd.f32 0.0, %v861
  %v863 = vpop.f32.mrf.mxu0
  %864 = vmatprep.mubr.bf16.mxu0 0
  %865 = vmatmul.mubr.bf16.gmra.mxu0 %v777
  %v866 = vpop.f32.mrf.mxu0
  %v867 = vadd.f32 0.0, %v866
  %v868 = vpop.f32.mrf.mxu0
  %v869 = vpop.f32.mrf.mxu0
  %v870 = vadd.f32 0.0, %v869
  %v871 = vpop.f32.mrf.mxu0
  %872 = vmatprep.mubr.bf16.mxu0 0
  %873 = vmatmul.mubr.bf16.gmra.mxu0 %v780
  %v874 = vpop.f32.mrf.mxu0
  %v875 = vadd.f32 0.0, %v874
  %v876 = vpop.f32.mrf.mxu0
  %v877 = vpop.f32.mrf.mxu0
  %v878 = vadd.f32 0.0, %v877
  %v879 = vpop.f32.mrf.mxu0
  %880 = vmatprep.mubr.bf16.mxu0 0
  %881 = vmatmul.mubr.bf16.gmra.mxu0 %v783
  %v882 = vpop.f32.mrf.mxu0
  %v883 = vadd.f32 0.0, %v882
  %v884 = vpop.f32.mrf.mxu0
  %v885 = vpop.f32.mrf.mxu0
  %v886 = vadd.f32 0.0, %v885
  %v887 = vpop.f32.mrf.mxu0
  %888 = vmatprep.mubr.bf16.mxu0 0
  %889 = vmatmul.mubr.bf16.gmra.mxu0 %v786
  %v890 = vpop.f32.mrf.mxu0
  %v891 = vadd.f32 0.0, %v890
  %v892 = vpop.f32.mrf.mxu0
  %v893 = vpop.f32.mrf.mxu0
  %v894 = vadd.f32 0.0, %v893
  %v895 = vpop.f32.mrf.mxu0
  %896 = vmatprep.mubr.bf16.mxu0 0
  %897 = vmatmul.mubr.bf16.gmra.mxu0 %v789
  %v898 = vpop.f32.mrf.mxu0
  %v899 = vadd.f32 0.0, %v898
  %v900 = vpop.f32.mrf.mxu0
  %v901 = vpop.f32.mrf.mxu0
  %v902 = vadd.f32 0.0, %v901
  %v903 = vpop.f32.mrf.mxu0
  %904 = vmatprep.mubr.bf16.mxu0 0
  %905 = vmatmul.mubr.bf16.gmra.mxu0 %v792
  %v906 = vpop.f32.mrf.mxu0
  %v907 = vadd.f32 0.0, %v906
  %v908 = vpop.f32.mrf.mxu0
  %v909 = vpop.f32.mrf.mxu0
  %v910 = vadd.f32 0.0, %v909
  %v911 = vpop.f32.mrf.mxu0
  %912 = vmatprep.mubr.bf16.mxu0 0
  %913 = vmatmul.mubr.bf16.gmra.mxu0 %v795
  %v914 = vpop.f32.mrf.mxu0
  %v915 = vadd.f32 0.0, %v914
  %v916 = vpop.f32.mrf.mxu0
  %v917 = vpop.f32.mrf.mxu0
  %v918 = vadd.f32 0.0, %v917
  %v919 = vpop.f32.mrf.mxu0
  %920 = vmatprep.mubr.bf16.mxu0 0
  %921 = vmatmul.mubr.bf16.gmra.mxu0 %v798
  %v922 = vpop.f32.mrf.mxu0
  %v923 = vadd.f32 0.0, %v922
  %v924 = vpop.f32.mrf.mxu0
  %v925 = vpop.f32.mrf.mxu0
  %v926 = vadd.f32 0.0, %v925
  %v927 = vpop.f32.mrf.mxu0
  %928 = vmatprep.mubr.bf16.mxu0 0
  %929 = vmatmul.mubr.bf16.gmra.mxu0 %v801
  %v930 = vpop.f32.mrf.mxu0
  %v931 = vadd.f32 0.0, %v930
  %v932 = vpop.f32.mrf.mxu0
  %v933 = vpop.f32.mrf.mxu0
  %v934 = vadd.f32 0.0, %v933
  %v935 = vpop.f32.mrf.mxu0
  %936 = vmatprep.mubr.bf16.mxu0 0
  %937 = vmatmul.mubr.bf16.gmra.mxu0 %v804
  %v938 = vpop.f32.mrf.mxu0
  %v939 = vadd.f32 0.0, %v938
  %v940 = vpop.f32.mrf.mxu0
  %v941 = vpop.f32.mrf.mxu0
  %v942 = vadd.f32 0.0, %v941
  %v943 = vpop.f32.mrf.mxu0
  %944 = vmatprep.mubr.bf16.mxu0 0
  %945 = vmatmul.mubr.bf16.gmra.mxu0 %v807
  %v946 = vpop.f32.mrf.mxu0
  %v947 = vadd.f32 0.0, %v946
  %v948 = vpop.f32.mrf.mxu0
  %v949 = vpop.f32.mrf.mxu0
  %v950 = vadd.f32 0.0, %v949
  %v951 = vpop.f32.mrf.mxu0
  %952 = vmatprep.mubr.bf16.mxu0 0
  %953 = vmatmul.mubr.bf16.gmra.mxu0 %v810
  %v954 = vpop.f32.mrf.mxu0
  %v955 = vadd.f32 0.0, %v954
  %v956 = vpop.f32.mrf.mxu0
  %v957 = vpop.f32.mrf.mxu0
  %v958 = vadd.f32 0.0, %v957
  %v959 = vpop.f32.mrf.mxu0
  %960 = vmatprep.mubr.bf16.mxu0 0
  %961 = vmatmul.mubr.bf16.gmra.mxu0 %v813
  %v962 = vpop.f32.mrf.mxu0
  %v963 = vadd.f32 0.0, %v962
  %v964 = vpop.f32.mrf.mxu0
  %v965 = vpop.f32.mrf.mxu0
  %v966 = vadd.f32 0.0, %v965
  %v967 = vpop.f32.mrf.mxu0
  %968 = vmatprep.mubr.bf16.mxu0 0
  %969 = vmatmul.mubr.bf16.gmra.mxu0 %v816
  %v970 = vpop.f32.mrf.mxu0
  %v971 = vadd.f32 0.0, %v970
  %v972 = vpop.f32.mrf.mxu0
  %v973 = vpop.f32.mrf.mxu0
  %v974 = vadd.f32 0.0, %v973
  %v975 = vpop.f32.mrf.mxu0
  %976 = vmatprep.mubr.bf16.mxu0 0
  %977 = vmatmul.mubr.bf16.gmra.mxu0 %v819
  %v978 = vpop.f32.mrf.mxu0
  %v979 = vadd.f32 0.0, %v978
  %v980 = vpop.f32.mrf.mxu0
  %v981 = vpop.f32.mrf.mxu0
  %v982 = vadd.f32 0.0, %v981
  %v983 = vpop.f32.mrf.mxu0
  %984 = vdwg.mxu0
  %v985 = vxor.u32 %v859, 2147483648
  %v986 = vxor.u32 %v862, 2147483648
  %v987 = vxor.u32 %v867, 2147483648
  %v988 = vxor.u32 %v870, 2147483648
  %v989 = vxor.u32 %v875, 2147483648
  %v990 = vxor.u32 %v878, 2147483648
  %v991 = vxor.u32 %v883, 2147483648
  %v992 = vxor.u32 %v886, 2147483648
  %v993 = vxor.u32 %v891, 2147483648
  %v994 = vxor.u32 %v894, 2147483648
  %v995 = vxor.u32 %v899, 2147483648
  %v996 = vxor.u32 %v902, 2147483648
  %v997 = vxor.u32 %v907, 2147483648
  %v998 = vxor.u32 %v910, 2147483648
  %v999 = vxor.u32 %v915, 2147483648
  %v1000 = vxor.u32 %v918, 2147483648
  %v1001 = vxor.u32 %v923, 2147483648
  %v1002 = vxor.u32 %v926, 2147483648
  %v1003 = vxor.u32 %v931, 2147483648
  %v1004 = vxor.u32 %v934, 2147483648
  %v1005 = vxor.u32 %v939, 2147483648
  %v1006 = vxor.u32 %v942, 2147483648
  %v1007 = vxor.u32 %v947, 2147483648
  %v1008 = vxor.u32 %v950, 2147483648
  %v1009 = vxor.u32 %v955, 2147483648
  %v1010 = vxor.u32 %v958, 2147483648
  %v1011 = vxor.u32 %v963, 2147483648
  %v1012 = vxor.u32 %v966, 2147483648
  %v1013 = vxor.u32 %v971, 2147483648
  %v1014 = vxor.u32 %v974, 2147483648
  %v1015 = vxor.u32 %v979, 2147483648
  %v1016 = vxor.u32 %v982, 2147483648
  %v1017 = vmul.f32 %v985, 1.442695
  %v1018 = vpow.pop %v1017
  %v1019 = vmul.f32 %v986, 1.442695
  %v1020 = vpow.pop %v1019
  %v1021 = vmul.f32 %v987, 1.442695
  %v1022 = vpow.pop %v1021
  %v1023 = vmul.f32 %v988, 1.442695
  %v1024 = vpow.pop %v1023
  %v1025 = vmul.f32 %v989, 1.442695
  %v1026 = vpow.pop %v1025
  %v1027 = vmul.f32 %v990, 1.442695
  %v1028 = vpow.pop %v1027
  %v1029 = vmul.f32 %v991, 1.442695
  %v1030 = vpow.pop %v1029
  %v1031 = vmul.f32 %v992, 1.442695
  %v1032 = vpow.pop %v1031
  %v1033 = vmul.f32 %v993, 1.442695
  %v1034 = vpow.pop %v1033
  %v1035 = vmul.f32 %v994, 1.442695
  %v1036 = vpow.pop %v1035
  %v1037 = vmul.f32 %v995, 1.442695
  %v1038 = vpow.pop %v1037
  %v1039 = vmul.f32 %v996, 1.442695
  %v1040 = vpow.pop %v1039
  %v1041 = vmul.f32 %v997, 1.442695
  %v1042 = vpow.pop %v1041
  %v1043 = vmul.f32 %v998, 1.442695
  %v1044 = vpow.pop %v1043
  %v1045 = vmul.f32 %v999, 1.442695
  %v1046 = vpow.pop %v1045
  %v1047 = vmul.f32 %v1000, 1.442695
  %v1048 = vpow.pop %v1047
  %v1049 = vmul.f32 %v1001, 1.442695
  %v1050 = vpow.pop %v1049
  %v1051 = vmul.f32 %v1002, 1.442695
  %v1052 = vpow.pop %v1051
  %v1053 = vmul.f32 %v1003, 1.442695
  %v1054 = vpow.pop %v1053
  %v1055 = vmul.f32 %v1004, 1.442695
  %v1056 = vpow.pop %v1055
  %v1057 = vmul.f32 %v1005, 1.442695
  %v1058 = vpow.pop %v1057
  %v1059 = vmul.f32 %v1006, 1.442695
  %v1060 = vpow.pop %v1059
  %v1061 = vmul.f32 %v1007, 1.442695
  %v1062 = vpow.pop %v1061
  %v1063 = vmul.f32 %v1008, 1.442695
  %v1064 = vpow.pop %v1063
  %v1065 = vmul.f32 %v1009, 1.442695
  %v1066 = vpow.pop %v1065
  %v1067 = vmul.f32 %v1010, 1.442695
  %v1068 = vpow.pop %v1067
  %v1069 = vmul.f32 %v1011, 1.442695
  %v1070 = vpow.pop %v1069
  %v1071 = vmul.f32 %v1012, 1.442695
  %v1072 = vpow.pop %v1071
  %v1073 = vmul.f32 %v1013, 1.442695
  %v1074 = vpow.pop %v1073
  %v1075 = vmul.f32 %v1014, 1.442695
  %v1076 = vpow.pop %v1075
  %v1077 = vmul.f32 %v1015, 1.442695
  %v1078 = vpow.pop %v1077
  %v1079 = vmul.f32 %v1016, 1.442695
  %v1080 = vpow.pop %v1079
  %v1081 = vadd.f32 %v1018, 1.0
  %v1082 = vadd.f32 %v1020, 1.0
  %v1083 = vadd.f32 %v1022, 1.0
  %v1084 = vadd.f32 %v1024, 1.0
  %v1085 = vadd.f32 %v1026, 1.0
  %v1086 = vadd.f32 %v1028, 1.0
  %v1087 = vadd.f32 %v1030, 1.0
  %v1088 = vadd.f32 %v1032, 1.0
  %v1089 = vadd.f32 %v1034, 1.0
  %v1090 = vadd.f32 %v1036, 1.0
  %v1091 = vadd.f32 %v1038, 1.0
  %v1092 = vadd.f32 %v1040, 1.0
  %v1093 = vadd.f32 %v1042, 1.0
  %v1094 = vadd.f32 %v1044, 1.0
  %v1095 = vadd.f32 %v1046, 1.0
  %v1096 = vadd.f32 %v1048, 1.0
  %v1097 = vadd.f32 %v1050, 1.0
  %v1098 = vadd.f32 %v1052, 1.0
  %v1099 = vadd.f32 %v1054, 1.0
  %v1100 = vadd.f32 %v1056, 1.0
  %v1101 = vadd.f32 %v1058, 1.0
  %v1102 = vadd.f32 %v1060, 1.0
  %v1103 = vadd.f32 %v1062, 1.0
  %v1104 = vadd.f32 %v1064, 1.0
  %v1105 = vadd.f32 %v1066, 1.0
  %v1106 = vadd.f32 %v1068, 1.0
  %v1107 = vadd.f32 %v1070, 1.0
  %v1108 = vadd.f32 %v1072, 1.0
  %v1109 = vadd.f32 %v1074, 1.0
  %v1110 = vadd.f32 %v1076, 1.0
  %v1111 = vadd.f32 %v1078, 1.0
  %v1112 = vadd.f32 %v1080, 1.0
  %v1113 = vrcp.pop %v1081
  %v1114 = vmul.f32 1.0, %v1113
  %v1115 = vrcp.pop %v1082
  %v1116 = vmul.f32 1.0, %v1115
  %v1117 = vrcp.pop %v1083
  %v1118 = vmul.f32 1.0, %v1117
  %v1119 = vrcp.pop %v1084
  %v1120 = vmul.f32 1.0, %v1119
  %v1121 = vrcp.pop %v1085
  %v1122 = vmul.f32 1.0, %v1121
  %v1123 = vrcp.pop %v1086
  %v1124 = vmul.f32 1.0, %v1123
  %v1125 = vrcp.pop %v1087
  %v1126 = vmul.f32 1.0, %v1125
  %v1127 = vrcp.pop %v1088
  %v1128 = vmul.f32 1.0, %v1127
  %v1129 = vrcp.pop %v1089
  %v1130 = vmul.f32 1.0, %v1129
  %v1131 = vrcp.pop %v1090
  %v1132 = vmul.f32 1.0, %v1131
  %v1133 = vrcp.pop %v1091
  %v1134 = vmul.f32 1.0, %v1133
  %v1135 = vrcp.pop %v1092
  %v1136 = vmul.f32 1.0, %v1135
  %v1137 = vrcp.pop %v1093
  %v1138 = vmul.f32 1.0, %v1137
  %v1139 = vrcp.pop %v1094
  %v1140 = vmul.f32 1.0, %v1139
  %v1141 = vrcp.pop %v1095
  %v1142 = vmul.f32 1.0, %v1141
  %v1143 = vrcp.pop %v1096
  %v1144 = vmul.f32 1.0, %v1143
  %v1145 = vrcp.pop %v1097
  %v1146 = vmul.f32 1.0, %v1145
  %v1147 = vrcp.pop %v1098
  %v1148 = vmul.f32 1.0, %v1147
  %v1149 = vrcp.pop %v1099
  %v1150 = vmul.f32 1.0, %v1149
  %v1151 = vrcp.pop %v1100
  %v1152 = vmul.f32 1.0, %v1151
  %v1153 = vrcp.pop %v1101
  %v1154 = vmul.f32 1.0, %v1153
  %v1155 = vrcp.pop %v1102
  %v1156 = vmul.f32 1.0, %v1155
  %v1157 = vrcp.pop %v1103
  %v1158 = vmul.f32 1.0, %v1157
  %v1159 = vrcp.pop %v1104
  %v1160 = vmul.f32 1.0, %v1159
  %v1161 = vrcp.pop %v1105
  %v1162 = vmul.f32 1.0, %v1161
  %v1163 = vrcp.pop %v1106
  %v1164 = vmul.f32 1.0, %v1163
  %v1165 = vrcp.pop %v1107
  %v1166 = vmul.f32 1.0, %v1165
  %v1167 = vrcp.pop %v1108
  %v1168 = vmul.f32 1.0, %v1167
  %v1169 = vrcp.pop %v1109
  %v1170 = vmul.f32 1.0, %v1169
  %v1171 = vrcp.pop %v1110
  %v1172 = vmul.f32 1.0, %v1171
  %v1173 = vrcp.pop %v1111
  %v1174 = vmul.f32 1.0, %v1173
  %v1175 = vrcp.pop %v1112
  %v1176 = vmul.f32 1.0, %v1175
  %v1177 = vmul.f32 %v859, %v1114
  %v1178 = vmul.f32 %v862, %v1116
  %v1179 = vmul.f32 %v867, %v1118
  %v1180 = vmul.f32 %v870, %v1120
  %v1181 = vmul.f32 %v875, %v1122
  %v1182 = vmul.f32 %v878, %v1124
  %v1183 = vmul.f32 %v883, %v1126
  %v1184 = vmul.f32 %v886, %v1128
  %v1185 = vmul.f32 %v891, %v1130
  %v1186 = vmul.f32 %v894, %v1132
  %v1187 = vmul.f32 %v899, %v1134
  %v1188 = vmul.f32 %v902, %v1136
  %v1189 = vmul.f32 %v907, %v1138
  %v1190 = vmul.f32 %v910, %v1140
  %v1191 = vmul.f32 %v915, %v1142
  %v1192 = vmul.f32 %v918, %v1144
  %v1193 = vmul.f32 %v923, %v1146
  %v1194 = vmul.f32 %v926, %v1148
  %v1195 = vmul.f32 %v931, %v1150
  %v1196 = vmul.f32 %v934, %v1152
  %v1197 = vmul.f32 %v939, %v1154
  %v1198 = vmul.f32 %v942, %v1156
  %v1199 = vmul.f32 %v947, %v1158
  %v1200 = vmul.f32 %v950, %v1160
  %v1201 = vmul.f32 %v955, %v1162
  %v1202 = vmul.f32 %v958, %v1164
  %v1203 = vmul.f32 %v963, %v1166
  %v1204 = vmul.f32 %v966, %v1168
  %v1205 = vmul.f32 %v971, %v1170
  %v1206 = vmul.f32 %v974, %v1172
  %v1207 = vmul.f32 %v979, %v1174
  %v1208 = vmul.f32 %v982, %v1176
  %v1209 = vsel %vm581, %v1177, 0.0
  %v1210 = vsel %vm581, %v1178, 0.0
  %v1211 = vadd.f32 %v1209, %v1210
  %v1212 = vsel %vm581, %v1179, 0.0
  %v1213 = vadd.f32 %v1211, %v1212
  %v1214 = vsel %vm581, %v1180, 0.0
  %v1215 = vadd.f32 %v1213, %v1214
  %v1216 = vsel %vm581, %v1181, 0.0
  %v1217 = vadd.f32 %v1215, %v1216
  %v1218 = vsel %vm581, %v1182, 0.0
  %v1219 = vadd.f32 %v1217, %v1218
  %v1220 = vsel %vm581, %v1183, 0.0
  %v1221 = vadd.f32 %v1219, %v1220
  %v1222 = vsel %vm581, %v1184, 0.0
  %v1223 = vadd.f32 %v1221, %v1222
  %v1224 = vsel %vm581, %v1185, 0.0
  %v1225 = vadd.f32 %v1223, %v1224
  %v1226 = vsel %vm581, %v1186, 0.0
  %v1227 = vadd.f32 %v1225, %v1226
  %v1228 = vsel %vm581, %v1187, 0.0
  %v1229 = vadd.f32 %v1227, %v1228
  %v1230 = vsel %vm581, %v1188, 0.0
  %v1231 = vadd.f32 %v1229, %v1230
  %v1232 = vsel %vm581, %v1189, 0.0
  %v1233 = vadd.f32 %v1231, %v1232
  %v1234 = vsel %vm581, %v1190, 0.0
  %v1235 = vadd.f32 %v1233, %v1234
  %v1236 = vsel %vm581, %v1191, 0.0
  %v1237 = vadd.f32 %v1235, %v1236
  %v1238 = vsel %vm581, %v1192, 0.0
  %v1239 = vadd.f32 %v1237, %v1238
  %v1240 = vsel %vm581, %v1193, 0.0
  %v1241 = vadd.f32 %v1239, %v1240
  %v1242 = vsel %vm581, %v1194, 0.0
  %v1243 = vadd.f32 %v1241, %v1242
  %v1244 = vsel %vm581, %v1195, 0.0
  %v1245 = vadd.f32 %v1243, %v1244
  %v1246 = vsel %vm581, %v1196, 0.0
  %v1247 = vadd.f32 %v1245, %v1246
  %v1248 = vsel %vm581, %v1197, 0.0
  %v1249 = vadd.f32 %v1247, %v1248
  %v1250 = vsel %vm581, %v1198, 0.0
  %v1251 = vadd.f32 %v1249, %v1250
  %v1252 = vsel %vm581, %v1199, 0.0
  %v1253 = vadd.f32 %v1251, %v1252
  %v1254 = vsel %vm581, %v1200, 0.0
  %v1255 = vadd.f32 %v1253, %v1254
  %v1256 = vsel %vm581, %v1201, 0.0
  %v1257 = vadd.f32 %v1255, %v1256
  %v1258 = vsel %vm581, %v1202, 0.0
  %v1259 = vadd.f32 %v1257, %v1258
  %v1260 = vsel %vm581, %v1203, 0.0
  %v1261 = vadd.f32 %v1259, %v1260
  %v1262 = vsel %vm581, %v1204, 0.0
  %v1263 = vadd.f32 %v1261, %v1262
  %v1264 = vsel %vm581, %v1205, 0.0
  %v1265 = vadd.f32 %v1263, %v1264
  %v1266 = vsel %vm581, %v1206, 0.0
  %v1267 = vadd.f32 %v1265, %v1266
  %v1268 = vsel %vm581, %v1207, 0.0
  %v1269 = vadd.f32 %v1267, %v1268
  %v1270 = vsel %vm581, %v1208, 0.0
  %v1271 = vadd.f32 %v1269, %v1270
  %v1272 = vrot.slane %v1271, 4
  %v1273 = vadd.f32 %v1271, %v1272
  %v1274 = vrot.slane %v1273, 2
  %v1275 = vadd.f32 %v1273, %v1274
  %v1276 = vrot.slane %v1275, 1
  %v1277 = vadd.f32 %v1275, %v1276
  %v1278 = vmul.f32 %v1277, 0.00390625
  %1279 = vst.msk [vmem:[#allocation2 + $0x1] sm:$0x1] %vm652, %v1278
  %v1280 = vld [vmem:[%s0 + $0x100] sm:$0xf]
  %v1281 = vld [vmem:[%s0 + $0x104] sm:$0xf]
  %v1282 = vld [vmem:[%s0 + $0x108] sm:$0xf]
  %v1283 = vld [vmem:[%s0 + $0x10c] sm:$0xf]
  %v1284 = vld [vmem:[%s0 + $0x110] sm:$0xf]
  %v1285 = vld [vmem:[%s0 + $0x114] sm:$0xf]
  %v1286 = vld [vmem:[%s0 + $0x118] sm:$0xf]
  %v1287 = vld [vmem:[%s0 + $0x11c] sm:$0xf]
  %v1288 = vld [vmem:[%s0 + $0x120] sm:$0xf]
  %v1289 = vld [vmem:[%s0 + $0x124] sm:$0xf]
  %v1290 = vld [vmem:[%s0 + $0x128] sm:$0xf]
  %v1291 = vld [vmem:[%s0 + $0x12c] sm:$0xf]
  %v1292 = vld [vmem:[%s0 + $0x130] sm:$0xf]
  %v1293 = vld [vmem:[%s0 + $0x134] sm:$0xf]
  %v1294 = vld [vmem:[%s0 + $0x138] sm:$0xf]
  %v1295 = vld [vmem:[%s0 + $0x13c] sm:$0xf]
  %v1296 = vld [vmem:[%s0 + $0x140] sm:$0xf]
  %v1297 = vld [vmem:[%s0 + $0x144] sm:$0xf]
  %v1298 = vld [vmem:[%s0 + $0x148] sm:$0xf]
  %v1299 = vld [vmem:[%s0 + $0x14c] sm:$0xf]
  %v1300 = vld [vmem:[%s0 + $0x150] sm:$0xf]
  %v1301 = vld [vmem:[%s0 + $0x154] sm:$0xf]
  %v1302 = vld [vmem:[%s0 + $0x158] sm:$0xf]
  %v1303 = vld [vmem:[%s0 + $0x15c] sm:$0xf]
  %v1304 = vld [vmem:[%s0 + $0x160] sm:$0xf]
  %v1305 = vld [vmem:[%s0 + $0x164] sm:$0xf]
  %v1306 = vld [vmem:[%s0 + $0x168] sm:$0xf]
  %v1307 = vld [vmem:[%s0 + $0x16c] sm:$0xf]
  %v1308 = vld [vmem:[%s0 + $0x170] sm:$0xf]
  %v1309 = vld [vmem:[%s0 + $0x174] sm:$0xf]
  %v1310 = vld [vmem:[%s0 + $0x178] sm:$0xf]
  %v1311 = vld [vmem:[%s0 + $0x17c] sm:$0xf]
  %v1312 = vld [vmem:[%s1] sm:$0xf]
  %v1313 = vld [vmem:[%s1 + $0x4] sm:$0x1]
  %v1346 = vunpack.c.l.b16 %v1280
  %v1347 = vunpack.c.l.b16 %v1281
  %v1348 = vunpack.c.l.b16 %v1282
  %v1349 = vunpack.c.l.b16 %v1283
  %v1350 = vunpack.c.l.b16 %v1284
  %v1351 = vunpack.c.l.b16 %v1285
  %v1352 = vunpack.c.l.b16 %v1286
  %v1353 = vunpack.c.l.b16 %v1287
  %v1354 = vunpack.c.l.b16 %v1288
  %v1355 = vunpack.c.l.b16 %v1289
  %v1356 = vunpack.c.l.b16 %v1290
  %v1357 = vunpack.c.l.b16 %v1291
  %v1358 = vunpack.c.l.b16 %v1292
  %v1359 = vunpack.c.l.b16 %v1293
  %v1360 = vunpack.c.l.b16 %v1294
  %v1361 = vunpack.c.l.b16 %v1295
  %v1362 = vunpack.c.l.b16 %v1296
  %v1363 = vunpack.c.l.b16 %v1297
  %v1364 = vunpack.c.l.b16 %v1298
  %v1365 = vunpack.c.l.b16 %v1299
  %v1366 = vunpack.c.l.b16 %v1300
  %v1367 = vunpack.c.l.b16 %v1301
  %v1368 = vunpack.c.l.b16 %v1302
  %v1369 = vunpack.c.l.b16 %v1303
  %v1370 = vunpack.c.l.b16 %v1304
  %v1371 = vunpack.c.l.b16 %v1305
  %v1372 = vunpack.c.l.b16 %v1306
  %v1373 = vunpack.c.l.b16 %v1307
  %v1374 = vunpack.c.l.b16 %v1308
  %v1375 = vunpack.c.l.b16 %v1309
  %v1376 = vunpack.c.l.b16 %v1310
  %v1377 = vunpack.c.l.b16 %v1311
  %v1378 = vpack.c.b16 %v1347, %v1346
  %v1379 = vpack.c.b16 %v1349, %v1348
  %v1380 = vpack.c.b16 %v1351, %v1350
  %v1381 = vpack.c.b16 %v1353, %v1352
  %v1382 = vpack.c.b16 %v1355, %v1354
  %v1383 = vpack.c.b16 %v1357, %v1356
  %v1384 = vpack.c.b16 %v1359, %v1358
  %v1385 = vpack.c.b16 %v1361, %v1360
  %v1386 = vpack.c.b16 %v1363, %v1362
  %v1387 = vpack.c.b16 %v1365, %v1364
  %v1388 = vpack.c.b16 %v1367, %v1366
  %v1389 = vpack.c.b16 %v1369, %v1368
  %v1390 = vpack.c.b16 %v1371, %v1370
  %v1391 = vpack.c.b16 %v1373, %v1372
  %v1392 = vpack.c.b16 %v1375, %v1374
  %v1393 = vpack.c.b16 %v1377, %v1376
  %v1396 = vunpack.c.l.b16 %v1312
  %v1397 = vunpack.c.l.b16 %v1313
  %v1398 = vpack.c.b16 %v1397, %v1396
  %v1400 = vsel %vm140, %v1378, 0
  %v1403 = vsel %vm140, %v1379, 0
  %v1406 = vsel %vm140, %v1380, 0
  %v1409 = vsel %vm140, %v1381, 0
  %v1412 = vsel %vm140, %v1382, 0
  %v1415 = vsel %vm140, %v1383, 0
  %v1418 = vsel %vm140, %v1384, 0
  %v1421 = vsel %vm140, %v1385, 0
  %v1424 = vsel %vm140, %v1386, 0
  %v1427 = vsel %vm140, %v1387, 0
  %v1430 = vsel %vm140, %v1388, 0
  %v1433 = vsel %vm140, %v1389, 0
  %v1436 = vsel %vm140, %v1390, 0
  %v1439 = vsel %vm140, %v1391, 0
  %v1442 = vsel %vm140, %v1392, 0
  %v1445 = vsel %vm140, %v1393, 0
  %v1448 = vand.u32 %v1398, %v192
  %1450 = vmatprep.subr.bf16.mxu0 0
  %1451 = vmatpush1.bf16.msra.mxu0 0
  %1452 = vmatprep.subr.bf16.mxu0 0
  %1453 = vmatpush1.bf16.msra.mxu0 0
  %1454 = vmatprep.subr.bf16.mxu0 0
  %1455 = vmatpush1.bf16.msra.mxu0 0
  %1456 = vmatprep.subr.bf16.mxu0 0
  %1457 = vmatpush1.bf16.msra.mxu0 0
  %1458 = vmatprep.subr.bf16.mxu0 0
  %1459 = vmatpush1.bf16.msra.mxu0 0
  %1460 = vmatprep.subr.bf16.mxu0 0
  %1461 = vmatpush1.bf16.msra.mxu0 0
  %1462 = vmatprep.subr.bf16.mxu0 0
  %1463 = vmatpush1.bf16.msra.mxu0 0
  %1464 = vmatprep.subr.bf16.mxu0 0
  %1465 = vmatpush1.bf16.msra.mxu0 %v1448
  %1466 = vmatprep.subr.bf16.mxu0 0
  %1467 = vmatpush2.bf16.msra.mxu0 0
  %1468 = vmatprep.subr.bf16.mxu0 0
  %1469 = vmatpush2.bf16.msra.mxu0 0
  %1470 = vmatprep.subr.bf16.mxu0 0
  %1471 = vmatpush2.bf16.msra.mxu0 0
  %1472 = vmatprep.subr.bf16.mxu0 0
  %1473 = vmatpush2.bf16.msra.mxu0 0
  %1474 = vmatprep.subr.bf16.mxu0 0
  %1475 = vmatpush2.bf16.msra.mxu0 0
  %1476 = vmatprep.subr.bf16.mxu0 0
  %1477 = vmatpush2.bf16.msra.mxu0 0
  %1478 = vmatprep.subr.bf16.mxu0 0
  %1479 = vmatpush2.bf16.msra.mxu0 0
  %1480 = vmatprep.subr.bf16.mxu0 0
  %1481 = vmatpush2.bf16.msra.mxu0 0
  %1482 = vmatprep.mubr.bf16.mxu0 0
  %1483 = vmatmul.mubr.bf16.gmra.mxu0 %v1400
  %v1484 = vpop.f32.mrf.mxu0
  %v1485 = vadd.f32 0.0, %v1484
  %v1486 = vpop.f32.mrf.mxu0
  %v1487 = vpop.f32.mrf.mxu0
  %v1488 = vadd.f32 0.0, %v1487
  %v1489 = vpop.f32.mrf.mxu0
  %1490 = vmatprep.mubr.bf16.mxu0 0
  %1491 = vmatmul.mubr.bf16.gmra.mxu0 %v1403
  %v1492 = vpop.f32.mrf.mxu0
  %v1493 = vadd.f32 0.0, %v1492
  %v1494 = vpop.f32.mrf.mxu0
  %v1495 = vpop.f32.mrf.mxu0
  %v1496 = vadd.f32 0.0, %v1495
  %v1497 = vpop.f32.mrf.mxu0
  %1498 = vmatprep.mubr.bf16.mxu0 0
  %1499 = vmatmul.mubr.bf16.gmra.mxu0 %v1406
  %v1500 = vpop.f32.mrf.mxu0
  %v1501 = vadd.f32 0.0, %v1500
  %v1502 = vpop.f32.mrf.mxu0
  %v1503 = vpop.f32.mrf.mxu0
  %v1504 = vadd.f32 0.0, %v1503
  %v1505 = vpop.f32.mrf.mxu0
  %1506 = vmatprep.mubr.bf16.mxu0 0
  %1507 = vmatmul.mubr.bf16.gmra.mxu0 %v1409
  %v1508 = vpop.f32.mrf.mxu0
  %v1509 = vadd.f32 0.0, %v1508
  %v1510 = vpop.f32.mrf.mxu0
  %v1511 = vpop.f32.mrf.mxu0
  %v1512 = vadd.f32 0.0, %v1511
  %v1513 = vpop.f32.mrf.mxu0
  %1514 = vmatprep.mubr.bf16.mxu0 0
  %1515 = vmatmul.mubr.bf16.gmra.mxu0 %v1412
  %v1516 = vpop.f32.mrf.mxu0
  %v1517 = vadd.f32 0.0, %v1516
  %v1518 = vpop.f32.mrf.mxu0
  %v1519 = vpop.f32.mrf.mxu0
  %v1520 = vadd.f32 0.0, %v1519
  %v1521 = vpop.f32.mrf.mxu0
  %1522 = vmatprep.mubr.bf16.mxu0 0
  %1523 = vmatmul.mubr.bf16.gmra.mxu0 %v1415
  %v1524 = vpop.f32.mrf.mxu0
  %v1525 = vadd.f32 0.0, %v1524
  %v1526 = vpop.f32.mrf.mxu0
  %v1527 = vpop.f32.mrf.mxu0
  %v1528 = vadd.f32 0.0, %v1527
  %v1529 = vpop.f32.mrf.mxu0
  %1530 = vmatprep.mubr.bf16.mxu0 0
  %1531 = vmatmul.mubr.bf16.gmra.mxu0 %v1418
  %v1532 = vpop.f32.mrf.mxu0
  %v1533 = vadd.f32 0.0, %v1532
  %v1534 = vpop.f32.mrf.mxu0
  %v1535 = vpop.f32.mrf.mxu0
  %v1536 = vadd.f32 0.0, %v1535
  %v1537 = vpop.f32.mrf.mxu0
  %1538 = vmatprep.mubr.bf16.mxu0 0
  %1539 = vmatmul.mubr.bf16.gmra.mxu0 %v1421
  %v1540 = vpop.f32.mrf.mxu0
  %v1541 = vadd.f32 0.0, %v1540
  %v1542 = vpop.f32.mrf.mxu0
  %v1543 = vpop.f32.mrf.mxu0
  %v1544 = vadd.f32 0.0, %v1543
  %v1545 = vpop.f32.mrf.mxu0
  %1546 = vmatprep.mubr.bf16.mxu0 0
  %1547 = vmatmul.mubr.bf16.gmra.mxu0 %v1424
  %v1548 = vpop.f32.mrf.mxu0
  %v1549 = vadd.f32 0.0, %v1548
  %v1550 = vpop.f32.mrf.mxu0
  %v1551 = vpop.f32.mrf.mxu0
  %v1552 = vadd.f32 0.0, %v1551
  %v1553 = vpop.f32.mrf.mxu0
  %1554 = vmatprep.mubr.bf16.mxu0 0
  %1555 = vmatmul.mubr.bf16.gmra.mxu0 %v1427
  %v1556 = vpop.f32.mrf.mxu0
  %v1557 = vadd.f32 0.0, %v1556
  %v1558 = vpop.f32.mrf.mxu0
  %v1559 = vpop.f32.mrf.mxu0
  %v1560 = vadd.f32 0.0, %v1559
  %v1561 = vpop.f32.mrf.mxu0
  %1562 = vmatprep.mubr.bf16.mxu0 0
  %1563 = vmatmul.mubr.bf16.gmra.mxu0 %v1430
  %v1564 = vpop.f32.mrf.mxu0
  %v1565 = vadd.f32 0.0, %v1564
  %v1566 = vpop.f32.mrf.mxu0
  %v1567 = vpop.f32.mrf.mxu0
  %v1568 = vadd.f32 0.0, %v1567
  %v1569 = vpop.f32.mrf.mxu0
  %1570 = vmatprep.mubr.bf16.mxu0 0
  %1571 = vmatmul.mubr.bf16.gmra.mxu0 %v1433
  %v1572 = vpop.f32.mrf.mxu0
  %v1573 = vadd.f32 0.0, %v1572
  %v1574 = vpop.f32.mrf.mxu0
  %v1575 = vpop.f32.mrf.mxu0
  %v1576 = vadd.f32 0.0, %v1575
  %v1577 = vpop.f32.mrf.mxu0
  %1578 = vmatprep.mubr.bf16.mxu0 0
  %1579 = vmatmul.mubr.bf16.gmra.mxu0 %v1436
  %v1580 = vpop.f32.mrf.mxu0
  %v1581 = vadd.f32 0.0, %v1580
  %v1582 = vpop.f32.mrf.mxu0
  %v1583 = vpop.f32.mrf.mxu0
  %v1584 = vadd.f32 0.0, %v1583
  %v1585 = vpop.f32.mrf.mxu0
  %1586 = vmatprep.mubr.bf16.mxu0 0
  %1587 = vmatmul.mubr.bf16.gmra.mxu0 %v1439
  %v1588 = vpop.f32.mrf.mxu0
  %v1589 = vadd.f32 0.0, %v1588
  %v1590 = vpop.f32.mrf.mxu0
  %v1591 = vpop.f32.mrf.mxu0
  %v1592 = vadd.f32 0.0, %v1591
  %v1593 = vpop.f32.mrf.mxu0
  %1594 = vmatprep.mubr.bf16.mxu0 0
  %1595 = vmatmul.mubr.bf16.gmra.mxu0 %v1442
  %v1596 = vpop.f32.mrf.mxu0
  %v1597 = vadd.f32 0.0, %v1596
  %v1598 = vpop.f32.mrf.mxu0
  %v1599 = vpop.f32.mrf.mxu0
  %v1600 = vadd.f32 0.0, %v1599
  %v1601 = vpop.f32.mrf.mxu0
  %1602 = vmatprep.mubr.bf16.mxu0 0
  %1603 = vmatmul.mubr.bf16.gmra.mxu0 %v1445
  %v1604 = vpop.f32.mrf.mxu0
  %v1605 = vadd.f32 0.0, %v1604
  %v1606 = vpop.f32.mrf.mxu0
  %v1607 = vpop.f32.mrf.mxu0
  %v1608 = vadd.f32 0.0, %v1607
  %v1609 = vpop.f32.mrf.mxu0
  %1610 = vdwg.mxu0
  %v1611 = vxor.u32 %v1485, 2147483648
  %v1612 = vxor.u32 %v1488, 2147483648
  %v1613 = vxor.u32 %v1493, 2147483648
  %v1614 = vxor.u32 %v1496, 2147483648
  %v1615 = vxor.u32 %v1501, 2147483648
  %v1616 = vxor.u32 %v1504, 2147483648
  %v1617 = vxor.u32 %v1509, 2147483648
  %v1618 = vxor.u32 %v1512, 2147483648
  %v1619 = vxor.u32 %v1517, 2147483648
  %v1620 = vxor.u32 %v1520, 2147483648
  %v1621 = vxor.u32 %v1525, 2147483648
  %v1622 = vxor.u32 %v1528, 2147483648
  %v1623 = vxor.u32 %v1533, 2147483648
  %v1624 = vxor.u32 %v1536, 2147483648
  %v1625 = vxor.u32 %v1541, 2147483648
  %v1626 = vxor.u32 %v1544, 2147483648
  %v1627 = vxor.u32 %v1549, 2147483648
  %v1628 = vxor.u32 %v1552, 2147483648
  %v1629 = vxor.u32 %v1557, 2147483648
  %v1630 = vxor.u32 %v1560, 2147483648
  %v1631 = vxor.u32 %v1565, 2147483648
  %v1632 = vxor.u32 %v1568, 2147483648
  %v1633 = vxor.u32 %v1573, 2147483648
  %v1634 = vxor.u32 %v1576, 2147483648
  %v1635 = vxor.u32 %v1581, 2147483648
  %v1636 = vxor.u32 %v1584, 2147483648
  %v1637 = vxor.u32 %v1589, 2147483648
  %v1638 = vxor.u32 %v1592, 2147483648
  %v1639 = vxor.u32 %v1597, 2147483648
  %v1640 = vxor.u32 %v1600, 2147483648
  %v1641 = vxor.u32 %v1605, 2147483648
  %v1642 = vxor.u32 %v1608, 2147483648
  %v1643 = vmul.f32 %v1611, 1.442695
  %v1644 = vpow.pop %v1643
  %v1645 = vmul.f32 %v1612, 1.442695
  %v1646 = vpow.pop %v1645
  %v1647 = vmul.f32 %v1613, 1.442695
  %v1648 = vpow.pop %v1647
  %v1649 = vmul.f32 %v1614, 1.442695
  %v1650 = vpow.pop %v1649
  %v1651 = vmul.f32 %v1615, 1.442695
  %v1652 = vpow.pop %v1651
  %v1653 = vmul.f32 %v1616, 1.442695
  %v1654 = vpow.pop %v1653
  %v1655 = vmul.f32 %v1617, 1.442695
  %v1656 = vpow.pop %v1655
  %v1657 = vmul.f32 %v1618, 1.442695
  %v1658 = vpow.pop %v1657
  %v1659 = vmul.f32 %v1619, 1.442695
  %v1660 = vpow.pop %v1659
  %v1661 = vmul.f32 %v1620, 1.442695
  %v1662 = vpow.pop %v1661
  %v1663 = vmul.f32 %v1621, 1.442695
  %v1664 = vpow.pop %v1663
  %v1665 = vmul.f32 %v1622, 1.442695
  %v1666 = vpow.pop %v1665
  %v1667 = vmul.f32 %v1623, 1.442695
  %v1668 = vpow.pop %v1667
  %v1669 = vmul.f32 %v1624, 1.442695
  %v1670 = vpow.pop %v1669
  %v1671 = vmul.f32 %v1625, 1.442695
  %v1672 = vpow.pop %v1671
  %v1673 = vmul.f32 %v1626, 1.442695
  %v1674 = vpow.pop %v1673
  %v1675 = vmul.f32 %v1627, 1.442695
  %v1676 = vpow.pop %v1675
  %v1677 = vmul.f32 %v1628, 1.442695
  %v1678 = vpow.pop %v1677
  %v1679 = vmul.f32 %v1629, 1.442695
  %v1680 = vpow.pop %v1679
  %v1681 = vmul.f32 %v1630, 1.442695
  %v1682 = vpow.pop %v1681
  %v1683 = vmul.f32 %v1631, 1.442695
  %v1684 = vpow.pop %v1683
  %v1685 = vmul.f32 %v1632, 1.442695
  %v1686 = vpow.pop %v1685
  %v1687 = vmul.f32 %v1633, 1.442695
  %v1688 = vpow.pop %v1687
  %v1689 = vmul.f32 %v1634, 1.442695
  %v1690 = vpow.pop %v1689
  %v1691 = vmul.f32 %v1635, 1.442695
  %v1692 = vpow.pop %v1691
  %v1693 = vmul.f32 %v1636, 1.442695
  %v1694 = vpow.pop %v1693
  %v1695 = vmul.f32 %v1637, 1.442695
  %v1696 = vpow.pop %v1695
  %v1697 = vmul.f32 %v1638, 1.442695
  %v1698 = vpow.pop %v1697
  %v1699 = vmul.f32 %v1639, 1.442695
  %v1700 = vpow.pop %v1699
  %v1701 = vmul.f32 %v1640, 1.442695
  %v1702 = vpow.pop %v1701
  %v1703 = vmul.f32 %v1641, 1.442695
  %v1704 = vpow.pop %v1703
  %v1705 = vmul.f32 %v1642, 1.442695
  %v1706 = vpow.pop %v1705
  %v1707 = vadd.f32 %v1644, 1.0
  %v1708 = vadd.f32 %v1646, 1.0
  %v1709 = vadd.f32 %v1648, 1.0
  %v1710 = vadd.f32 %v1650, 1.0
  %v1711 = vadd.f32 %v1652, 1.0
  %v1712 = vadd.f32 %v1654, 1.0
  %v1713 = vadd.f32 %v1656, 1.0
  %v1714 = vadd.f32 %v1658, 1.0
  %v1715 = vadd.f32 %v1660, 1.0
  %v1716 = vadd.f32 %v1662, 1.0
  %v1717 = vadd.f32 %v1664, 1.0
  %v1718 = vadd.f32 %v1666, 1.0
  %v1719 = vadd.f32 %v1668, 1.0
  %v1720 = vadd.f32 %v1670, 1.0
  %v1721 = vadd.f32 %v1672, 1.0
  %v1722 = vadd.f32 %v1674, 1.0
  %v1723 = vadd.f32 %v1676, 1.0
  %v1724 = vadd.f32 %v1678, 1.0
  %v1725 = vadd.f32 %v1680, 1.0
  %v1726 = vadd.f32 %v1682, 1.0
  %v1727 = vadd.f32 %v1684, 1.0
  %v1728 = vadd.f32 %v1686, 1.0
  %v1729 = vadd.f32 %v1688, 1.0
  %v1730 = vadd.f32 %v1690, 1.0
  %v1731 = vadd.f32 %v1692, 1.0
  %v1732 = vadd.f32 %v1694, 1.0
  %v1733 = vadd.f32 %v1696, 1.0
  %v1734 = vadd.f32 %v1698, 1.0
  %v1735 = vadd.f32 %v1700, 1.0
  %v1736 = vadd.f32 %v1702, 1.0
  %v1737 = vadd.f32 %v1704, 1.0
  %v1738 = vadd.f32 %v1706, 1.0
  %v1739 = vrcp.pop %v1707
  %v1740 = vmul.f32 1.0, %v1739
  %v1741 = vrcp.pop %v1708
  %v1742 = vmul.f32 1.0, %v1741
  %v1743 = vrcp.pop %v1709
  %v1744 = vmul.f32 1.0, %v1743
  %v1745 = vrcp.pop %v1710
  %v1746 = vmul.f32 1.0, %v1745
  %v1747 = vrcp.pop %v1711
  %v1748 = vmul.f32 1.0, %v1747
  %v1749 = vrcp.pop %v1712
  %v1750 = vmul.f32 1.0, %v1749
  %v1751 = vrcp.pop %v1713
  %v1752 = vmul.f32 1.0, %v1751
  %v1753 = vrcp.pop %v1714
  %v1754 = vmul.f32 1.0, %v1753
  %v1755 = vrcp.pop %v1715
  %v1756 = vmul.f32 1.0, %v1755
  %v1757 = vrcp.pop %v1716
  %v1758 = vmul.f32 1.0, %v1757
  %v1759 = vrcp.pop %v1717
  %v1760 = vmul.f32 1.0, %v1759
  %v1761 = vrcp.pop %v1718
  %v1762 = vmul.f32 1.0, %v1761
  %v1763 = vrcp.pop %v1719
  %v1764 = vmul.f32 1.0, %v1763
  %v1765 = vrcp.pop %v1720
  %v1766 = vmul.f32 1.0, %v1765
  %v1767 = vrcp.pop %v1721
  %v1768 = vmul.f32 1.0, %v1767
  %v1769 = vrcp.pop %v1722
  %v1770 = vmul.f32 1.0, %v1769
  %v1771 = vrcp.pop %v1723
  %v1772 = vmul.f32 1.0, %v1771
  %v1773 = vrcp.pop %v1724
  %v1774 = vmul.f32 1.0, %v1773
  %v1775 = vrcp.pop %v1725
  %v1776 = vmul.f32 1.0, %v1775
  %v1777 = vrcp.pop %v1726
  %v1778 = vmul.f32 1.0, %v1777
  %v1779 = vrcp.pop %v1727
  %v1780 = vmul.f32 1.0, %v1779
  %v1781 = vrcp.pop %v1728
  %v1782 = vmul.f32 1.0, %v1781
  %v1783 = vrcp.pop %v1729
  %v1784 = vmul.f32 1.0, %v1783
  %v1785 = vrcp.pop %v1730
  %v1786 = vmul.f32 1.0, %v1785
  %v1787 = vrcp.pop %v1731
  %v1788 = vmul.f32 1.0, %v1787
  %v1789 = vrcp.pop %v1732
  %v1790 = vmul.f32 1.0, %v1789
  %v1791 = vrcp.pop %v1733
  %v1792 = vmul.f32 1.0, %v1791
  %v1793 = vrcp.pop %v1734
  %v1794 = vmul.f32 1.0, %v1793
  %v1795 = vrcp.pop %v1735
  %v1796 = vmul.f32 1.0, %v1795
  %v1797 = vrcp.pop %v1736
  %v1798 = vmul.f32 1.0, %v1797
  %v1799 = vrcp.pop %v1737
  %v1800 = vmul.f32 1.0, %v1799
  %v1801 = vrcp.pop %v1738
  %v1802 = vmul.f32 1.0, %v1801
  %v1803 = vmul.f32 %v1485, %v1740
  %v1804 = vmul.f32 %v1488, %v1742
  %v1805 = vmul.f32 %v1493, %v1744
  %v1806 = vmul.f32 %v1496, %v1746
  %v1807 = vmul.f32 %v1501, %v1748
  %v1808 = vmul.f32 %v1504, %v1750
  %v1809 = vmul.f32 %v1509, %v1752
  %v1810 = vmul.f32 %v1512, %v1754
  %v1811 = vmul.f32 %v1517, %v1756
  %v1812 = vmul.f32 %v1520, %v1758
  %v1813 = vmul.f32 %v1525, %v1760
  %v1814 = vmul.f32 %v1528, %v1762
  %v1815 = vmul.f32 %v1533, %v1764
  %v1816 = vmul.f32 %v1536, %v1766
  %v1817 = vmul.f32 %v1541, %v1768
  %v1818 = vmul.f32 %v1544, %v1770
  %v1819 = vmul.f32 %v1549, %v1772
  %v1820 = vmul.f32 %v1552, %v1774
  %v1821 = vmul.f32 %v1557, %v1776
  %v1822 = vmul.f32 %v1560, %v1778
  %v1823 = vmul.f32 %v1565, %v1780
  %v1824 = vmul.f32 %v1568, %v1782
  %v1825 = vmul.f32 %v1573, %v1784
  %v1826 = vmul.f32 %v1576, %v1786
  %v1827 = vmul.f32 %v1581, %v1788
  %v1828 = vmul.f32 %v1584, %v1790
  %v1829 = vmul.f32 %v1589, %v1792
  %v1830 = vmul.f32 %v1592, %v1794
  %v1831 = vmul.f32 %v1597, %v1796
  %v1832 = vmul.f32 %v1600, %v1798
  %v1833 = vmul.f32 %v1605, %v1800
  %v1834 = vmul.f32 %v1608, %v1802
  %v1835 = vsel %vm581, %v1803, 0.0
  %v1836 = vsel %vm581, %v1804, 0.0
  %v1837 = vadd.f32 %v1835, %v1836
  %v1838 = vsel %vm581, %v1805, 0.0
  %v1839 = vadd.f32 %v1837, %v1838
  %v1840 = vsel %vm581, %v1806, 0.0
  %v1841 = vadd.f32 %v1839, %v1840
  %v1842 = vsel %vm581, %v1807, 0.0
  %v1843 = vadd.f32 %v1841, %v1842
  %v1844 = vsel %vm581, %v1808, 0.0
  %v1845 = vadd.f32 %v1843, %v1844
  %v1846 = vsel %vm581, %v1809, 0.0
  %v1847 = vadd.f32 %v1845, %v1846
  %v1848 = vsel %vm581, %v1810, 0.0
  %v1849 = vadd.f32 %v1847, %v1848
  %v1850 = vsel %vm581, %v1811, 0.0
  %v1851 = vadd.f32 %v1849, %v1850
  %v1852 = vsel %vm581, %v1812, 0.0
  %v1853 = vadd.f32 %v1851, %v1852
  %v1854 = vsel %vm581, %v1813, 0.0
  %v1855 = vadd.f32 %v1853, %v1854
  %v1856 = vsel %vm581, %v1814, 0.0
  %v1857 = vadd.f32 %v1855, %v1856
  %v1858 = vsel %vm581, %v1815, 0.0
  %v1859 = vadd.f32 %v1857, %v1858
  %v1860 = vsel %vm581, %v1816, 0.0
  %v1861 = vadd.f32 %v1859, %v1860
  %v1862 = vsel %vm581, %v1817, 0.0
  %v1863 = vadd.f32 %v1861, %v1862
  %v1864 = vsel %vm581, %v1818, 0.0
  %v1865 = vadd.f32 %v1863, %v1864
  %v1866 = vsel %vm581, %v1819, 0.0
  %v1867 = vadd.f32 %v1865, %v1866
  %v1868 = vsel %vm581, %v1820, 0.0
  %v1869 = vadd.f32 %v1867, %v1868
  %v1870 = vsel %vm581, %v1821, 0.0
  %v1871 = vadd.f32 %v1869, %v1870
  %v1872 = vsel %vm581, %v1822, 0.0
  %v1873 = vadd.f32 %v1871, %v1872
  %v1874 = vsel %vm581, %v1823, 0.0
  %v1875 = vadd.f32 %v1873, %v1874
  %v1876 = vsel %vm581, %v1824, 0.0
  %v1877 = vadd.f32 %v1875, %v1876
  %v1878 = vsel %vm581, %v1825, 0.0
  %v1879 = vadd.f32 %v1877, %v1878
  %v1880 = vsel %vm581, %v1826, 0.0
  %v1881 = vadd.f32 %v1879, %v1880
  %v1882 = vsel %vm581, %v1827, 0.0
  %v1883 = vadd.f32 %v1881, %v1882
  %v1884 = vsel %vm581, %v1828, 0.0
  %v1885 = vadd.f32 %v1883, %v1884
  %v1886 = vsel %vm581, %v1829, 0.0
  %v1887 = vadd.f32 %v1885, %v1886
  %v1888 = vsel %vm581, %v1830, 0.0
  %v1889 = vadd.f32 %v1887, %v1888
  %v1890 = vsel %vm581, %v1831, 0.0
  %v1891 = vadd.f32 %v1889, %v1890
  %v1892 = vsel %vm581, %v1832, 0.0
  %v1893 = vadd.f32 %v1891, %v1892
  %v1894 = vsel %vm581, %v1833, 0.0
  %v1895 = vadd.f32 %v1893, %v1894
  %v1896 = vsel %vm581, %v1834, 0.0
  %v1897 = vadd.f32 %v1895, %v1896
  %v1898 = vrot.slane %v1897, 4
  %v1899 = vadd.f32 %v1897, %v1898
  %v1900 = vrot.slane %v1899, 2
  %v1901 = vadd.f32 %v1899, %v1900
  %v1902 = vrot.slane %v1901, 1
  %v1903 = vadd.f32 %v1901, %v1902
  %v1904 = vmul.f32 %v1903, 0.00390625
  %1905 = vst.msk [vmem:[#allocation2 + $0x2] sm:$0x1] %vm652, %v1904
  %v1906 = vld [vmem:[%s0 + $0x180] sm:$0xf]
  %v1907 = vld [vmem:[%s0 + $0x184] sm:$0xf]
  %v1908 = vld [vmem:[%s0 + $0x188] sm:$0xf]
  %v1909 = vld [vmem:[%s0 + $0x18c] sm:$0xf]
  %v1910 = vld [vmem:[%s0 + $0x190] sm:$0xf]
  %v1911 = vld [vmem:[%s0 + $0x194] sm:$0xf]
  %v1912 = vld [vmem:[%s0 + $0x198] sm:$0xf]
  %v1913 = vld [vmem:[%s0 + $0x19c] sm:$0xf]
  %v1914 = vld [vmem:[%s0 + $0x1a0] sm:$0xf]
  %v1915 = vld [vmem:[%s0 + $0x1a4] sm:$0xf]
  %v1916 = vld [vmem:[%s0 + $0x1a8] sm:$0xf]
  %v1917 = vld [vmem:[%s0 + $0x1ac] sm:$0xf]
  %v1918 = vld [vmem:[%s0 + $0x1b0] sm:$0xf]
  %v1919 = vld [vmem:[%s0 + $0x1b4] sm:$0xf]
  %v1920 = vld [vmem:[%s0 + $0x1b8] sm:$0xf]
  %v1921 = vld [vmem:[%s0 + $0x1bc] sm:$0xf]
  %v1922 = vld [vmem:[%s0 + $0x1c0] sm:$0xf]
  %v1923 = vld [vmem:[%s0 + $0x1c4] sm:$0xf]
  %v1924 = vld [vmem:[%s0 + $0x1c8] sm:$0xf]
  %v1925 = vld [vmem:[%s0 + $0x1cc] sm:$0xf]
  %v1926 = vld [vmem:[%s0 + $0x1d0] sm:$0xf]
  %v1927 = vld [vmem:[%s0 + $0x1d4] sm:$0xf]
  %v1928 = vld [vmem:[%s0 + $0x1d8] sm:$0xf]
  %v1929 = vld [vmem:[%s0 + $0x1dc] sm:$0xf]
  %v1930 = vld [vmem:[%s0 + $0x1e0] sm:$0xf]
  %v1931 = vld [vmem:[%s0 + $0x1e4] sm:$0xf]
  %v1932 = vld [vmem:[%s0 + $0x1e8] sm:$0xf]
  %v1933 = vld [vmem:[%s0 + $0x1ec] sm:$0xf]
  %v1934 = vld [vmem:[%s0 + $0x1f0] sm:$0xf]
  %v1935 = vld [vmem:[%s0 + $0x1f4] sm:$0xf]
  %v1936 = vld [vmem:[%s0 + $0x1f8] sm:$0xf]
  %v1937 = vld [vmem:[%s0 + $0x1fc] sm:$0xf]
  %v1938 = vld [vmem:[%s1] sm:$0xf]
  %v1939 = vld [vmem:[%s1 + $0x4] sm:$0x1]
  %v1972 = vunpack.c.l.b16 %v1906
  %v1973 = vunpack.c.l.b16 %v1907
  %v1974 = vunpack.c.l.b16 %v1908
  %v1975 = vunpack.c.l.b16 %v1909
  %v1976 = vunpack.c.l.b16 %v1910
  %v1977 = vunpack.c.l.b16 %v1911
  %v1978 = vunpack.c.l.b16 %v1912
  %v1979 = vunpack.c.l.b16 %v1913
  %v1980 = vunpack.c.l.b16 %v1914
  %v1981 = vunpack.c.l.b16 %v1915
  %v1982 = vunpack.c.l.b16 %v1916
  %v1983 = vunpack.c.l.b16 %v1917
  %v1984 = vunpack.c.l.b16 %v1918
  %v1985 = vunpack.c.l.b16 %v1919
  %v1986 = vunpack.c.l.b16 %v1920
  %v1987 = vunpack.c.l.b16 %v1921
  %v1988 = vunpack.c.l.b16 %v1922
  %v1989 = vunpack.c.l.b16 %v1923
  %v1990 = vunpack.c.l.b16 %v1924
  %v1991 = vunpack.c.l.b16 %v1925
  %v1992 = vunpack.c.l.b16 %v1926
  %v1993 = vunpack.c.l.b16 %v1927
  %v1994 = vunpack.c.l.b16 %v1928
  %v1995 = vunpack.c.l.b16 %v1929
  %v1996 = vunpack.c.l.b16 %v1930
  %v1997 = vunpack.c.l.b16 %v1931
  %v1998 = vunpack.c.l.b16 %v1932
  %v1999 = vunpack.c.l.b16 %v1933
  %v2000 = vunpack.c.l.b16 %v1934
  %v2001 = vunpack.c.l.b16 %v1935
  %v2002 = vunpack.c.l.b16 %v1936
  %v2003 = vunpack.c.l.b16 %v1937
  %v2004 = vpack.c.b16 %v1973, %v1972
  %v2005 = vpack.c.b16 %v1975, %v1974
  %v2006 = vpack.c.b16 %v1977, %v1976
  %v2007 = vpack.c.b16 %v1979, %v1978
  %v2008 = vpack.c.b16 %v1981, %v1980
  %v2009 = vpack.c.b16 %v1983, %v1982
  %v2010 = vpack.c.b16 %v1985, %v1984
  %v2011 = vpack.c.b16 %v1987, %v1986
  %v2012 = vpack.c.b16 %v1989, %v1988
  %v2013 = vpack.c.b16 %v1991, %v1990
  %v2014 = vpack.c.b16 %v1993, %v1992
  %v2015 = vpack.c.b16 %v1995, %v1994
  %v2016 = vpack.c.b16 %v1997, %v1996
  %v2017 = vpack.c.b16 %v1999, %v1998
  %v2018 = vpack.c.b16 %v2001, %v2000
  %v2019 = vpack.c.b16 %v2003, %v2002
  %v2022 = vunpack.c.l.b16 %v1938
  %v2023 = vunpack.c.l.b16 %v1939
  %v2024 = vpack.c.b16 %v2023, %v2022
  %v2026 = vsel %vm140, %v2004, 0
  %v2029 = vsel %vm140, %v2005, 0
  %v2032 = vsel %vm140, %v2006, 0
  %v2035 = vsel %vm140, %v2007, 0
  %v2038 = vsel %vm140, %v2008, 0
  %v2041 = vsel %vm140, %v2009, 0
  %v2044 = vsel %vm140, %v2010, 0
  %v2047 = vsel %vm140, %v2011, 0
  %v2050 = vsel %vm140, %v2012, 0
  %v2053 = vsel %vm140, %v2013, 0
  %v2056 = vsel %vm140, %v2014, 0
  %v2059 = vsel %vm140, %v2015, 0
  %v2062 = vsel %vm140, %v2016, 0
  %v2065 = vsel %vm140, %v2017, 0
  %v2068 = vsel %vm140, %v2018, 0
  %v2071 = vsel %vm140, %v2019, 0
  %v2074 = vand.u32 %v2024, %v192
  %2076 = vmatprep.subr.bf16.mxu0 0
  %2077 = vmatpush1.bf16.msra.mxu0 0
  %2078 = vmatprep.subr.bf16.mxu0 0
  %2079 = vmatpush1.bf16.msra.mxu0 0
  %2080 = vmatprep.subr.bf16.mxu0 0
  %2081 = vmatpush1.bf16.msra.mxu0 0
  %2082 = vmatprep.subr.bf16.mxu0 0
  %2083 = vmatpush1.bf16.msra.mxu0 0
  %2084 = vmatprep.subr.bf16.mxu0 0
  %2085 = vmatpush1.bf16.msra.mxu0 0
  %2086 = vmatprep.subr.bf16.mxu0 0
  %2087 = vmatpush1.bf16.msra.mxu0 0
  %2088 = vmatprep.subr.bf16.mxu0 0
  %2089 = vmatpush1.bf16.msra.mxu0 0
  %2090 = vmatprep.subr.bf16.mxu0 0
  %2091 = vmatpush1.bf16.msra.mxu0 %v2074
  %2092 = vmatprep.subr.bf16.mxu0 0
  %2093 = vmatpush2.bf16.msra.mxu0 0
  %2094 = vmatprep.subr.bf16.mxu0 0
  %2095 = vmatpush2.bf16.msra.mxu0 0
  %2096 = vmatprep.subr.bf16.mxu0 0
  %2097 = vmatpush2.bf16.msra.mxu0 0
  %2098 = vmatprep.subr.bf16.mxu0 0
  %2099 = vmatpush2.bf16.msra.mxu0 0
  %2100 = vmatprep.subr.bf16.mxu0 0
  %2101 = vmatpush2.bf16.msra.mxu0 0
  %2102 = vmatprep.subr.bf16.mxu0 0
  %2103 = vmatpush2.bf16.msra.mxu0 0
  %2104 = vmatprep.subr.bf16.mxu0 0
  %2105 = vmatpush2.bf16.msra.mxu0 0
  %2106 = vmatprep.subr.bf16.mxu0 0
  %2107 = vmatpush2.bf16.msra.mxu0 0
  %2108 = vmatprep.mubr.bf16.mxu0 0
  %2109 = vmatmul.mubr.bf16.gmra.mxu0 %v2026
  %v2110 = vpop.f32.mrf.mxu0
  %v2111 = vadd.f32 0.0, %v2110
  %v2112 = vpop.f32.mrf.mxu0
  %v2113 = vpop.f32.mrf.mxu0
  %v2114 = vadd.f32 0.0, %v2113
  %v2115 = vpop.f32.mrf.mxu0
  %2116 = vmatprep.mubr.bf16.mxu0 0
  %2117 = vmatmul.mubr.bf16.gmra.mxu0 %v2029
  %v2118 = vpop.f32.mrf.mxu0
  %v2119 = vadd.f32 0.0, %v2118
  %v2120 = vpop.f32.mrf.mxu0
  %v2121 = vpop.f32.mrf.mxu0
  %v2122 = vadd.f32 0.0, %v2121
  %v2123 = vpop.f32.mrf.mxu0
  %2124 = vmatprep.mubr.bf16.mxu0 0
  %2125 = vmatmul.mubr.bf16.gmra.mxu0 %v2032
  %v2126 = vpop.f32.mrf.mxu0
  %v2127 = vadd.f32 0.0, %v2126
  %v2128 = vpop.f32.mrf.mxu0
  %v2129 = vpop.f32.mrf.mxu0
  %v2130 = vadd.f32 0.0, %v2129
  %v2131 = vpop.f32.mrf.mxu0
  %2132 = vmatprep.mubr.bf16.mxu0 0
  %2133 = vmatmul.mubr.bf16.gmra.mxu0 %v2035
  %v2134 = vpop.f32.mrf.mxu0
  %v2135 = vadd.f32 0.0, %v2134
  %v2136 = vpop.f32.mrf.mxu0
  %v2137 = vpop.f32.mrf.mxu0
  %v2138 = vadd.f32 0.0, %v2137
  %v2139 = vpop.f32.mrf.mxu0
  %2140 = vmatprep.mubr.bf16.mxu0 0
  %2141 = vmatmul.mubr.bf16.gmra.mxu0 %v2038
  %v2142 = vpop.f32.mrf.mxu0
  %v2143 = vadd.f32 0.0, %v2142
  %v2144 = vpop.f32.mrf.mxu0
  %v2145 = vpop.f32.mrf.mxu0
  %v2146 = vadd.f32 0.0, %v2145
  %v2147 = vpop.f32.mrf.mxu0
  %2148 = vmatprep.mubr.bf16.mxu0 0
  %2149 = vmatmul.mubr.bf16.gmra.mxu0 %v2041
  %v2150 = vpop.f32.mrf.mxu0
  %v2151 = vadd.f32 0.0, %v2150
  %v2152 = vpop.f32.mrf.mxu0
  %v2153 = vpop.f32.mrf.mxu0
  %v2154 = vadd.f32 0.0, %v2153
  %v2155 = vpop.f32.mrf.mxu0
  %2156 = vmatprep.mubr.bf16.mxu0 0
  %2157 = vmatmul.mubr.bf16.gmra.mxu0 %v2044
  %v2158 = vpop.f32.mrf.mxu0
  %v2159 = vadd.f32 0.0, %v2158
  %v2160 = vpop.f32.mrf.mxu0
  %v2161 = vpop.f32.mrf.mxu0
  %v2162 = vadd.f32 0.0, %v2161
  %v2163 = vpop.f32.mrf.mxu0
  %2164 = vmatprep.mubr.bf16.mxu0 0
  %2165 = vmatmul.mubr.bf16.gmra.mxu0 %v2047
  %v2166 = vpop.f32.mrf.mxu0
  %v2167 = vadd.f32 0.0, %v2166
  %v2168 = vpop.f32.mrf.mxu0
  %v2169 = vpop.f32.mrf.mxu0
  %v2170 = vadd.f32 0.0, %v2169
  %v2171 = vpop.f32.mrf.mxu0
  %2172 = vmatprep.mubr.bf16.mxu0 0
  %2173 = vmatmul.mubr.bf16.gmra.mxu0 %v2050
  %v2174 = vpop.f32.mrf.mxu0
  %v2175 = vadd.f32 0.0, %v2174
  %v2176 = vpop.f32.mrf.mxu0
  %v2177 = vpop.f32.mrf.mxu0
  %v2178 = vadd.f32 0.0, %v2177
  %v2179 = vpop.f32.mrf.mxu0
  %2180 = vmatprep.mubr.bf16.mxu0 0
  %2181 = vmatmul.mubr.bf16.gmra.mxu0 %v2053
  %v2182 = vpop.f32.mrf.mxu0
  %v2183 = vadd.f32 0.0, %v2182
  %v2184 = vpop.f32.mrf.mxu0
  %v2185 = vpop.f32.mrf.mxu0
  %v2186 = vadd.f32 0.0, %v2185
  %v2187 = vpop.f32.mrf.mxu0
  %2188 = vmatprep.mubr.bf16.mxu0 0
  %2189 = vmatmul.mubr.bf16.gmra.mxu0 %v2056
  %v2190 = vpop.f32.mrf.mxu0
  %v2191 = vadd.f32 0.0, %v2190
  %v2192 = vpop.f32.mrf.mxu0
  %v2193 = vpop.f32.mrf.mxu0
  %v2194 = vadd.f32 0.0, %v2193
  %v2195 = vpop.f32.mrf.mxu0
  %2196 = vmatprep.mubr.bf16.mxu0 0
  %2197 = vmatmul.mubr.bf16.gmra.mxu0 %v2059
  %v2198 = vpop.f32.mrf.mxu0
  %v2199 = vadd.f32 0.0, %v2198
  %v2200 = vpop.f32.mrf.mxu0
  %v2201 = vpop.f32.mrf.mxu0
  %v2202 = vadd.f32 0.0, %v2201
  %v2203 = vpop.f32.mrf.mxu0
  %2204 = vmatprep.mubr.bf16.mxu0 0
  %2205 = vmatmul.mubr.bf16.gmra.mxu0 %v2062
  %v2206 = vpop.f32.mrf.mxu0
  %v2207 = vadd.f32 0.0, %v2206
  %v2208 = vpop.f32.mrf.mxu0
  %v2209 = vpop.f32.mrf.mxu0
  %v2210 = vadd.f32 0.0, %v2209
  %v2211 = vpop.f32.mrf.mxu0
  %2212 = vmatprep.mubr.bf16.mxu0 0
  %2213 = vmatmul.mubr.bf16.gmra.mxu0 %v2065
  %v2214 = vpop.f32.mrf.mxu0
  %v2215 = vadd.f32 0.0, %v2214
  %v2216 = vpop.f32.mrf.mxu0
  %v2217 = vpop.f32.mrf.mxu0
  %v2218 = vadd.f32 0.0, %v2217
  %v2219 = vpop.f32.mrf.mxu0
  %2220 = vmatprep.mubr.bf16.mxu0 0
  %2221 = vmatmul.mubr.bf16.gmra.mxu0 %v2068
  %v2222 = vpop.f32.mrf.mxu0
  %v2223 = vadd.f32 0.0, %v2222
  %v2224 = vpop.f32.mrf.mxu0
  %v2225 = vpop.f32.mrf.mxu0
  %v2226 = vadd.f32 0.0, %v2225
  %v2227 = vpop.f32.mrf.mxu0
  %2228 = vmatprep.mubr.bf16.mxu0 0
  %2229 = vmatmul.mubr.bf16.gmra.mxu0 %v2071
  %v2230 = vpop.f32.mrf.mxu0
  %v2231 = vadd.f32 0.0, %v2230
  %v2232 = vpop.f32.mrf.mxu0
  %v2233 = vpop.f32.mrf.mxu0
  %v2234 = vadd.f32 0.0, %v2233
  %v2235 = vpop.f32.mrf.mxu0
  %2236 = vdwg.mxu0
  %v2237 = vxor.u32 %v2111, 2147483648
  %v2238 = vxor.u32 %v2114, 2147483648
  %v2239 = vxor.u32 %v2119, 2147483648
  %v2240 = vxor.u32 %v2122, 2147483648
  %v2241 = vxor.u32 %v2127, 2147483648
  %v2242 = vxor.u32 %v2130, 2147483648
  %v2243 = vxor.u32 %v2135, 2147483648
  %v2244 = vxor.u32 %v2138, 2147483648
  %v2245 = vxor.u32 %v2143, 2147483648
  %v2246 = vxor.u32 %v2146, 2147483648
  %v2247 = vxor.u32 %v2151, 2147483648
  %v2248 = vxor.u32 %v2154, 2147483648
  %v2249 = vxor.u32 %v2159, 2147483648
  %v2250 = vxor.u32 %v2162, 2147483648
  %v2251 = vxor.u32 %v2167, 2147483648
  %v2252 = vxor.u32 %v2170, 2147483648
  %v2253 = vxor.u32 %v2175, 2147483648
  %v2254 = vxor.u32 %v2178, 2147483648
  %v2255 = vxor.u32 %v2183, 2147483648
  %v2256 = vxor.u32 %v2186, 2147483648
  %v2257 = vxor.u32 %v2191, 2147483648
  %v2258 = vxor.u32 %v2194, 2147483648
  %v2259 = vxor.u32 %v2199, 2147483648
  %v2260 = vxor.u32 %v2202, 2147483648
  %v2261 = vxor.u32 %v2207, 2147483648
  %v2262 = vxor.u32 %v2210, 2147483648
  %v2263 = vxor.u32 %v2215, 2147483648
  %v2264 = vxor.u32 %v2218, 2147483648
  %v2265 = vxor.u32 %v2223, 2147483648
  %v2266 = vxor.u32 %v2226, 2147483648
  %v2267 = vxor.u32 %v2231, 2147483648
  %v2268 = vxor.u32 %v2234, 2147483648
  %v2269 = vmul.f32 %v2237, 1.442695
  %v2270 = vpow.pop %v2269
  %v2271 = vmul.f32 %v2238, 1.442695
  %v2272 = vpow.pop %v2271
  %v2273 = vmul.f32 %v2239, 1.442695
  %v2274 = vpow.pop %v2273
  %v2275 = vmul.f32 %v2240, 1.442695
  %v2276 = vpow.pop %v2275
  %v2277 = vmul.f32 %v2241, 1.442695
  %v2278 = vpow.pop %v2277
  %v2279 = vmul.f32 %v2242, 1.442695
  %v2280 = vpow.pop %v2279
  %v2281 = vmul.f32 %v2243, 1.442695
  %v2282 = vpow.pop %v2281
  %v2283 = vmul.f32 %v2244, 1.442695
  %v2284 = vpow.pop %v2283
  %v2285 = vmul.f32 %v2245, 1.442695
  %v2286 = vpow.pop %v2285
  %v2287 = vmul.f32 %v2246, 1.442695
  %v2288 = vpow.pop %v2287
  %v2289 = vmul.f32 %v2247, 1.442695
  %v2290 = vpow.pop %v2289
  %v2291 = vmul.f32 %v2248, 1.442695
  %v2292 = vpow.pop %v2291
  %v2293 = vmul.f32 %v2249, 1.442695
  %v2294 = vpow.pop %v2293
  %v2295 = vmul.f32 %v2250, 1.442695
  %v2296 = vpow.pop %v2295
  %v2297 = vmul.f32 %v2251, 1.442695
  %v2298 = vpow.pop %v2297
  %v2299 = vmul.f32 %v2252, 1.442695
  %v2300 = vpow.pop %v2299
  %v2301 = vmul.f32 %v2253, 1.442695
  %v2302 = vpow.pop %v2301
  %v2303 = vmul.f32 %v2254, 1.442695
  %v2304 = vpow.pop %v2303
  %v2305 = vmul.f32 %v2255, 1.442695
  %v2306 = vpow.pop %v2305
  %v2307 = vmul.f32 %v2256, 1.442695
  %v2308 = vpow.pop %v2307
  %v2309 = vmul.f32 %v2257, 1.442695
  %v2310 = vpow.pop %v2309
  %v2311 = vmul.f32 %v2258, 1.442695
  %v2312 = vpow.pop %v2311
  %v2313 = vmul.f32 %v2259, 1.442695
  %v2314 = vpow.pop %v2313
  %v2315 = vmul.f32 %v2260, 1.442695
  %v2316 = vpow.pop %v2315
  %v2317 = vmul.f32 %v2261, 1.442695
  %v2318 = vpow.pop %v2317
  %v2319 = vmul.f32 %v2262, 1.442695
  %v2320 = vpow.pop %v2319
  %v2321 = vmul.f32 %v2263, 1.442695
  %v2322 = vpow.pop %v2321
  %v2323 = vmul.f32 %v2264, 1.442695
  %v2324 = vpow.pop %v2323
  %v2325 = vmul.f32 %v2265, 1.442695
  %v2326 = vpow.pop %v2325
  %v2327 = vmul.f32 %v2266, 1.442695
  %v2328 = vpow.pop %v2327
  %v2329 = vmul.f32 %v2267, 1.442695
  %v2330 = vpow.pop %v2329
  %v2331 = vmul.f32 %v2268, 1.442695
  %v2332 = vpow.pop %v2331
  %v2333 = vadd.f32 %v2270, 1.0
  %v2334 = vadd.f32 %v2272, 1.0
  %v2335 = vadd.f32 %v2274, 1.0
  %v2336 = vadd.f32 %v2276, 1.0
  %v2337 = vadd.f32 %v2278, 1.0
  %v2338 = vadd.f32 %v2280, 1.0
  %v2339 = vadd.f32 %v2282, 1.0
  %v2340 = vadd.f32 %v2284, 1.0
  %v2341 = vadd.f32 %v2286, 1.0
  %v2342 = vadd.f32 %v2288, 1.0
  %v2343 = vadd.f32 %v2290, 1.0
  %v2344 = vadd.f32 %v2292, 1.0
  %v2345 = vadd.f32 %v2294, 1.0
  %v2346 = vadd.f32 %v2296, 1.0
  %v2347 = vadd.f32 %v2298, 1.0
  %v2348 = vadd.f32 %v2300, 1.0
  %v2349 = vadd.f32 %v2302, 1.0
  %v2350 = vadd.f32 %v2304, 1.0
  %v2351 = vadd.f32 %v2306, 1.0
  %v2352 = vadd.f32 %v2308, 1.0
  %v2353 = vadd.f32 %v2310, 1.0
  %v2354 = vadd.f32 %v2312, 1.0
  %v2355 = vadd.f32 %v2314, 1.0
  %v2356 = vadd.f32 %v2316, 1.0
  %v2357 = vadd.f32 %v2318, 1.0
  %v2358 = vadd.f32 %v2320, 1.0
  %v2359 = vadd.f32 %v2322, 1.0
  %v2360 = vadd.f32 %v2324, 1.0
  %v2361 = vadd.f32 %v2326, 1.0
  %v2362 = vadd.f32 %v2328, 1.0
  %v2363 = vadd.f32 %v2330, 1.0
  %v2364 = vadd.f32 %v2332, 1.0
  %v2365 = vrcp.pop %v2333
  %v2366 = vmul.f32 1.0, %v2365
  %v2367 = vrcp.pop %v2334
  %v2368 = vmul.f32 1.0, %v2367
  %v2369 = vrcp.pop %v2335
  %v2370 = vmul.f32 1.0, %v2369
  %v2371 = vrcp.pop %v2336
  %v2372 = vmul.f32 1.0, %v2371
  %v2373 = vrcp.pop %v2337
  %v2374 = vmul.f32 1.0, %v2373
  %v2375 = vrcp.pop %v2338
  %v2376 = vmul.f32 1.0, %v2375
  %v2377 = vrcp.pop %v2339
  %v2378 = vmul.f32 1.0, %v2377
  %v2379 = vrcp.pop %v2340
  %v2380 = vmul.f32 1.0, %v2379
  %v2381 = vrcp.pop %v2341
  %v2382 = vmul.f32 1.0, %v2381
  %v2383 = vrcp.pop %v2342
  %v2384 = vmul.f32 1.0, %v2383
  %v2385 = vrcp.pop %v2343
  %v2386 = vmul.f32 1.0, %v2385
  %v2387 = vrcp.pop %v2344
  %v2388 = vmul.f32 1.0, %v2387
  %v2389 = vrcp.pop %v2345
  %v2390 = vmul.f32 1.0, %v2389
  %v2391 = vrcp.pop %v2346
  %v2392 = vmul.f32 1.0, %v2391
  %v2393 = vrcp.pop %v2347
  %v2394 = vmul.f32 1.0, %v2393
  %v2395 = vrcp.pop %v2348
  %v2396 = vmul.f32 1.0, %v2395
  %v2397 = vrcp.pop %v2349
  %v2398 = vmul.f32 1.0, %v2397
  %v2399 = vrcp.pop %v2350
  %v2400 = vmul.f32 1.0, %v2399
  %v2401 = vrcp.pop %v2351
  %v2402 = vmul.f32 1.0, %v2401
  %v2403 = vrcp.pop %v2352
  %v2404 = vmul.f32 1.0, %v2403
  %v2405 = vrcp.pop %v2353
  %v2406 = vmul.f32 1.0, %v2405
  %v2407 = vrcp.pop %v2354
  %v2408 = vmul.f32 1.0, %v2407
  %v2409 = vrcp.pop %v2355
  %v2410 = vmul.f32 1.0, %v2409
  %v2411 = vrcp.pop %v2356
  %v2412 = vmul.f32 1.0, %v2411
  %v2413 = vrcp.pop %v2357
  %v2414 = vmul.f32 1.0, %v2413
  %v2415 = vrcp.pop %v2358
  %v2416 = vmul.f32 1.0, %v2415
  %v2417 = vrcp.pop %v2359
  %v2418 = vmul.f32 1.0, %v2417
  %v2419 = vrcp.pop %v2360
  %v2420 = vmul.f32 1.0, %v2419
  %v2421 = vrcp.pop %v2361
  %v2422 = vmul.f32 1.0, %v2421
  %v2423 = vrcp.pop %v2362
  %v2424 = vmul.f32 1.0, %v2423
  %v2425 = vrcp.pop %v2363
  %v2426 = vmul.f32 1.0, %v2425
  %v2427 = vrcp.pop %v2364
  %v2428 = vmul.f32 1.0, %v2427
  %v2429 = vmul.f32 %v2111, %v2366
  %v2430 = vmul.f32 %v2114, %v2368
  %v2431 = vmul.f32 %v2119, %v2370
  %v2432 = vmul.f32 %v2122, %v2372
  %v2433 = vmul.f32 %v2127, %v2374
  %v2434 = vmul.f32 %v2130, %v2376
  %v2435 = vmul.f32 %v2135, %v2378
  %v2436 = vmul.f32 %v2138, %v2380
  %v2437 = vmul.f32 %v2143, %v2382
  %v2438 = vmul.f32 %v2146, %v2384
  %v2439 = vmul.f32 %v2151, %v2386
  %v2440 = vmul.f32 %v2154, %v2388
  %v2441 = vmul.f32 %v2159, %v2390
  %v2442 = vmul.f32 %v2162, %v2392
  %v2443 = vmul.f32 %v2167, %v2394
  %v2444 = vmul.f32 %v2170, %v2396
  %v2445 = vmul.f32 %v2175, %v2398
  %v2446 = vmul.f32 %v2178, %v2400
  %v2447 = vmul.f32 %v2183, %v2402
  %v2448 = vmul.f32 %v2186, %v2404
  %v2449 = vmul.f32 %v2191, %v2406
  %v2450 = vmul.f32 %v2194, %v2408
  %v2451 = vmul.f32 %v2199, %v2410
  %v2452 = vmul.f32 %v2202, %v2412
  %v2453 = vmul.f32 %v2207, %v2414
  %v2454 = vmul.f32 %v2210, %v2416
  %v2455 = vmul.f32 %v2215, %v2418
  %v2456 = vmul.f32 %v2218, %v2420
  %v2457 = vmul.f32 %v2223, %v2422
  %v2458 = vmul.f32 %v2226, %v2424
  %v2459 = vmul.f32 %v2231, %v2426
  %v2460 = vmul.f32 %v2234, %v2428
  %v2461 = vsel %vm581, %v2429, 0.0
  %v2462 = vsel %vm581, %v2430, 0.0
  %v2463 = vadd.f32 %v2461, %v2462
  %v2464 = vsel %vm581, %v2431, 0.0
  %v2465 = vadd.f32 %v2463, %v2464
  %v2466 = vsel %vm581, %v2432, 0.0
  %v2467 = vadd.f32 %v2465, %v2466
  %v2468 = vsel %vm581, %v2433, 0.0
  %v2469 = vadd.f32 %v2467, %v2468
  %v2470 = vsel %vm581, %v2434, 0.0
  %v2471 = vadd.f32 %v2469, %v2470
  %v2472 = vsel %vm581, %v2435, 0.0
  %v2473 = vadd.f32 %v2471, %v2472
  %v2474 = vsel %vm581, %v2436, 0.0
  %v2475 = vadd.f32 %v2473, %v2474
  %v2476 = vsel %vm581, %v2437, 0.0
  %v2477 = vadd.f32 %v2475, %v2476
  %v2478 = vsel %vm581, %v2438, 0.0
  %v2479 = vadd.f32 %v2477, %v2478
  %v2480 = vsel %vm581, %v2439, 0.0
  %v2481 = vadd.f32 %v2479, %v2480
  %v2482 = vsel %vm581, %v2440, 0.0
  %v2483 = vadd.f32 %v2481, %v2482
  %v2484 = vsel %vm581, %v2441, 0.0
  %v2485 = vadd.f32 %v2483, %v2484
  %v2486 = vsel %vm581, %v2442, 0.0
  %v2487 = vadd.f32 %v2485, %v2486
  %v2488 = vsel %vm581, %v2443, 0.0
  %v2489 = vadd.f32 %v2487, %v2488
  %v2490 = vsel %vm581, %v2444, 0.0
  %v2491 = vadd.f32 %v2489, %v2490
  %v2492 = vsel %vm581, %v2445, 0.0
  %v2493 = vadd.f32 %v2491, %v2492
  %v2494 = vsel %vm581, %v2446, 0.0
  %v2495 = vadd.f32 %v2493, %v2494
  %v2496 = vsel %vm581, %v2447, 0.0
  %v2497 = vadd.f32 %v2495, %v2496
  %v2498 = vsel %vm581, %v2448, 0.0
  %v2499 = vadd.f32 %v2497, %v2498
  %v2500 = vsel %vm581, %v2449, 0.0
  %v2501 = vadd.f32 %v2499, %v2500
  %v2502 = vsel %vm581, %v2450, 0.0
  %v2503 = vadd.f32 %v2501, %v2502
  %v2504 = vsel %vm581, %v2451, 0.0
  %v2505 = vadd.f32 %v2503, %v2504
  %v2506 = vsel %vm581, %v2452, 0.0
  %v2507 = vadd.f32 %v2505, %v2506
  %v2508 = vsel %vm581, %v2453, 0.0
  %v2509 = vadd.f32 %v2507, %v2508
  %v2510 = vsel %vm581, %v2454, 0.0
  %v2511 = vadd.f32 %v2509, %v2510
  %v2512 = vsel %vm581, %v2455, 0.0
  %v2513 = vadd.f32 %v2511, %v2512
  %v2514 = vsel %vm581, %v2456, 0.0
  %v2515 = vadd.f32 %v2513, %v2514
  %v2516 = vsel %vm581, %v2457, 0.0
  %v2517 = vadd.f32 %v2515, %v2516
  %v2518 = vsel %vm581, %v2458, 0.0
  %v2519 = vadd.f32 %v2517, %v2518
  %v2520 = vsel %vm581, %v2459, 0.0
  %v2521 = vadd.f32 %v2519, %v2520
  %v2522 = vsel %vm581, %v2460, 0.0
  %v2523 = vadd.f32 %v2521, %v2522
  %v2524 = vrot.slane %v2523, 4
  %v2525 = vadd.f32 %v2523, %v2524
  %v2526 = vrot.slane %v2525, 2
  %v2527 = vadd.f32 %v2525, %v2526
  %v2528 = vrot.slane %v2527, 1
  %v2529 = vadd.f32 %v2527, %v2528
  %v2530 = vmul.f32 %v2529, 0.00390625
  %2531 = vst.msk [vmem:[#allocation2 + $0x3] sm:$0x1] %vm652, %v2530
  %v2532 = vld [vmem:[%s0 + $0x200] sm:$0xf]
  %v2533 = vld [vmem:[%s0 + $0x204] sm:$0xf]
  %v2534 = vld [vmem:[%s0 + $0x208] sm:$0xf]
  %v2535 = vld [vmem:[%s0 + $0x20c] sm:$0xf]
  %v2536 = vld [vmem:[%s0 + $0x210] sm:$0xf]
  %v2537 = vld [vmem:[%s0 + $0x214] sm:$0xf]
  %v2538 = vld [vmem:[%s0 + $0x218] sm:$0xf]
  %v2539 = vld [vmem:[%s0 + $0x21c] sm:$0xf]
  %v2540 = vld [vmem:[%s0 + $0x220] sm:$0xf]
  %v2541 = vld [vmem:[%s0 + $0x224] sm:$0xf]
  %v2542 = vld [vmem:[%s0 + $0x228] sm:$0xf]
  %v2543 = vld [vmem:[%s0 + $0x22c] sm:$0xf]
  %v2544 = vld [vmem:[%s0 + $0x230] sm:$0xf]
  %v2545 = vld [vmem:[%s0 + $0x234] sm:$0xf]
  %v2546 = vld [vmem:[%s0 + $0x238] sm:$0xf]
  %v2547 = vld [vmem:[%s0 + $0x23c] sm:$0xf]
  %v2548 = vld [vmem:[%s0 + $0x240] sm:$0xf]
  %v2549 = vld [vmem:[%s0 + $0x244] sm:$0xf]
  %v2550 = vld [vmem:[%s0 + $0x248] sm:$0xf]
  %v2551 = vld [vmem:[%s0 + $0x24c] sm:$0xf]
  %v2552 = vld [vmem:[%s0 + $0x250] sm:$0xf]
  %v2553 = vld [vmem:[%s0 + $0x254] sm:$0xf]
  %v2554 = vld [vmem:[%s0 + $0x258] sm:$0xf]
  %v2555 = vld [vmem:[%s0 + $0x25c] sm:$0xf]
  %v2556 = vld [vmem:[%s0 + $0x260] sm:$0xf]
  %v2557 = vld [vmem:[%s0 + $0x264] sm:$0xf]
  %v2558 = vld [vmem:[%s0 + $0x268] sm:$0xf]
  %v2559 = vld [vmem:[%s0 + $0x26c] sm:$0xf]
  %v2560 = vld [vmem:[%s0 + $0x270] sm:$0xf]
  %v2561 = vld [vmem:[%s0 + $0x274] sm:$0xf]
  %v2562 = vld [vmem:[%s0 + $0x278] sm:$0xf]
  %v2563 = vld [vmem:[%s0 + $0x27c] sm:$0xf]
  %v2564 = vld [vmem:[%s1] sm:$0xf]
  %v2565 = vld [vmem:[%s1 + $0x4] sm:$0x1]
  %v2598 = vunpack.c.l.b16 %v2532
  %v2599 = vunpack.c.l.b16 %v2533
  %v2600 = vunpack.c.l.b16 %v2534
  %v2601 = vunpack.c.l.b16 %v2535
  %v2602 = vunpack.c.l.b16 %v2536
  %v2603 = vunpack.c.l.b16 %v2537
  %v2604 = vunpack.c.l.b16 %v2538
  %v2605 = vunpack.c.l.b16 %v2539
  %v2606 = vunpack.c.l.b16 %v2540
  %v2607 = vunpack.c.l.b16 %v2541
  %v2608 = vunpack.c.l.b16 %v2542
  %v2609 = vunpack.c.l.b16 %v2543
  %v2610 = vunpack.c.l.b16 %v2544
  %v2611 = vunpack.c.l.b16 %v2545
  %v2612 = vunpack.c.l.b16 %v2546
  %v2613 = vunpack.c.l.b16 %v2547
  %v2614 = vunpack.c.l.b16 %v2548
  %v2615 = vunpack.c.l.b16 %v2549
  %v2616 = vunpack.c.l.b16 %v2550
  %v2617 = vunpack.c.l.b16 %v2551
  %v2618 = vunpack.c.l.b16 %v2552
  %v2619 = vunpack.c.l.b16 %v2553
  %v2620 = vunpack.c.l.b16 %v2554
  %v2621 = vunpack.c.l.b16 %v2555
  %v2622 = vunpack.c.l.b16 %v2556
  %v2623 = vunpack.c.l.b16 %v2557
  %v2624 = vunpack.c.l.b16 %v2558
  %v2625 = vunpack.c.l.b16 %v2559
  %v2626 = vunpack.c.l.b16 %v2560
  %v2627 = vunpack.c.l.b16 %v2561
  %v2628 = vunpack.c.l.b16 %v2562
  %v2629 = vunpack.c.l.b16 %v2563
  %v2630 = vpack.c.b16 %v2599, %v2598
  %v2631 = vpack.c.b16 %v2601, %v2600
  %v2632 = vpack.c.b16 %v2603, %v2602
  %v2633 = vpack.c.b16 %v2605, %v2604
  %v2634 = vpack.c.b16 %v2607, %v2606
  %v2635 = vpack.c.b16 %v2609, %v2608
  %v2636 = vpack.c.b16 %v2611, %v2610
  %v2637 = vpack.c.b16 %v2613, %v2612
  %v2638 = vpack.c.b16 %v2615, %v2614
  %v2639 = vpack.c.b16 %v2617, %v2616
  %v2640 = vpack.c.b16 %v2619, %v2618
  %v2641 = vpack.c.b16 %v2621, %v2620
  %v2642 = vpack.c.b16 %v2623, %v2622
  %v2643 = vpack.c.b16 %v2625, %v2624
  %v2644 = vpack.c.b16 %v2627, %v2626
  %v2645 = vpack.c.b16 %v2629, %v2628
  %v2648 = vunpack.c.l.b16 %v2564
  %v2649 = vunpack.c.l.b16 %v2565
  %v2650 = vpack.c.b16 %v2649, %v2648
  %v2652 = vsel %vm140, %v2630, 0
  %v2655 = vsel %vm140, %v2631, 0
  %v2658 = vsel %vm140, %v2632, 0
  %v2661 = vsel %vm140, %v2633, 0
  %v2664 = vsel %vm140, %v2634, 0
  %v2667 = vsel %vm140, %v2635, 0
  %v2670 = vsel %vm140, %v2636, 0
  %v2673 = vsel %vm140, %v2637, 0
  %v2676 = vsel %vm140, %v2638, 0
  %v2679 = vsel %vm140, %v2639, 0
  %v2682 = vsel %vm140, %v2640, 0
  %v2685 = vsel %vm140, %v2641, 0
  %v2688 = vsel %vm140, %v2642, 0
  %v2691 = vsel %vm140, %v2643, 0
  %v2694 = vsel %vm140, %v2644, 0
  %v2697 = vsel %vm140, %v2645, 0
  %v2700 = vand.u32 %v2650, %v192
  %2702 = vmatprep.subr.bf16.mxu0 0
  %2703 = vmatpush1.bf16.msra.mxu0 0
  %2704 = vmatprep.subr.bf16.mxu0 0
  %2705 = vmatpush1.bf16.msra.mxu0 0
  %2706 = vmatprep.subr.bf16.mxu0 0
  %2707 = vmatpush1.bf16.msra.mxu0 0
  %2708 = vmatprep.subr.bf16.mxu0 0
  %2709 = vmatpush1.bf16.msra.mxu0 0
  %2710 = vmatprep.subr.bf16.mxu0 0
  %2711 = vmatpush1.bf16.msra.mxu0 0
  %2712 = vmatprep.subr.bf16.mxu0 0
  %2713 = vmatpush1.bf16.msra.mxu0 0
  %2714 = vmatprep.subr.bf16.mxu0 0
  %2715 = vmatpush1.bf16.msra.mxu0 0
  %2716 = vmatprep.subr.bf16.mxu0 0
  %2717 = vmatpush1.bf16.msra.mxu0 %v2700
  %2718 = vmatprep.subr.bf16.mxu0 0
  %2719 = vmatpush2.bf16.msra.mxu0 0
  %2720 = vmatprep.subr.bf16.mxu0 0
  %2721 = vmatpush2.bf16.msra.mxu0 0
  %2722 = vmatprep.subr.bf16.mxu0 0
  %2723 = vmatpush2.bf16.msra.mxu0 0
  %2724 = vmatprep.subr.bf16.mxu0 0
  %2725 = vmatpush2.bf16.msra.mxu0 0
  %2726 = vmatprep.subr.bf16.mxu0 0
  %2727 = vmatpush2.bf16.msra.mxu0 0
  %2728 = vmatprep.subr.bf16.mxu0 0
  %2729 = vmatpush2.bf16.msra.mxu0 0
  %2730 = vmatprep.subr.bf16.mxu0 0
  %2731 = vmatpush2.bf16.msra.mxu0 0
  %2732 = vmatprep.subr.bf16.mxu0 0
  %2733 = vmatpush2.bf16.msra.mxu0 0
  %2734 = vmatprep.mubr.bf16.mxu0 0
  %2735 = vmatmul.mubr.bf16.gmra.mxu0 %v2652
  %v2736 = vpop.f32.mrf.mxu0
  %v2737 = vadd.f32 0.0, %v2736
  %v2738 = vpop.f32.mrf.mxu0
  %v2739 = vpop.f32.mrf.mxu0
  %v2740 = vadd.f32 0.0, %v2739
  %v2741 = vpop.f32.mrf.mxu0
  %2742 = vmatprep.mubr.bf16.mxu0 0
  %2743 = vmatmul.mubr.bf16.gmra.mxu0 %v2655
  %v2744 = vpop.f32.mrf.mxu0
  %v2745 = vadd.f32 0.0, %v2744
  %v2746 = vpop.f32.mrf.mxu0
  %v2747 = vpop.f32.mrf.mxu0
  %v2748 = vadd.f32 0.0, %v2747
  %v2749 = vpop.f32.mrf.mxu0
  %2750 = vmatprep.mubr.bf16.mxu0 0
  %2751 = vmatmul.mubr.bf16.gmra.mxu0 %v2658
  %v2752 = vpop.f32.mrf.mxu0
  %v2753 = vadd.f32 0.0, %v2752
  %v2754 = vpop.f32.mrf.mxu0
  %v2755 = vpop.f32.mrf.mxu0
  %v2756 = vadd.f32 0.0, %v2755
  %v2757 = vpop.f32.mrf.mxu0
  %2758 = vmatprep.mubr.bf16.mxu0 0
  %2759 = vmatmul.mubr.bf16.gmra.mxu0 %v2661
  %v2760 = vpop.f32.mrf.mxu0
  %v2761 = vadd.f32 0.0, %v2760
  %v2762 = vpop.f32.mrf.mxu0
  %v2763 = vpop.f32.mrf.mxu0
  %v2764 = vadd.f32 0.0, %v2763
  %v2765 = vpop.f32.mrf.mxu0
  %2766 = vmatprep.mubr.bf16.mxu0 0
  %2767 = vmatmul.mubr.bf16.gmra.mxu0 %v2664
  %v2768 = vpop.f32.mrf.mxu0
  %v2769 = vadd.f32 0.0, %v2768
  %v2770 = vpop.f32.mrf.mxu0
  %v2771 = vpop.f32.mrf.mxu0
  %v2772 = vadd.f32 0.0, %v2771
  %v2773 = vpop.f32.mrf.mxu0
  %2774 = vmatprep.mubr.bf16.mxu0 0
  %2775 = vmatmul.mubr.bf16.gmra.mxu0 %v2667
  %v2776 = vpop.f32.mrf.mxu0
  %v2777 = vadd.f32 0.0, %v2776
  %v2778 = vpop.f32.mrf.mxu0
  %v2779 = vpop.f32.mrf.mxu0
  %v2780 = vadd.f32 0.0, %v2779
  %v2781 = vpop.f32.mrf.mxu0
  %2782 = vmatprep.mubr.bf16.mxu0 0
  %2783 = vmatmul.mubr.bf16.gmra.mxu0 %v2670
  %v2784 = vpop.f32.mrf.mxu0
  %v2785 = vadd.f32 0.0, %v2784
  %v2786 = vpop.f32.mrf.mxu0
  %v2787 = vpop.f32.mrf.mxu0
  %v2788 = vadd.f32 0.0, %v2787
  %v2789 = vpop.f32.mrf.mxu0
  %2790 = vmatprep.mubr.bf16.mxu0 0
  %2791 = vmatmul.mubr.bf16.gmra.mxu0 %v2673
  %v2792 = vpop.f32.mrf.mxu0
  %v2793 = vadd.f32 0.0, %v2792
  %v2794 = vpop.f32.mrf.mxu0
  %v2795 = vpop.f32.mrf.mxu0
  %v2796 = vadd.f32 0.0, %v2795
  %v2797 = vpop.f32.mrf.mxu0
  %2798 = vmatprep.mubr.bf16.mxu0 0
  %2799 = vmatmul.mubr.bf16.gmra.mxu0 %v2676
  %v2800 = vpop.f32.mrf.mxu0
  %v2801 = vadd.f32 0.0, %v2800
  %v2802 = vpop.f32.mrf.mxu0
  %v2803 = vpop.f32.mrf.mxu0
  %v2804 = vadd.f32 0.0, %v2803
  %v2805 = vpop.f32.mrf.mxu0
  %2806 = vmatprep.mubr.bf16.mxu0 0
  %2807 = vmatmul.mubr.bf16.gmra.mxu0 %v2679
  %v2808 = vpop.f32.mrf.mxu0
  %v2809 = vadd.f32 0.0, %v2808
  %v2810 = vpop.f32.mrf.mxu0
  %v2811 = vpop.f32.mrf.mxu0
  %v2812 = vadd.f32 0.0, %v2811
  %v2813 = vpop.f32.mrf.mxu0
  %2814 = vmatprep.mubr.bf16.mxu0 0
  %2815 = vmatmul.mubr.bf16.gmra.mxu0 %v2682
  %v2816 = vpop.f32.mrf.mxu0
  %v2817 = vadd.f32 0.0, %v2816
  %v2818 = vpop.f32.mrf.mxu0
  %v2819 = vpop.f32.mrf.mxu0
  %v2820 = vadd.f32 0.0, %v2819
  %v2821 = vpop.f32.mrf.mxu0
  %2822 = vmatprep.mubr.bf16.mxu0 0
  %2823 = vmatmul.mubr.bf16.gmra.mxu0 %v2685
  %v2824 = vpop.f32.mrf.mxu0
  %v2825 = vadd.f32 0.0, %v2824
  %v2826 = vpop.f32.mrf.mxu0
  %v2827 = vpop.f32.mrf.mxu0
  %v2828 = vadd.f32 0.0, %v2827
  %v2829 = vpop.f32.mrf.mxu0
  %2830 = vmatprep.mubr.bf16.mxu0 0
  %2831 = vmatmul.mubr.bf16.gmra.mxu0 %v2688
  %v2832 = vpop.f32.mrf.mxu0
  %v2833 = vadd.f32 0.0, %v2832
  %v2834 = vpop.f32.mrf.mxu0
  %v2835 = vpop.f32.mrf.mxu0
  %v2836 = vadd.f32 0.0, %v2835
  %v2837 = vpop.f32.mrf.mxu0
  %2838 = vmatprep.mubr.bf16.mxu0 0
  %2839 = vmatmul.mubr.bf16.gmra.mxu0 %v2691
  %v2840 = vpop.f32.mrf.mxu0
  %v2841 = vadd.f32 0.0, %v2840
  %v2842 = vpop.f32.mrf.mxu0
  %v2843 = vpop.f32.mrf.mxu0
  %v2844 = vadd.f32 0.0, %v2843
  %v2845 = vpop.f32.mrf.mxu0
  %2846 = vmatprep.mubr.bf16.mxu0 0
  %2847 = vmatmul.mubr.bf16.gmra.mxu0 %v2694
  %v2848 = vpop.f32.mrf.mxu0
  %v2849 = vadd.f32 0.0, %v2848
  %v2850 = vpop.f32.mrf.mxu0
  %v2851 = vpop.f32.mrf.mxu0
  %v2852 = vadd.f32 0.0, %v2851
  %v2853 = vpop.f32.mrf.mxu0
  %2854 = vmatprep.mubr.bf16.mxu0 0
  %2855 = vmatmul.mubr.bf16.gmra.mxu0 %v2697
  %v2856 = vpop.f32.mrf.mxu0
  %v2857 = vadd.f32 0.0, %v2856
  %v2858 = vpop.f32.mrf.mxu0
  %v2859 = vpop.f32.mrf.mxu0
  %v2860 = vadd.f32 0.0, %v2859
  %v2861 = vpop.f32.mrf.mxu0
  %2862 = vdwg.mxu0
  %v2863 = vxor.u32 %v2737, 2147483648
  %v2864 = vxor.u32 %v2740, 2147483648
  %v2865 = vxor.u32 %v2745, 2147483648
  %v2866 = vxor.u32 %v2748, 2147483648
  %v2867 = vxor.u32 %v2753, 2147483648
  %v2868 = vxor.u32 %v2756, 2147483648
  %v2869 = vxor.u32 %v2761, 2147483648
  %v2870 = vxor.u32 %v2764, 2147483648
  %v2871 = vxor.u32 %v2769, 2147483648
  %v2872 = vxor.u32 %v2772, 2147483648
  %v2873 = vxor.u32 %v2777, 2147483648
  %v2874 = vxor.u32 %v2780, 2147483648
  %v2875 = vxor.u32 %v2785, 2147483648
  %v2876 = vxor.u32 %v2788, 2147483648
  %v2877 = vxor.u32 %v2793, 2147483648
  %v2878 = vxor.u32 %v2796, 2147483648
  %v2879 = vxor.u32 %v2801, 2147483648
  %v2880 = vxor.u32 %v2804, 2147483648
  %v2881 = vxor.u32 %v2809, 2147483648
  %v2882 = vxor.u32 %v2812, 2147483648
  %v2883 = vxor.u32 %v2817, 2147483648
  %v2884 = vxor.u32 %v2820, 2147483648
  %v2885 = vxor.u32 %v2825, 2147483648
  %v2886 = vxor.u32 %v2828, 2147483648
  %v2887 = vxor.u32 %v2833, 2147483648
  %v2888 = vxor.u32 %v2836, 2147483648
  %v2889 = vxor.u32 %v2841, 2147483648
  %v2890 = vxor.u32 %v2844, 2147483648
  %v2891 = vxor.u32 %v2849, 2147483648
  %v2892 = vxor.u32 %v2852, 2147483648
  %v2893 = vxor.u32 %v2857, 2147483648
  %v2894 = vxor.u32 %v2860, 2147483648
  %v2895 = vmul.f32 %v2863, 1.442695
  %v2896 = vpow.pop %v2895
  %v2897 = vmul.f32 %v2864, 1.442695
  %v2898 = vpow.pop %v2897
  %v2899 = vmul.f32 %v2865, 1.442695
  %v2900 = vpow.pop %v2899
  %v2901 = vmul.f32 %v2866, 1.442695
  %v2902 = vpow.pop %v2901
  %v2903 = vmul.f32 %v2867, 1.442695
  %v2904 = vpow.pop %v2903
  %v2905 = vmul.f32 %v2868, 1.442695
  %v2906 = vpow.pop %v2905
  %v2907 = vmul.f32 %v2869, 1.442695
  %v2908 = vpow.pop %v2907
  %v2909 = vmul.f32 %v2870, 1.442695
  %v2910 = vpow.pop %v2909
  %v2911 = vmul.f32 %v2871, 1.442695
  %v2912 = vpow.pop %v2911
  %v2913 = vmul.f32 %v2872, 1.442695
  %v2914 = vpow.pop %v2913
  %v2915 = vmul.f32 %v2873, 1.442695
  %v2916 = vpow.pop %v2915
  %v2917 = vmul.f32 %v2874, 1.442695
  %v2918 = vpow.pop %v2917
  %v2919 = vmul.f32 %v2875, 1.442695
  %v2920 = vpow.pop %v2919
  %v2921 = vmul.f32 %v2876, 1.442695
  %v2922 = vpow.pop %v2921
  %v2923 = vmul.f32 %v2877, 1.442695
  %v2924 = vpow.pop %v2923
  %v2925 = vmul.f32 %v2878, 1.442695
  %v2926 = vpow.pop %v2925
  %v2927 = vmul.f32 %v2879, 1.442695
  %v2928 = vpow.pop %v2927
  %v2929 = vmul.f32 %v2880, 1.442695
  %v2930 = vpow.pop %v2929
  %v2931 = vmul.f32 %v2881, 1.442695
  %v2932 = vpow.pop %v2931
  %v2933 = vmul.f32 %v2882, 1.442695
  %v2934 = vpow.pop %v2933
  %v2935 = vmul.f32 %v2883, 1.442695
  %v2936 = vpow.pop %v2935
  %v2937 = vmul.f32 %v2884, 1.442695
  %v2938 = vpow.pop %v2937
  %v2939 = vmul.f32 %v2885, 1.442695
  %v2940 = vpow.pop %v2939
  %v2941 = vmul.f32 %v2886, 1.442695
  %v2942 = vpow.pop %v2941
  %v2943 = vmul.f32 %v2887, 1.442695
  %v2944 = vpow.pop %v2943
  %v2945 = vmul.f32 %v2888, 1.442695
  %v2946 = vpow.pop %v2945
  %v2947 = vmul.f32 %v2889, 1.442695
  %v2948 = vpow.pop %v2947
  %v2949 = vmul.f32 %v2890, 1.442695
  %v2950 = vpow.pop %v2949
  %v2951 = vmul.f32 %v2891, 1.442695
  %v2952 = vpow.pop %v2951
  %v2953 = vmul.f32 %v2892, 1.442695
  %v2954 = vpow.pop %v2953
  %v2955 = vmul.f32 %v2893, 1.442695
  %v2956 = vpow.pop %v2955
  %v2957 = vmul.f32 %v2894, 1.442695
  %v2958 = vpow.pop %v2957
  %v2959 = vadd.f32 %v2896, 1.0
  %v2960 = vadd.f32 %v2898, 1.0
  %v2961 = vadd.f32 %v2900, 1.0
  %v2962 = vadd.f32 %v2902, 1.0
  %v2963 = vadd.f32 %v2904, 1.0
  %v2964 = vadd.f32 %v2906, 1.0
  %v2965 = vadd.f32 %v2908, 1.0
  %v2966 = vadd.f32 %v2910, 1.0
  %v2967 = vadd.f32 %v2912, 1.0
  %v2968 = vadd.f32 %v2914, 1.0
  %v2969 = vadd.f32 %v2916, 1.0
  %v2970 = vadd.f32 %v2918, 1.0
  %v2971 = vadd.f32 %v2920, 1.0
  %v2972 = vadd.f32 %v2922, 1.0
  %v2973 = vadd.f32 %v2924, 1.0
  %v2974 = vadd.f32 %v2926, 1.0
  %v2975 = vadd.f32 %v2928, 1.0
  %v2976 = vadd.f32 %v2930, 1.0
  %v2977 = vadd.f32 %v2932, 1.0
  %v2978 = vadd.f32 %v2934, 1.0
  %v2979 = vadd.f32 %v2936, 1.0
  %v2980 = vadd.f32 %v2938, 1.0
  %v2981 = vadd.f32 %v2940, 1.0
  %v2982 = vadd.f32 %v2942, 1.0
  %v2983 = vadd.f32 %v2944, 1.0
  %v2984 = vadd.f32 %v2946, 1.0
  %v2985 = vadd.f32 %v2948, 1.0
  %v2986 = vadd.f32 %v2950, 1.0
  %v2987 = vadd.f32 %v2952, 1.0
  %v2988 = vadd.f32 %v2954, 1.0
  %v2989 = vadd.f32 %v2956, 1.0
  %v2990 = vadd.f32 %v2958, 1.0
  %v2991 = vrcp.pop %v2959
  %v2992 = vmul.f32 1.0, %v2991
  %v2993 = vrcp.pop %v2960
  %v2994 = vmul.f32 1.0, %v2993
  %v2995 = vrcp.pop %v2961
  %v2996 = vmul.f32 1.0, %v2995
  %v2997 = vrcp.pop %v2962
  %v2998 = vmul.f32 1.0, %v2997
  %v2999 = vrcp.pop %v2963
  %v3000 = vmul.f32 1.0, %v2999
  %v3001 = vrcp.pop %v2964
  %v3002 = vmul.f32 1.0, %v3001
  %v3003 = vrcp.pop %v2965
  %v3004 = vmul.f32 1.0, %v3003
  %v3005 = vrcp.pop %v2966
  %v3006 = vmul.f32 1.0, %v3005
  %v3007 = vrcp.pop %v2967
  %v3008 = vmul.f32 1.0, %v3007
  %v3009 = vrcp.pop %v2968
  %v3010 = vmul.f32 1.0, %v3009
  %v3011 = vrcp.pop %v2969
  %v3012 = vmul.f32 1.0, %v3011
  %v3013 = vrcp.pop %v2970
  %v3014 = vmul.f32 1.0, %v3013
  %v3015 = vrcp.pop %v2971
  %v3016 = vmul.f32 1.0, %v3015
  %v3017 = vrcp.pop %v2972
  %v3018 = vmul.f32 1.0, %v3017
  %v3019 = vrcp.pop %v2973
  %v3020 = vmul.f32 1.0, %v3019
  %v3021 = vrcp.pop %v2974
  %v3022 = vmul.f32 1.0, %v3021
  %v3023 = vrcp.pop %v2975
  %v3024 = vmul.f32 1.0, %v3023
  %v3025 = vrcp.pop %v2976
  %v3026 = vmul.f32 1.0, %v3025
  %v3027 = vrcp.pop %v2977
  %v3028 = vmul.f32 1.0, %v3027
  %v3029 = vrcp.pop %v2978
  %v3030 = vmul.f32 1.0, %v3029
  %v3031 = vrcp.pop %v2979
  %v3032 = vmul.f32 1.0, %v3031
  %v3033 = vrcp.pop %v2980
  %v3034 = vmul.f32 1.0, %v3033
  %v3035 = vrcp.pop %v2981
  %v3036 = vmul.f32 1.0, %v3035
  %v3037 = vrcp.pop %v2982
  %v3038 = vmul.f32 1.0, %v3037
  %v3039 = vrcp.pop %v2983
  %v3040 = vmul.f32 1.0, %v3039
  %v3041 = vrcp.pop %v2984
  %v3042 = vmul.f32 1.0, %v3041
  %v3043 = vrcp.pop %v2985
  %v3044 = vmul.f32 1.0, %v3043
  %v3045 = vrcp.pop %v2986
  %v3046 = vmul.f32 1.0, %v3045
  %v3047 = vrcp.pop %v2987
  %v3048 = vmul.f32 1.0, %v3047
  %v3049 = vrcp.pop %v2988
  %v3050 = vmul.f32 1.0, %v3049
  %v3051 = vrcp.pop %v2989
  %v3052 = vmul.f32 1.0, %v3051
  %v3053 = vrcp.pop %v2990
  %v3054 = vmul.f32 1.0, %v3053
  %v3055 = vmul.f32 %v2737, %v2992
  %v3056 = vmul.f32 %v2740, %v2994
  %v3057 = vmul.f32 %v2745, %v2996
  %v3058 = vmul.f32 %v2748, %v2998
  %v3059 = vmul.f32 %v2753, %v3000
  %v3060 = vmul.f32 %v2756, %v3002
  %v3061 = vmul.f32 %v2761, %v3004
  %v3062 = vmul.f32 %v2764, %v3006
  %v3063 = vmul.f32 %v2769, %v3008
  %v3064 = vmul.f32 %v2772, %v3010
  %v3065 = vmul.f32 %v2777, %v3012
  %v3066 = vmul.f32 %v2780, %v3014
  %v3067 = vmul.f32 %v2785, %v3016
  %v3068 = vmul.f32 %v2788, %v3018
  %v3069 = vmul.f32 %v2793, %v3020
  %v3070 = vmul.f32 %v2796, %v3022
  %v3071 = vmul.f32 %v2801, %v3024
  %v3072 = vmul.f32 %v2804, %v3026
  %v3073 = vmul.f32 %v2809, %v3028
  %v3074 = vmul.f32 %v2812, %v3030
  %v3075 = vmul.f32 %v2817, %v3032
  %v3076 = vmul.f32 %v2820, %v3034
  %v3077 = vmul.f32 %v2825, %v3036
  %v3078 = vmul.f32 %v2828, %v3038
  %v3079 = vmul.f32 %v2833, %v3040
  %v3080 = vmul.f32 %v2836, %v3042
  %v3081 = vmul.f32 %v2841, %v3044
  %v3082 = vmul.f32 %v2844, %v3046
  %v3083 = vmul.f32 %v2849, %v3048
  %v3084 = vmul.f32 %v2852, %v3050
  %v3085 = vmul.f32 %v2857, %v3052
  %v3086 = vmul.f32 %v2860, %v3054
  %v3087 = vsel %vm581, %v3055, 0.0
  %v3088 = vsel %vm581, %v3056, 0.0
  %v3089 = vadd.f32 %v3087, %v3088
  %v3090 = vsel %vm581, %v3057, 0.0
  %v3091 = vadd.f32 %v3089, %v3090
  %v3092 = vsel %vm581, %v3058, 0.0
  %v3093 = vadd.f32 %v3091, %v3092
  %v3094 = vsel %vm581, %v3059, 0.0
  %v3095 = vadd.f32 %v3093, %v3094
  %v3096 = vsel %vm581, %v3060, 0.0
  %v3097 = vadd.f32 %v3095, %v3096
  %v3098 = vsel %vm581, %v3061, 0.0
  %v3099 = vadd.f32 %v3097, %v3098
  %v3100 = vsel %vm581, %v3062, 0.0
  %v3101 = vadd.f32 %v3099, %v3100
  %v3102 = vsel %vm581, %v3063, 0.0
  %v3103 = vadd.f32 %v3101, %v3102
  %v3104 = vsel %vm581, %v3064, 0.0
  %v3105 = vadd.f32 %v3103, %v3104
  %v3106 = vsel %vm581, %v3065, 0.0
  %v3107 = vadd.f32 %v3105, %v3106
  %v3108 = vsel %vm581, %v3066, 0.0
  %v3109 = vadd.f32 %v3107, %v3108
  %v3110 = vsel %vm581, %v3067, 0.0
  %v3111 = vadd.f32 %v3109, %v3110
  %v3112 = vsel %vm581, %v3068, 0.0
  %v3113 = vadd.f32 %v3111, %v3112
  %v3114 = vsel %vm581, %v3069, 0.0
  %v3115 = vadd.f32 %v3113, %v3114
  %v3116 = vsel %vm581, %v3070, 0.0
  %v3117 = vadd.f32 %v3115, %v3116
  %v3118 = vsel %vm581, %v3071, 0.0
  %v3119 = vadd.f32 %v3117, %v3118
  %v3120 = vsel %vm581, %v3072, 0.0
  %v3121 = vadd.f32 %v3119, %v3120
  %v3122 = vsel %vm581, %v3073, 0.0
  %v3123 = vadd.f32 %v3121, %v3122
  %v3124 = vsel %vm581, %v3074, 0.0
  %v3125 = vadd.f32 %v3123, %v3124
  %v3126 = vsel %vm581, %v3075, 0.0
  %v3127 = vadd.f32 %v3125, %v3126
  %v3128 = vsel %vm581, %v3076, 0.0
  %v3129 = vadd.f32 %v3127, %v3128
  %v3130 = vsel %vm581, %v3077, 0.0
  %v3131 = vadd.f32 %v3129, %v3130
  %v3132 = vsel %vm581, %v3078, 0.0
  %v3133 = vadd.f32 %v3131, %v3132
  %v3134 = vsel %vm581, %v3079, 0.0
  %v3135 = vadd.f32 %v3133, %v3134
  %v3136 = vsel %vm581, %v3080, 0.0
  %v3137 = vadd.f32 %v3135, %v3136
  %v3138 = vsel %vm581, %v3081, 0.0
  %v3139 = vadd.f32 %v3137, %v3138
  %v3140 = vsel %vm581, %v3082, 0.0
  %v3141 = vadd.f32 %v3139, %v3140
  %v3142 = vsel %vm581, %v3083, 0.0
  %v3143 = vadd.f32 %v3141, %v3142
  %v3144 = vsel %vm581, %v3084, 0.0
  %v3145 = vadd.f32 %v3143, %v3144
  %v3146 = vsel %vm581, %v3085, 0.0
  %v3147 = vadd.f32 %v3145, %v3146
  %v3148 = vsel %vm581, %v3086, 0.0
  %v3149 = vadd.f32 %v3147, %v3148
  %v3150 = vrot.slane %v3149, 4
  %v3151 = vadd.f32 %v3149, %v3150
  %v3152 = vrot.slane %v3151, 2
  %v3153 = vadd.f32 %v3151, %v3152
  %v3154 = vrot.slane %v3153, 1
  %v3155 = vadd.f32 %v3153, %v3154
  %v3156 = vmul.f32 %v3155, 0.00390625
  %3157 = vst.msk [vmem:[#allocation2 + $0x4] sm:$0x1] %vm652, %v3156
  %v3158 = vld [vmem:[%s0 + $0x280] sm:$0xf]
  %v3159 = vld [vmem:[%s0 + $0x284] sm:$0xf]
  %v3160 = vld [vmem:[%s0 + $0x288] sm:$0xf]
  %v3161 = vld [vmem:[%s0 + $0x28c] sm:$0xf]
  %v3162 = vld [vmem:[%s0 + $0x290] sm:$0xf]
  %v3163 = vld [vmem:[%s0 + $0x294] sm:$0xf]
  %v3164 = vld [vmem:[%s0 + $0x298] sm:$0xf]
  %v3165 = vld [vmem:[%s0 + $0x29c] sm:$0xf]
  %v3166 = vld [vmem:[%s0 + $0x2a0] sm:$0xf]
  %v3167 = vld [vmem:[%s0 + $0x2a4] sm:$0xf]
  %v3168 = vld [vmem:[%s0 + $0x2a8] sm:$0xf]
  %v3169 = vld [vmem:[%s0 + $0x2ac] sm:$0xf]
  %v3170 = vld [vmem:[%s0 + $0x2b0] sm:$0xf]
  %v3171 = vld [vmem:[%s0 + $0x2b4] sm:$0xf]
  %v3172 = vld [vmem:[%s0 + $0x2b8] sm:$0xf]
  %v3173 = vld [vmem:[%s0 + $0x2bc] sm:$0xf]
  %v3174 = vld [vmem:[%s0 + $0x2c0] sm:$0xf]
  %v3175 = vld [vmem:[%s0 + $0x2c4] sm:$0xf]
  %v3176 = vld [vmem:[%s0 + $0x2c8] sm:$0xf]
  %v3177 = vld [vmem:[%s0 + $0x2cc] sm:$0xf]
  %v3178 = vld [vmem:[%s0 + $0x2d0] sm:$0xf]
  %v3179 = vld [vmem:[%s0 + $0x2d4] sm:$0xf]
  %v3180 = vld [vmem:[%s0 + $0x2d8] sm:$0xf]
  %v3181 = vld [vmem:[%s0 + $0x2dc] sm:$0xf]
  %v3182 = vld [vmem:[%s0 + $0x2e0] sm:$0xf]
  %v3183 = vld [vmem:[%s0 + $0x2e4] sm:$0xf]
  %v3184 = vld [vmem:[%s0 + $0x2e8] sm:$0xf]
  %v3185 = vld [vmem:[%s0 + $0x2ec] sm:$0xf]
  %v3186 = vld [vmem:[%s0 + $0x2f0] sm:$0xf]
  %v3187 = vld [vmem:[%s0 + $0x2f4] sm:$0xf]
  %v3188 = vld [vmem:[%s0 + $0x2f8] sm:$0xf]
  %v3189 = vld [vmem:[%s0 + $0x2fc] sm:$0xf]
  %v3190 = vld [vmem:[%s1] sm:$0xf]
  %v3191 = vld [vmem:[%s1 + $0x4] sm:$0x1]
  %v3224 = vunpack.c.l.b16 %v3158
  %v3225 = vunpack.c.l.b16 %v3159
  %v3226 = vunpack.c.l.b16 %v3160
  %v3227 = vunpack.c.l.b16 %v3161
  %v3228 = vunpack.c.l.b16 %v3162
  %v3229 = vunpack.c.l.b16 %v3163
  %v3230 = vunpack.c.l.b16 %v3164
  %v3231 = vunpack.c.l.b16 %v3165
  %v3232 = vunpack.c.l.b16 %v3166
  %v3233 = vunpack.c.l.b16 %v3167
  %v3234 = vunpack.c.l.b16 %v3168
  %v3235 = vunpack.c.l.b16 %v3169
  %v3236 = vunpack.c.l.b16 %v3170
  %v3237 = vunpack.c.l.b16 %v3171
  %v3238 = vunpack.c.l.b16 %v3172
  %v3239 = vunpack.c.l.b16 %v3173
  %v3240 = vunpack.c.l.b16 %v3174
  %v3241 = vunpack.c.l.b16 %v3175
  %v3242 = vunpack.c.l.b16 %v3176
  %v3243 = vunpack.c.l.b16 %v3177
  %v3244 = vunpack.c.l.b16 %v3178
  %v3245 = vunpack.c.l.b16 %v3179
  %v3246 = vunpack.c.l.b16 %v3180
  %v3247 = vunpack.c.l.b16 %v3181
  %v3248 = vunpack.c.l.b16 %v3182
  %v3249 = vunpack.c.l.b16 %v3183
  %v3250 = vunpack.c.l.b16 %v3184
  %v3251 = vunpack.c.l.b16 %v3185
  %v3252 = vunpack.c.l.b16 %v3186
  %v3253 = vunpack.c.l.b16 %v3187
  %v3254 = vunpack.c.l.b16 %v3188
  %v3255 = vunpack.c.l.b16 %v3189
  %v3256 = vpack.c.b16 %v3225, %v3224
  %v3257 = vpack.c.b16 %v3227, %v3226
  %v3258 = vpack.c.b16 %v3229, %v3228
  %v3259 = vpack.c.b16 %v3231, %v3230
  %v3260 = vpack.c.b16 %v3233, %v3232
  %v3261 = vpack.c.b16 %v3235, %v3234
  %v3262 = vpack.c.b16 %v3237, %v3236
  %v3263 = vpack.c.b16 %v3239, %v3238
  %v3264 = vpack.c.b16 %v3241, %v3240
  %v3265 = vpack.c.b16 %v3243, %v3242
  %v3266 = vpack.c.b16 %v3245, %v3244
  %v3267 = vpack.c.b16 %v3247, %v3246
  %v3268 = vpack.c.b16 %v3249, %v3248
  %v3269 = vpack.c.b16 %v3251, %v3250
  %v3270 = vpack.c.b16 %v3253, %v3252
  %v3271 = vpack.c.b16 %v3255, %v3254
  %v3274 = vunpack.c.l.b16 %v3190
  %v3275 = vunpack.c.l.b16 %v3191
  %v3276 = vpack.c.b16 %v3275, %v3274
  %v3278 = vsel %vm140, %v3256, 0
  %v3281 = vsel %vm140, %v3257, 0
  %v3284 = vsel %vm140, %v3258, 0
  %v3287 = vsel %vm140, %v3259, 0
  %v3290 = vsel %vm140, %v3260, 0
  %v3293 = vsel %vm140, %v3261, 0
  %v3296 = vsel %vm140, %v3262, 0
  %v3299 = vsel %vm140, %v3263, 0
  %v3302 = vsel %vm140, %v3264, 0
  %v3305 = vsel %vm140, %v3265, 0
  %v3308 = vsel %vm140, %v3266, 0
  %v3311 = vsel %vm140, %v3267, 0
  %v3314 = vsel %vm140, %v3268, 0
  %v3317 = vsel %vm140, %v3269, 0
  %v3320 = vsel %vm140, %v3270, 0
  %v3323 = vsel %vm140, %v3271, 0
  %v3326 = vand.u32 %v3276, %v192
  %3328 = vmatprep.subr.bf16.mxu0 0
  %3329 = vmatpush1.bf16.msra.mxu0 0
  %3330 = vmatprep.subr.bf16.mxu0 0
  %3331 = vmatpush1.bf16.msra.mxu0 0
  %3332 = vmatprep.subr.bf16.mxu0 0
  %3333 = vmatpush1.bf16.msra.mxu0 0
  %3334 = vmatprep.subr.bf16.mxu0 0
  %3335 = vmatpush1.bf16.msra.mxu0 0
  %3336 = vmatprep.subr.bf16.mxu0 0
  %3337 = vmatpush1.bf16.msra.mxu0 0
  %3338 = vmatprep.subr.bf16.mxu0 0
  %3339 = vmatpush1.bf16.msra.mxu0 0
  %3340 = vmatprep.subr.bf16.mxu0 0
  %3341 = vmatpush1.bf16.msra.mxu0 0
  %3342 = vmatprep.subr.bf16.mxu0 0
  %3343 = vmatpush1.bf16.msra.mxu0 %v3326
  %3344 = vmatprep.subr.bf16.mxu0 0
  %3345 = vmatpush2.bf16.msra.mxu0 0
  %3346 = vmatprep.subr.bf16.mxu0 0
  %3347 = vmatpush2.bf16.msra.mxu0 0
  %3348 = vmatprep.subr.bf16.mxu0 0
  %3349 = vmatpush2.bf16.msra.mxu0 0
  %3350 = vmatprep.subr.bf16.mxu0 0
  %3351 = vmatpush2.bf16.msra.mxu0 0
  %3352 = vmatprep.subr.bf16.mxu0 0
  %3353 = vmatpush2.bf16.msra.mxu0 0
  %3354 = vmatprep.subr.bf16.mxu0 0
  %3355 = vmatpush2.bf16.msra.mxu0 0
  %3356 = vmatprep.subr.bf16.mxu0 0
  %3357 = vmatpush2.bf16.msra.mxu0 0
  %3358 = vmatprep.subr.bf16.mxu0 0
  %3359 = vmatpush2.bf16.msra.mxu0 0
  %3360 = vmatprep.mubr.bf16.mxu0 0
  %3361 = vmatmul.mubr.bf16.gmra.mxu0 %v3278
  %v3362 = vpop.f32.mrf.mxu0
  %v3363 = vadd.f32 0.0, %v3362
  %v3364 = vpop.f32.mrf.mxu0
  %v3365 = vpop.f32.mrf.mxu0
  %v3366 = vadd.f32 0.0, %v3365
  %v3367 = vpop.f32.mrf.mxu0
  %3368 = vmatprep.mubr.bf16.mxu0 0
  %3369 = vmatmul.mubr.bf16.gmra.mxu0 %v3281
  %v3370 = vpop.f32.mrf.mxu0
  %v3371 = vadd.f32 0.0, %v3370
  %v3372 = vpop.f32.mrf.mxu0
  %v3373 = vpop.f32.mrf.mxu0
  %v3374 = vadd.f32 0.0, %v3373
  %v3375 = vpop.f32.mrf.mxu0
  %3376 = vmatprep.mubr.bf16.mxu0 0
  %3377 = vmatmul.mubr.bf16.gmra.mxu0 %v3284
  %v3378 = vpop.f32.mrf.mxu0
  %v3379 = vadd.f32 0.0, %v3378
  %v3380 = vpop.f32.mrf.mxu0
  %v3381 = vpop.f32.mrf.mxu0
  %v3382 = vadd.f32 0.0, %v3381
  %v3383 = vpop.f32.mrf.mxu0
  %3384 = vmatprep.mubr.bf16.mxu0 0
  %3385 = vmatmul.mubr.bf16.gmra.mxu0 %v3287
  %v3386 = vpop.f32.mrf.mxu0
  %v3387 = vadd.f32 0.0, %v3386
  %v3388 = vpop.f32.mrf.mxu0
  %v3389 = vpop.f32.mrf.mxu0
  %v3390 = vadd.f32 0.0, %v3389
  %v3391 = vpop.f32.mrf.mxu0
  %3392 = vmatprep.mubr.bf16.mxu0 0
  %3393 = vmatmul.mubr.bf16.gmra.mxu0 %v3290
  %v3394 = vpop.f32.mrf.mxu0
  %v3395 = vadd.f32 0.0, %v3394
  %v3396 = vpop.f32.mrf.mxu0
  %v3397 = vpop.f32.mrf.mxu0
  %v3398 = vadd.f32 0.0, %v3397
  %v3399 = vpop.f32.mrf.mxu0
  %3400 = vmatprep.mubr.bf16.mxu0 0
  %3401 = vmatmul.mubr.bf16.gmra.mxu0 %v3293
  %v3402 = vpop.f32.mrf.mxu0
  %v3403 = vadd.f32 0.0, %v3402
  %v3404 = vpop.f32.mrf.mxu0
  %v3405 = vpop.f32.mrf.mxu0
  %v3406 = vadd.f32 0.0, %v3405
  %v3407 = vpop.f32.mrf.mxu0
  %3408 = vmatprep.mubr.bf16.mxu0 0
  %3409 = vmatmul.mubr.bf16.gmra.mxu0 %v3296
  %v3410 = vpop.f32.mrf.mxu0
  %v3411 = vadd.f32 0.0, %v3410
  %v3412 = vpop.f32.mrf.mxu0
  %v3413 = vpop.f32.mrf.mxu0
  %v3414 = vadd.f32 0.0, %v3413
  %v3415 = vpop.f32.mrf.mxu0
  %3416 = vmatprep.mubr.bf16.mxu0 0
  %3417 = vmatmul.mubr.bf16.gmra.mxu0 %v3299
  %v3418 = vpop.f32.mrf.mxu0
  %v3419 = vadd.f32 0.0, %v3418
  %v3420 = vpop.f32.mrf.mxu0
  %v3421 = vpop.f32.mrf.mxu0
  %v3422 = vadd.f32 0.0, %v3421
  %v3423 = vpop.f32.mrf.mxu0
  %3424 = vmatprep.mubr.bf16.mxu0 0
  %3425 = vmatmul.mubr.bf16.gmra.mxu0 %v3302
  %v3426 = vpop.f32.mrf.mxu0
  %v3427 = vadd.f32 0.0, %v3426
  %v3428 = vpop.f32.mrf.mxu0
  %v3429 = vpop.f32.mrf.mxu0
  %v3430 = vadd.f32 0.0, %v3429
  %v3431 = vpop.f32.mrf.mxu0
  %3432 = vmatprep.mubr.bf16.mxu0 0
  %3433 = vmatmul.mubr.bf16.gmra.mxu0 %v3305
  %v3434 = vpop.f32.mrf.mxu0
  %v3435 = vadd.f32 0.0, %v3434
  %v3436 = vpop.f32.mrf.mxu0
  %v3437 = vpop.f32.mrf.mxu0
  %v3438 = vadd.f32 0.0, %v3437
  %v3439 = vpop.f32.mrf.mxu0
  %3440 = vmatprep.mubr.bf16.mxu0 0
  %3441 = vmatmul.mubr.bf16.gmra.mxu0 %v3308
  %v3442 = vpop.f32.mrf.mxu0
  %v3443 = vadd.f32 0.0, %v3442
  %v3444 = vpop.f32.mrf.mxu0
  %v3445 = vpop.f32.mrf.mxu0
  %v3446 = vadd.f32 0.0, %v3445
  %v3447 = vpop.f32.mrf.mxu0
  %3448 = vmatprep.mubr.bf16.mxu0 0
  %3449 = vmatmul.mubr.bf16.gmra.mxu0 %v3311
  %v3450 = vpop.f32.mrf.mxu0
  %v3451 = vadd.f32 0.0, %v3450
  %v3452 = vpop.f32.mrf.mxu0
  %v3453 = vpop.f32.mrf.mxu0
  %v3454 = vadd.f32 0.0, %v3453
  %v3455 = vpop.f32.mrf.mxu0
  %3456 = vmatprep.mubr.bf16.mxu0 0
  %3457 = vmatmul.mubr.bf16.gmra.mxu0 %v3314
  %v3458 = vpop.f32.mrf.mxu0
  %v3459 = vadd.f32 0.0, %v3458
  %v3460 = vpop.f32.mrf.mxu0
  %v3461 = vpop.f32.mrf.mxu0
  %v3462 = vadd.f32 0.0, %v3461
  %v3463 = vpop.f32.mrf.mxu0
  %3464 = vmatprep.mubr.bf16.mxu0 0
  %3465 = vmatmul.mubr.bf16.gmra.mxu0 %v3317
  %v3466 = vpop.f32.mrf.mxu0
  %v3467 = vadd.f32 0.0, %v3466
  %v3468 = vpop.f32.mrf.mxu0
  %v3469 = vpop.f32.mrf.mxu0
  %v3470 = vadd.f32 0.0, %v3469
  %v3471 = vpop.f32.mrf.mxu0
  %3472 = vmatprep.mubr.bf16.mxu0 0
  %3473 = vmatmul.mubr.bf16.gmra.mxu0 %v3320
  %v3474 = vpop.f32.mrf.mxu0
  %v3475 = vadd.f32 0.0, %v3474
  %v3476 = vpop.f32.mrf.mxu0
  %v3477 = vpop.f32.mrf.mxu0
  %v3478 = vadd.f32 0.0, %v3477
  %v3479 = vpop.f32.mrf.mxu0
  %3480 = vmatprep.mubr.bf16.mxu0 0
  %3481 = vmatmul.mubr.bf16.gmra.mxu0 %v3323
  %v3482 = vpop.f32.mrf.mxu0
  %v3483 = vadd.f32 0.0, %v3482
  %v3484 = vpop.f32.mrf.mxu0
  %v3485 = vpop.f32.mrf.mxu0
  %v3486 = vadd.f32 0.0, %v3485
  %v3487 = vpop.f32.mrf.mxu0
  %3488 = vdwg.mxu0
  %v3489 = vxor.u32 %v3363, 2147483648
  %v3490 = vxor.u32 %v3366, 2147483648
  %v3491 = vxor.u32 %v3371, 2147483648
  %v3492 = vxor.u32 %v3374, 2147483648
  %v3493 = vxor.u32 %v3379, 2147483648
  %v3494 = vxor.u32 %v3382, 2147483648
  %v3495 = vxor.u32 %v3387, 2147483648
  %v3496 = vxor.u32 %v3390, 2147483648
  %v3497 = vxor.u32 %v3395, 2147483648
  %v3498 = vxor.u32 %v3398, 2147483648
  %v3499 = vxor.u32 %v3403, 2147483648
  %v3500 = vxor.u32 %v3406, 2147483648
  %v3501 = vxor.u32 %v3411, 2147483648
  %v3502 = vxor.u32 %v3414, 2147483648
  %v3503 = vxor.u32 %v3419, 2147483648
  %v3504 = vxor.u32 %v3422, 2147483648
  %v3505 = vxor.u32 %v3427, 2147483648
  %v3506 = vxor.u32 %v3430, 2147483648
  %v3507 = vxor.u32 %v3435, 2147483648
  %v3508 = vxor.u32 %v3438, 2147483648
  %v3509 = vxor.u32 %v3443, 2147483648
  %v3510 = vxor.u32 %v3446, 2147483648
  %v3511 = vxor.u32 %v3451, 2147483648
  %v3512 = vxor.u32 %v3454, 2147483648
  %v3513 = vxor.u32 %v3459, 2147483648
  %v3514 = vxor.u32 %v3462, 2147483648
  %v3515 = vxor.u32 %v3467, 2147483648
  %v3516 = vxor.u32 %v3470, 2147483648
  %v3517 = vxor.u32 %v3475, 2147483648
  %v3518 = vxor.u32 %v3478, 2147483648
  %v3519 = vxor.u32 %v3483, 2147483648
  %v3520 = vxor.u32 %v3486, 2147483648
  %v3521 = vmul.f32 %v3489, 1.442695
  %v3522 = vpow.pop %v3521
  %v3523 = vmul.f32 %v3490, 1.442695
  %v3524 = vpow.pop %v3523
  %v3525 = vmul.f32 %v3491, 1.442695
  %v3526 = vpow.pop %v3525
  %v3527 = vmul.f32 %v3492, 1.442695
  %v3528 = vpow.pop %v3527
  %v3529 = vmul.f32 %v3493, 1.442695
  %v3530 = vpow.pop %v3529
  %v3531 = vmul.f32 %v3494, 1.442695
  %v3532 = vpow.pop %v3531
  %v3533 = vmul.f32 %v3495, 1.442695
  %v3534 = vpow.pop %v3533
  %v3535 = vmul.f32 %v3496, 1.442695
  %v3536 = vpow.pop %v3535
  %v3537 = vmul.f32 %v3497, 1.442695
  %v3538 = vpow.pop %v3537
  %v3539 = vmul.f32 %v3498, 1.442695
  %v3540 = vpow.pop %v3539
  %v3541 = vmul.f32 %v3499, 1.442695
  %v3542 = vpow.pop %v3541
  %v3543 = vmul.f32 %v3500, 1.442695
  %v3544 = vpow.pop %v3543
  %v3545 = vmul.f32 %v3501, 1.442695
  %v3546 = vpow.pop %v3545
  %v3547 = vmul.f32 %v3502, 1.442695
  %v3548 = vpow.pop %v3547
  %v3549 = vmul.f32 %v3503, 1.442695
  %v3550 = vpow.pop %v3549
  %v3551 = vmul.f32 %v3504, 1.442695
  %v3552 = vpow.pop %v3551
  %v3553 = vmul.f32 %v3505, 1.442695
  %v3554 = vpow.pop %v3553
  %v3555 = vmul.f32 %v3506, 1.442695
  %v3556 = vpow.pop %v3555
  %v3557 = vmul.f32 %v3507, 1.442695
  %v3558 = vpow.pop %v3557
  %v3559 = vmul.f32 %v3508, 1.442695
  %v3560 = vpow.pop %v3559
  %v3561 = vmul.f32 %v3509, 1.442695
  %v3562 = vpow.pop %v3561
  %v3563 = vmul.f32 %v3510, 1.442695
  %v3564 = vpow.pop %v3563
  %v3565 = vmul.f32 %v3511, 1.442695
  %v3566 = vpow.pop %v3565
  %v3567 = vmul.f32 %v3512, 1.442695
  %v3568 = vpow.pop %v3567
  %v3569 = vmul.f32 %v3513, 1.442695
  %v3570 = vpow.pop %v3569
  %v3571 = vmul.f32 %v3514, 1.442695
  %v3572 = vpow.pop %v3571
  %v3573 = vmul.f32 %v3515, 1.442695
  %v3574 = vpow.pop %v3573
  %v3575 = vmul.f32 %v3516, 1.442695
  %v3576 = vpow.pop %v3575
  %v3577 = vmul.f32 %v3517, 1.442695
  %v3578 = vpow.pop %v3577
  %v3579 = vmul.f32 %v3518, 1.442695
  %v3580 = vpow.pop %v3579
  %v3581 = vmul.f32 %v3519, 1.442695
  %v3582 = vpow.pop %v3581
  %v3583 = vmul.f32 %v3520, 1.442695
  %v3584 = vpow.pop %v3583
  %v3585 = vadd.f32 %v3522, 1.0
  %v3586 = vadd.f32 %v3524, 1.0
  %v3587 = vadd.f32 %v3526, 1.0
  %v3588 = vadd.f32 %v3528, 1.0
  %v3589 = vadd.f32 %v3530, 1.0
  %v3590 = vadd.f32 %v3532, 1.0
  %v3591 = vadd.f32 %v3534, 1.0
  %v3592 = vadd.f32 %v3536, 1.0
  %v3593 = vadd.f32 %v3538, 1.0
  %v3594 = vadd.f32 %v3540, 1.0
  %v3595 = vadd.f32 %v3542, 1.0
  %v3596 = vadd.f32 %v3544, 1.0
  %v3597 = vadd.f32 %v3546, 1.0
  %v3598 = vadd.f32 %v3548, 1.0
  %v3599 = vadd.f32 %v3550, 1.0
  %v3600 = vadd.f32 %v3552, 1.0
  %v3601 = vadd.f32 %v3554, 1.0
  %v3602 = vadd.f32 %v3556, 1.0
  %v3603 = vadd.f32 %v3558, 1.0
  %v3604 = vadd.f32 %v3560, 1.0
  %v3605 = vadd.f32 %v3562, 1.0
  %v3606 = vadd.f32 %v3564, 1.0
  %v3607 = vadd.f32 %v3566, 1.0
  %v3608 = vadd.f32 %v3568, 1.0
  %v3609 = vadd.f32 %v3570, 1.0
  %v3610 = vadd.f32 %v3572, 1.0
  %v3611 = vadd.f32 %v3574, 1.0
  %v3612 = vadd.f32 %v3576, 1.0
  %v3613 = vadd.f32 %v3578, 1.0
  %v3614 = vadd.f32 %v3580, 1.0
  %v3615 = vadd.f32 %v3582, 1.0
  %v3616 = vadd.f32 %v3584, 1.0
  %v3617 = vrcp.pop %v3585
  %v3618 = vmul.f32 1.0, %v3617
  %v3619 = vrcp.pop %v3586
  %v3620 = vmul.f32 1.0, %v3619
  %v3621 = vrcp.pop %v3587
  %v3622 = vmul.f32 1.0, %v3621
  %v3623 = vrcp.pop %v3588
  %v3624 = vmul.f32 1.0, %v3623
  %v3625 = vrcp.pop %v3589
  %v3626 = vmul.f32 1.0, %v3625
  %v3627 = vrcp.pop %v3590
  %v3628 = vmul.f32 1.0, %v3627
  %v3629 = vrcp.pop %v3591
  %v3630 = vmul.f32 1.0, %v3629
  %v3631 = vrcp.pop %v3592
  %v3632 = vmul.f32 1.0, %v3631
  %v3633 = vrcp.pop %v3593
  %v3634 = vmul.f32 1.0, %v3633
  %v3635 = vrcp.pop %v3594
  %v3636 = vmul.f32 1.0, %v3635
  %v3637 = vrcp.pop %v3595
  %v3638 = vmul.f32 1.0, %v3637
  %v3639 = vrcp.pop %v3596
  %v3640 = vmul.f32 1.0, %v3639
  %v3641 = vrcp.pop %v3597
  %v3642 = vmul.f32 1.0, %v3641
  %v3643 = vrcp.pop %v3598
  %v3644 = vmul.f32 1.0, %v3643
  %v3645 = vrcp.pop %v3599
  %v3646 = vmul.f32 1.0, %v3645
  %v3647 = vrcp.pop %v3600
  %v3648 = vmul.f32 1.0, %v3647
  %v3649 = vrcp.pop %v3601
  %v3650 = vmul.f32 1.0, %v3649
  %v3651 = vrcp.pop %v3602
  %v3652 = vmul.f32 1.0, %v3651
  %v3653 = vrcp.pop %v3603
  %v3654 = vmul.f32 1.0, %v3653
  %v3655 = vrcp.pop %v3604
  %v3656 = vmul.f32 1.0, %v3655
  %v3657 = vrcp.pop %v3605
  %v3658 = vmul.f32 1.0, %v3657
  %v3659 = vrcp.pop %v3606
  %v3660 = vmul.f32 1.0, %v3659
  %v3661 = vrcp.pop %v3607
  %v3662 = vmul.f32 1.0, %v3661
  %v3663 = vrcp.pop %v3608
  %v3664 = vmul.f32 1.0, %v3663
  %v3665 = vrcp.pop %v3609
  %v3666 = vmul.f32 1.0, %v3665
  %v3667 = vrcp.pop %v3610
  %v3668 = vmul.f32 1.0, %v3667
  %v3669 = vrcp.pop %v3611
  %v3670 = vmul.f32 1.0, %v3669
  %v3671 = vrcp.pop %v3612
  %v3672 = vmul.f32 1.0, %v3671
  %v3673 = vrcp.pop %v3613
  %v3674 = vmul.f32 1.0, %v3673
  %v3675 = vrcp.pop %v3614
  %v3676 = vmul.f32 1.0, %v3675
  %v3677 = vrcp.pop %v3615
  %v3678 = vmul.f32 1.0, %v3677
  %v3679 = vrcp.pop %v3616
  %v3680 = vmul.f32 1.0, %v3679
  %v3681 = vmul.f32 %v3363, %v3618
  %v3682 = vmul.f32 %v3366, %v3620
  %v3683 = vmul.f32 %v3371, %v3622
  %v3684 = vmul.f32 %v3374, %v3624
  %v3685 = vmul.f32 %v3379, %v3626
  %v3686 = vmul.f32 %v3382, %v3628
  %v3687 = vmul.f32 %v3387, %v3630
  %v3688 = vmul.f32 %v3390, %v3632
  %v3689 = vmul.f32 %v3395, %v3634
  %v3690 = vmul.f32 %v3398, %v3636
  %v3691 = vmul.f32 %v3403, %v3638
  %v3692 = vmul.f32 %v3406, %v3640
  %v3693 = vmul.f32 %v3411, %v3642
  %v3694 = vmul.f32 %v3414, %v3644
  %v3695 = vmul.f32 %v3419, %v3646
  %v3696 = vmul.f32 %v3422, %v3648
  %v3697 = vmul.f32 %v3427, %v3650
  %v3698 = vmul.f32 %v3430, %v3652
  %v3699 = vmul.f32 %v3435, %v3654
  %v3700 = vmul.f32 %v3438, %v3656
  %v3701 = vmul.f32 %v3443, %v3658
  %v3702 = vmul.f32 %v3446, %v3660
  %v3703 = vmul.f32 %v3451, %v3662
  %v3704 = vmul.f32 %v3454, %v3664
  %v3705 = vmul.f32 %v3459, %v3666
  %v3706 = vmul.f32 %v3462, %v3668
  %v3707 = vmul.f32 %v3467, %v3670
  %v3708 = vmul.f32 %v3470, %v3672
  %v3709 = vmul.f32 %v3475, %v3674
  %v3710 = vmul.f32 %v3478, %v3676
  %v3711 = vmul.f32 %v3483, %v3678
  %v3712 = vmul.f32 %v3486, %v3680
  %v3713 = vsel %vm581, %v3681, 0.0
  %v3714 = vsel %vm581, %v3682, 0.0
  %v3715 = vadd.f32 %v3713, %v3714
  %v3716 = vsel %vm581, %v3683, 0.0
  %v3717 = vadd.f32 %v3715, %v3716
  %v3718 = vsel %vm581, %v3684, 0.0
  %v3719 = vadd.f32 %v3717, %v3718
  %v3720 = vsel %vm581, %v3685, 0.0
  %v3721 = vadd.f32 %v3719, %v3720
  %v3722 = vsel %vm581, %v3686, 0.0
  %v3723 = vadd.f32 %v3721, %v3722
  %v3724 = vsel %vm581, %v3687, 0.0
  %v3725 = vadd.f32 %v3723, %v3724
  %v3726 = vsel %vm581, %v3688, 0.0
  %v3727 = vadd.f32 %v3725, %v3726
  %v3728 = vsel %vm581, %v3689, 0.0
  %v3729 = vadd.f32 %v3727, %v3728
  %v3730 = vsel %vm581, %v3690, 0.0
  %v3731 = vadd.f32 %v3729, %v3730
  %v3732 = vsel %vm581, %v3691, 0.0
  %v3733 = vadd.f32 %v3731, %v3732
  %v3734 = vsel %vm581, %v3692, 0.0
  %v3735 = vadd.f32 %v3733, %v3734
  %v3736 = vsel %vm581, %v3693, 0.0
  %v3737 = vadd.f32 %v3735, %v3736
  %v3738 = vsel %vm581, %v3694, 0.0
  %v3739 = vadd.f32 %v3737, %v3738
  %v3740 = vsel %vm581, %v3695, 0.0
  %v3741 = vadd.f32 %v3739, %v3740
  %v3742 = vsel %vm581, %v3696, 0.0
  %v3743 = vadd.f32 %v3741, %v3742
  %v3744 = vsel %vm581, %v3697, 0.0
  %v3745 = vadd.f32 %v3743, %v3744
  %v3746 = vsel %vm581, %v3698, 0.0
  %v3747 = vadd.f32 %v3745, %v3746
  %v3748 = vsel %vm581, %v3699, 0.0
  %v3749 = vadd.f32 %v3747, %v3748
  %v3750 = vsel %vm581, %v3700, 0.0
  %v3751 = vadd.f32 %v3749, %v3750
  %v3752 = vsel %vm581, %v3701, 0.0
  %v3753 = vadd.f32 %v3751, %v3752
  %v3754 = vsel %vm581, %v3702, 0.0
  %v3755 = vadd.f32 %v3753, %v3754
  %v3756 = vsel %vm581, %v3703, 0.0
  %v3757 = vadd.f32 %v3755, %v3756
  %v3758 = vsel %vm581, %v3704, 0.0
  %v3759 = vadd.f32 %v3757, %v3758
  %v3760 = vsel %vm581, %v3705, 0.0
  %v3761 = vadd.f32 %v3759, %v3760
  %v3762 = vsel %vm581, %v3706, 0.0
  %v3763 = vadd.f32 %v3761, %v3762
  %v3764 = vsel %vm581, %v3707, 0.0
  %v3765 = vadd.f32 %v3763, %v3764
  %v3766 = vsel %vm581, %v3708, 0.0
  %v3767 = vadd.f32 %v3765, %v3766
  %v3768 = vsel %vm581, %v3709, 0.0
  %v3769 = vadd.f32 %v3767, %v3768
  %v3770 = vsel %vm581, %v3710, 0.0
  %v3771 = vadd.f32 %v3769, %v3770
  %v3772 = vsel %vm581, %v3711, 0.0
  %v3773 = vadd.f32 %v3771, %v3772
  %v3774 = vsel %vm581, %v3712, 0.0
  %v3775 = vadd.f32 %v3773, %v3774
  %v3776 = vrot.slane %v3775, 4
  %v3777 = vadd.f32 %v3775, %v3776
  %v3778 = vrot.slane %v3777, 2
  %v3779 = vadd.f32 %v3777, %v3778
  %v3780 = vrot.slane %v3779, 1
  %v3781 = vadd.f32 %v3779, %v3780
  %v3782 = vmul.f32 %v3781, 0.00390625
  %3783 = vst.msk [vmem:[#allocation2 + $0x5] sm:$0x1] %vm652, %v3782
  %v3784 = vld [vmem:[%s0 + $0x300] sm:$0xf]
  %v3785 = vld [vmem:[%s0 + $0x304] sm:$0xf]
  %v3786 = vld [vmem:[%s0 + $0x308] sm:$0xf]
  %v3787 = vld [vmem:[%s0 + $0x30c] sm:$0xf]
  %v3788 = vld [vmem:[%s0 + $0x310] sm:$0xf]
  %v3789 = vld [vmem:[%s0 + $0x314] sm:$0xf]
  %v3790 = vld [vmem:[%s0 + $0x318] sm:$0xf]
  %v3791 = vld [vmem:[%s0 + $0x31c] sm:$0xf]
  %v3792 = vld [vmem:[%s0 + $0x320] sm:$0xf]
  %v3793 = vld [vmem:[%s0 + $0x324] sm:$0xf]
  %v3794 = vld [vmem:[%s0 + $0x328] sm:$0xf]
  %v3795 = vld [vmem:[%s0 + $0x32c] sm:$0xf]
  %v3796 = vld [vmem:[%s0 + $0x330] sm:$0xf]
  %v3797 = vld [vmem:[%s0 + $0x334] sm:$0xf]
  %v3798 = vld [vmem:[%s0 + $0x338] sm:$0xf]
  %v3799 = vld [vmem:[%s0 + $0x33c] sm:$0xf]
  %v3800 = vld [vmem:[%s0 + $0x340] sm:$0xf]
  %v3801 = vld [vmem:[%s0 + $0x344] sm:$0xf]
  %v3802 = vld [vmem:[%s0 + $0x348] sm:$0xf]
  %v3803 = vld [vmem:[%s0 + $0x34c] sm:$0xf]
  %v3804 = vld [vmem:[%s0 + $0x350] sm:$0xf]
  %v3805 = vld [vmem:[%s0 + $0x354] sm:$0xf]
  %v3806 = vld [vmem:[%s0 + $0x358] sm:$0xf]
  %v3807 = vld [vmem:[%s0 + $0x35c] sm:$0xf]
  %v3808 = vld [vmem:[%s0 + $0x360] sm:$0xf]
  %v3809 = vld [vmem:[%s0 + $0x364] sm:$0xf]
  %v3810 = vld [vmem:[%s0 + $0x368] sm:$0xf]
  %v3811 = vld [vmem:[%s0 + $0x36c] sm:$0xf]
  %v3812 = vld [vmem:[%s0 + $0x370] sm:$0xf]
  %v3813 = vld [vmem:[%s0 + $0x374] sm:$0xf]
  %v3814 = vld [vmem:[%s0 + $0x378] sm:$0xf]
  %v3815 = vld [vmem:[%s0 + $0x37c] sm:$0xf]
  %v3816 = vld [vmem:[%s1] sm:$0xf]
  %v3817 = vld [vmem:[%s1 + $0x4] sm:$0x1]
  %v3850 = vunpack.c.l.b16 %v3784
  %v3851 = vunpack.c.l.b16 %v3785
  %v3852 = vunpack.c.l.b16 %v3786
  %v3853 = vunpack.c.l.b16 %v3787
  %v3854 = vunpack.c.l.b16 %v3788
  %v3855 = vunpack.c.l.b16 %v3789
  %v3856 = vunpack.c.l.b16 %v3790
  %v3857 = vunpack.c.l.b16 %v3791
  %v3858 = vunpack.c.l.b16 %v3792
  %v3859 = vunpack.c.l.b16 %v3793
  %v3860 = vunpack.c.l.b16 %v3794
  %v3861 = vunpack.c.l.b16 %v3795
  %v3862 = vunpack.c.l.b16 %v3796
  %v3863 = vunpack.c.l.b16 %v3797
  %v3864 = vunpack.c.l.b16 %v3798
  %v3865 = vunpack.c.l.b16 %v3799
  %v3866 = vunpack.c.l.b16 %v3800
  %v3867 = vunpack.c.l.b16 %v3801
  %v3868 = vunpack.c.l.b16 %v3802
  %v3869 = vunpack.c.l.b16 %v3803
  %v3870 = vunpack.c.l.b16 %v3804
  %v3871 = vunpack.c.l.b16 %v3805
  %v3872 = vunpack.c.l.b16 %v3806
  %v3873 = vunpack.c.l.b16 %v3807
  %v3874 = vunpack.c.l.b16 %v3808
  %v3875 = vunpack.c.l.b16 %v3809
  %v3876 = vunpack.c.l.b16 %v3810
  %v3877 = vunpack.c.l.b16 %v3811
  %v3878 = vunpack.c.l.b16 %v3812
  %v3879 = vunpack.c.l.b16 %v3813
  %v3880 = vunpack.c.l.b16 %v3814
  %v3881 = vunpack.c.l.b16 %v3815
  %v3882 = vpack.c.b16 %v3851, %v3850
  %v3883 = vpack.c.b16 %v3853, %v3852
  %v3884 = vpack.c.b16 %v3855, %v3854
  %v3885 = vpack.c.b16 %v3857, %v3856
  %v3886 = vpack.c.b16 %v3859, %v3858
  %v3887 = vpack.c.b16 %v3861, %v3860
  %v3888 = vpack.c.b16 %v3863, %v3862
  %v3889 = vpack.c.b16 %v3865, %v3864
  %v3890 = vpack.c.b16 %v3867, %v3866
  %v3891 = vpack.c.b16 %v3869, %v3868
  %v3892 = vpack.c.b16 %v3871, %v3870
  %v3893 = vpack.c.b16 %v3873, %v3872
  %v3894 = vpack.c.b16 %v3875, %v3874
  %v3895 = vpack.c.b16 %v3877, %v3876
  %v3896 = vpack.c.b16 %v3879, %v3878
  %v3897 = vpack.c.b16 %v3881, %v3880
  %v3900 = vunpack.c.l.b16 %v3816
  %v3901 = vunpack.c.l.b16 %v3817
  %v3902 = vpack.c.b16 %v3901, %v3900
  %v3904 = vsel %vm140, %v3882, 0
  %v3907 = vsel %vm140, %v3883, 0
  %v3910 = vsel %vm140, %v3884, 0
  %v3913 = vsel %vm140, %v3885, 0
  %v3916 = vsel %vm140, %v3886, 0
  %v3919 = vsel %vm140, %v3887, 0
  %v3922 = vsel %vm140, %v3888, 0
  %v3925 = vsel %vm140, %v3889, 0
  %v3928 = vsel %vm140, %v3890, 0
  %v3931 = vsel %vm140, %v3891, 0
  %v3934 = vsel %vm140, %v3892, 0
  %v3937 = vsel %vm140, %v3893, 0
  %v3940 = vsel %vm140, %v3894, 0
  %v3943 = vsel %vm140, %v3895, 0
  %v3946 = vsel %vm140, %v3896, 0
  %v3949 = vsel %vm140, %v3897, 0
  %v3952 = vand.u32 %v3902, %v192
  %3954 = vmatprep.subr.bf16.mxu0 0
  %3955 = vmatpush1.bf16.msra.mxu0 0
  %3956 = vmatprep.subr.bf16.mxu0 0
  %3957 = vmatpush1.bf16.msra.mxu0 0
  %3958 = vmatprep.subr.bf16.mxu0 0
  %3959 = vmatpush1.bf16.msra.mxu0 0
  %3960 = vmatprep.subr.bf16.mxu0 0
  %3961 = vmatpush1.bf16.msra.mxu0 0
  %3962 = vmatprep.subr.bf16.mxu0 0
  %3963 = vmatpush1.bf16.msra.mxu0 0
  %3964 = vmatprep.subr.bf16.mxu0 0
  %3965 = vmatpush1.bf16.msra.mxu0 0
  %3966 = vmatprep.subr.bf16.mxu0 0
  %3967 = vmatpush1.bf16.msra.mxu0 0
  %3968 = vmatprep.subr.bf16.mxu0 0
  %3969 = vmatpush1.bf16.msra.mxu0 %v3952
  %3970 = vmatprep.subr.bf16.mxu0 0
  %3971 = vmatpush2.bf16.msra.mxu0 0
  %3972 = vmatprep.subr.bf16.mxu0 0
  %3973 = vmatpush2.bf16.msra.mxu0 0
  %3974 = vmatprep.subr.bf16.mxu0 0
  %3975 = vmatpush2.bf16.msra.mxu0 0
  %3976 = vmatprep.subr.bf16.mxu0 0
  %3977 = vmatpush2.bf16.msra.mxu0 0
  %3978 = vmatprep.subr.bf16.mxu0 0
  %3979 = vmatpush2.bf16.msra.mxu0 0
  %3980 = vmatprep.subr.bf16.mxu0 0
  %3981 = vmatpush2.bf16.msra.mxu0 0
  %3982 = vmatprep.subr.bf16.mxu0 0
  %3983 = vmatpush2.bf16.msra.mxu0 0
  %3984 = vmatprep.subr.bf16.mxu0 0
  %3985 = vmatpush2.bf16.msra.mxu0 0
  %3986 = vmatprep.mubr.bf16.mxu0 0
  %3987 = vmatmul.mubr.bf16.gmra.mxu0 %v3904
  %v3988 = vpop.f32.mrf.mxu0
  %v3989 = vadd.f32 0.0, %v3988
  %v3990 = vpop.f32.mrf.mxu0
  %v3991 = vpop.f32.mrf.mxu0
  %v3992 = vadd.f32 0.0, %v3991
  %v3993 = vpop.f32.mrf.mxu0
  %3994 = vmatprep.mubr.bf16.mxu0 0
  %3995 = vmatmul.mubr.bf16.gmra.mxu0 %v3907
  %v3996 = vpop.f32.mrf.mxu0
  %v3997 = vadd.f32 0.0, %v3996
  %v3998 = vpop.f32.mrf.mxu0
  %v3999 = vpop.f32.mrf.mxu0
  %v4000 = vadd.f32 0.0, %v3999
  %v4001 = vpop.f32.mrf.mxu0
  %4002 = vmatprep.mubr.bf16.mxu0 0
  %4003 = vmatmul.mubr.bf16.gmra.mxu0 %v3910
  %v4004 = vpop.f32.mrf.mxu0
  %v4005 = vadd.f32 0.0, %v4004
  %v4006 = vpop.f32.mrf.mxu0
  %v4007 = vpop.f32.mrf.mxu0
  %v4008 = vadd.f32 0.0, %v4007
  %v4009 = vpop.f32.mrf.mxu0
  %4010 = vmatprep.mubr.bf16.mxu0 0
  %4011 = vmatmul.mubr.bf16.gmra.mxu0 %v3913
  %v4012 = vpop.f32.mrf.mxu0
  %v4013 = vadd.f32 0.0, %v4012
  %v4014 = vpop.f32.mrf.mxu0
  %v4015 = vpop.f32.mrf.mxu0
  %v4016 = vadd.f32 0.0, %v4015
  %v4017 = vpop.f32.mrf.mxu0
  %4018 = vmatprep.mubr.bf16.mxu0 0
  %4019 = vmatmul.mubr.bf16.gmra.mxu0 %v3916
  %v4020 = vpop.f32.mrf.mxu0
  %v4021 = vadd.f32 0.0, %v4020
  %v4022 = vpop.f32.mrf.mxu0
  %v4023 = vpop.f32.mrf.mxu0
  %v4024 = vadd.f32 0.0, %v4023
  %v4025 = vpop.f32.mrf.mxu0
  %4026 = vmatprep.mubr.bf16.mxu0 0
  %4027 = vmatmul.mubr.bf16.gmra.mxu0 %v3919
  %v4028 = vpop.f32.mrf.mxu0
  %v4029 = vadd.f32 0.0, %v4028
  %v4030 = vpop.f32.mrf.mxu0
  %v4031 = vpop.f32.mrf.mxu0
  %v4032 = vadd.f32 0.0, %v4031
  %v4033 = vpop.f32.mrf.mxu0
  %4034 = vmatprep.mubr.bf16.mxu0 0
  %4035 = vmatmul.mubr.bf16.gmra.mxu0 %v3922
  %v4036 = vpop.f32.mrf.mxu0
  %v4037 = vadd.f32 0.0, %v4036
  %v4038 = vpop.f32.mrf.mxu0
  %v4039 = vpop.f32.mrf.mxu0
  %v4040 = vadd.f32 0.0, %v4039
  %v4041 = vpop.f32.mrf.mxu0
  %4042 = vmatprep.mubr.bf16.mxu0 0
  %4043 = vmatmul.mubr.bf16.gmra.mxu0 %v3925
  %v4044 = vpop.f32.mrf.mxu0
  %v4045 = vadd.f32 0.0, %v4044
  %v4046 = vpop.f32.mrf.mxu0
  %v4047 = vpop.f32.mrf.mxu0
  %v4048 = vadd.f32 0.0, %v4047
  %v4049 = vpop.f32.mrf.mxu0
  %4050 = vmatprep.mubr.bf16.mxu0 0
  %4051 = vmatmul.mubr.bf16.gmra.mxu0 %v3928
  %v4052 = vpop.f32.mrf.mxu0
  %v4053 = vadd.f32 0.0, %v4052
  %v4054 = vpop.f32.mrf.mxu0
  %v4055 = vpop.f32.mrf.mxu0
  %v4056 = vadd.f32 0.0, %v4055
  %v4057 = vpop.f32.mrf.mxu0
  %4058 = vmatprep.mubr.bf16.mxu0 0
  %4059 = vmatmul.mubr.bf16.gmra.mxu0 %v3931
  %v4060 = vpop.f32.mrf.mxu0
  %v4061 = vadd.f32 0.0, %v4060
  %v4062 = vpop.f32.mrf.mxu0
  %v4063 = vpop.f32.mrf.mxu0
  %v4064 = vadd.f32 0.0, %v4063
  %v4065 = vpop.f32.mrf.mxu0
  %4066 = vmatprep.mubr.bf16.mxu0 0
  %4067 = vmatmul.mubr.bf16.gmra.mxu0 %v3934
  %v4068 = vpop.f32.mrf.mxu0
  %v4069 = vadd.f32 0.0, %v4068
  %v4070 = vpop.f32.mrf.mxu0
  %v4071 = vpop.f32.mrf.mxu0
  %v4072 = vadd.f32 0.0, %v4071
  %v4073 = vpop.f32.mrf.mxu0
  %4074 = vmatprep.mubr.bf16.mxu0 0
  %4075 = vmatmul.mubr.bf16.gmra.mxu0 %v3937
  %v4076 = vpop.f32.mrf.mxu0
  %v4077 = vadd.f32 0.0, %v4076
  %v4078 = vpop.f32.mrf.mxu0
  %v4079 = vpop.f32.mrf.mxu0
  %v4080 = vadd.f32 0.0, %v4079
  %v4081 = vpop.f32.mrf.mxu0
  %4082 = vmatprep.mubr.bf16.mxu0 0
  %4083 = vmatmul.mubr.bf16.gmra.mxu0 %v3940
  %v4084 = vpop.f32.mrf.mxu0
  %v4085 = vadd.f32 0.0, %v4084
  %v4086 = vpop.f32.mrf.mxu0
  %v4087 = vpop.f32.mrf.mxu0
  %v4088 = vadd.f32 0.0, %v4087
  %v4089 = vpop.f32.mrf.mxu0
  %4090 = vmatprep.mubr.bf16.mxu0 0
  %4091 = vmatmul.mubr.bf16.gmra.mxu0 %v3943
  %v4092 = vpop.f32.mrf.mxu0
  %v4093 = vadd.f32 0.0, %v4092
  %v4094 = vpop.f32.mrf.mxu0
  %v4095 = vpop.f32.mrf.mxu0
  %v4096 = vadd.f32 0.0, %v4095
  %v4097 = vpop.f32.mrf.mxu0
  %4098 = vmatprep.mubr.bf16.mxu0 0
  %4099 = vmatmul.mubr.bf16.gmra.mxu0 %v3946
  %v4100 = vpop.f32.mrf.mxu0
  %v4101 = vadd.f32 0.0, %v4100
  %v4102 = vpop.f32.mrf.mxu0
  %v4103 = vpop.f32.mrf.mxu0
  %v4104 = vadd.f32 0.0, %v4103
  %v4105 = vpop.f32.mrf.mxu0
  %4106 = vmatprep.mubr.bf16.mxu0 0
  %4107 = vmatmul.mubr.bf16.gmra.mxu0 %v3949
  %v4108 = vpop.f32.mrf.mxu0
  %v4109 = vadd.f32 0.0, %v4108
  %v4110 = vpop.f32.mrf.mxu0
  %v4111 = vpop.f32.mrf.mxu0
  %v4112 = vadd.f32 0.0, %v4111
  %v4113 = vpop.f32.mrf.mxu0
  %4114 = vdwg.mxu0
  %v4115 = vxor.u32 %v3989, 2147483648
  %v4116 = vxor.u32 %v3992, 2147483648
  %v4117 = vxor.u32 %v3997, 2147483648
  %v4118 = vxor.u32 %v4000, 2147483648
  %v4119 = vxor.u32 %v4005, 2147483648
  %v4120 = vxor.u32 %v4008, 2147483648
  %v4121 = vxor.u32 %v4013, 2147483648
  %v4122 = vxor.u32 %v4016, 2147483648
  %v4123 = vxor.u32 %v4021, 2147483648
  %v4124 = vxor.u32 %v4024, 2147483648
  %v4125 = vxor.u32 %v4029, 2147483648
  %v4126 = vxor.u32 %v4032, 2147483648
  %v4127 = vxor.u32 %v4037, 2147483648
  %v4128 = vxor.u32 %v4040, 2147483648
  %v4129 = vxor.u32 %v4045, 2147483648
  %v4130 = vxor.u32 %v4048, 2147483648
  %v4131 = vxor.u32 %v4053, 2147483648
  %v4132 = vxor.u32 %v4056, 2147483648
  %v4133 = vxor.u32 %v4061, 2147483648
  %v4134 = vxor.u32 %v4064, 2147483648
  %v4135 = vxor.u32 %v4069, 2147483648
  %v4136 = vxor.u32 %v4072, 2147483648
  %v4137 = vxor.u32 %v4077, 2147483648
  %v4138 = vxor.u32 %v4080, 2147483648
  %v4139 = vxor.u32 %v4085, 2147483648
  %v4140 = vxor.u32 %v4088, 2147483648
  %v4141 = vxor.u32 %v4093, 2147483648
  %v4142 = vxor.u32 %v4096, 2147483648
  %v4143 = vxor.u32 %v4101, 2147483648
  %v4144 = vxor.u32 %v4104, 2147483648
  %v4145 = vxor.u32 %v4109, 2147483648
  %v4146 = vxor.u32 %v4112, 2147483648
  %v4147 = vmul.f32 %v4115, 1.442695
  %v4148 = vpow.pop %v4147
  %v4149 = vmul.f32 %v4116, 1.442695
  %v4150 = vpow.pop %v4149
  %v4151 = vmul.f32 %v4117, 1.442695
  %v4152 = vpow.pop %v4151
  %v4153 = vmul.f32 %v4118, 1.442695
  %v4154 = vpow.pop %v4153
  %v4155 = vmul.f32 %v4119, 1.442695
  %v4156 = vpow.pop %v4155
  %v4157 = vmul.f32 %v4120, 1.442695
  %v4158 = vpow.pop %v4157
  %v4159 = vmul.f32 %v4121, 1.442695
  %v4160 = vpow.pop %v4159
  %v4161 = vmul.f32 %v4122, 1.442695
  %v4162 = vpow.pop %v4161
  %v4163 = vmul.f32 %v4123, 1.442695
  %v4164 = vpow.pop %v4163
  %v4165 = vmul.f32 %v4124, 1.442695
  %v4166 = vpow.pop %v4165
  %v4167 = vmul.f32 %v4125, 1.442695
  %v4168 = vpow.pop %v4167
  %v4169 = vmul.f32 %v4126, 1.442695
  %v4170 = vpow.pop %v4169
  %v4171 = vmul.f32 %v4127, 1.442695
  %v4172 = vpow.pop %v4171
  %v4173 = vmul.f32 %v4128, 1.442695
  %v4174 = vpow.pop %v4173
  %v4175 = vmul.f32 %v4129, 1.442695
  %v4176 = vpow.pop %v4175
  %v4177 = vmul.f32 %v4130, 1.442695
  %v4178 = vpow.pop %v4177
  %v4179 = vmul.f32 %v4131, 1.442695
  %v4180 = vpow.pop %v4179
  %v4181 = vmul.f32 %v4132, 1.442695
  %v4182 = vpow.pop %v4181
  %v4183 = vmul.f32 %v4133, 1.442695
  %v4184 = vpow.pop %v4183
  %v4185 = vmul.f32 %v4134, 1.442695
  %v4186 = vpow.pop %v4185
  %v4187 = vmul.f32 %v4135, 1.442695
  %v4188 = vpow.pop %v4187
  %v4189 = vmul.f32 %v4136, 1.442695
  %v4190 = vpow.pop %v4189
  %v4191 = vmul.f32 %v4137, 1.442695
  %v4192 = vpow.pop %v4191
  %v4193 = vmul.f32 %v4138, 1.442695
  %v4194 = vpow.pop %v4193
  %v4195 = vmul.f32 %v4139, 1.442695
  %v4196 = vpow.pop %v4195
  %v4197 = vmul.f32 %v4140, 1.442695
  %v4198 = vpow.pop %v4197
  %v4199 = vmul.f32 %v4141, 1.442695
  %v4200 = vpow.pop %v4199
  %v4201 = vmul.f32 %v4142, 1.442695
  %v4202 = vpow.pop %v4201
  %v4203 = vmul.f32 %v4143, 1.442695
  %v4204 = vpow.pop %v4203
  %v4205 = vmul.f32 %v4144, 1.442695
  %v4206 = vpow.pop %v4205
  %v4207 = vmul.f32 %v4145, 1.442695
  %v4208 = vpow.pop %v4207
  %v4209 = vmul.f32 %v4146, 1.442695
  %v4210 = vpow.pop %v4209
  %v4211 = vadd.f32 %v4148, 1.0
  %v4212 = vadd.f32 %v4150, 1.0
  %v4213 = vadd.f32 %v4152, 1.0
  %v4214 = vadd.f32 %v4154, 1.0
  %v4215 = vadd.f32 %v4156, 1.0
  %v4216 = vadd.f32 %v4158, 1.0
  %v4217 = vadd.f32 %v4160, 1.0
  %v4218 = vadd.f32 %v4162, 1.0
  %v4219 = vadd.f32 %v4164, 1.0
  %v4220 = vadd.f32 %v4166, 1.0
  %v4221 = vadd.f32 %v4168, 1.0
  %v4222 = vadd.f32 %v4170, 1.0
  %v4223 = vadd.f32 %v4172, 1.0
  %v4224 = vadd.f32 %v4174, 1.0
  %v4225 = vadd.f32 %v4176, 1.0
  %v4226 = vadd.f32 %v4178, 1.0
  %v4227 = vadd.f32 %v4180, 1.0
  %v4228 = vadd.f32 %v4182, 1.0
  %v4229 = vadd.f32 %v4184, 1.0
  %v4230 = vadd.f32 %v4186, 1.0
  %v4231 = vadd.f32 %v4188, 1.0
  %v4232 = vadd.f32 %v4190, 1.0
  %v4233 = vadd.f32 %v4192, 1.0
  %v4234 = vadd.f32 %v4194, 1.0
  %v4235 = vadd.f32 %v4196, 1.0
  %v4236 = vadd.f32 %v4198, 1.0
  %v4237 = vadd.f32 %v4200, 1.0
  %v4238 = vadd.f32 %v4202, 1.0
  %v4239 = vadd.f32 %v4204, 1.0
  %v4240 = vadd.f32 %v4206, 1.0
  %v4241 = vadd.f32 %v4208, 1.0
  %v4242 = vadd.f32 %v4210, 1.0
  %v4243 = vrcp.pop %v4211
  %v4244 = vmul.f32 1.0, %v4243
  %v4245 = vrcp.pop %v4212
  %v4246 = vmul.f32 1.0, %v4245
  %v4247 = vrcp.pop %v4213
  %v4248 = vmul.f32 1.0, %v4247
  %v4249 = vrcp.pop %v4214
  %v4250 = vmul.f32 1.0, %v4249
  %v4251 = vrcp.pop %v4215
  %v4252 = vmul.f32 1.0, %v4251
  %v4253 = vrcp.pop %v4216
  %v4254 = vmul.f32 1.0, %v4253
  %v4255 = vrcp.pop %v4217
  %v4256 = vmul.f32 1.0, %v4255
  %v4257 = vrcp.pop %v4218
  %v4258 = vmul.f32 1.0, %v4257
  %v4259 = vrcp.pop %v4219
  %v4260 = vmul.f32 1.0, %v4259
  %v4261 = vrcp.pop %v4220
  %v4262 = vmul.f32 1.0, %v4261
  %v4263 = vrcp.pop %v4221
  %v4264 = vmul.f32 1.0, %v4263
  %v4265 = vrcp.pop %v4222
  %v4266 = vmul.f32 1.0, %v4265
  %v4267 = vrcp.pop %v4223
  %v4268 = vmul.f32 1.0, %v4267
  %v4269 = vrcp.pop %v4224
  %v4270 = vmul.f32 1.0, %v4269
  %v4271 = vrcp.pop %v4225
  %v4272 = vmul.f32 1.0, %v4271
  %v4273 = vrcp.pop %v4226
  %v4274 = vmul.f32 1.0, %v4273
  %v4275 = vrcp.pop %v4227
  %v4276 = vmul.f32 1.0, %v4275
  %v4277 = vrcp.pop %v4228
  %v4278 = vmul.f32 1.0, %v4277
  %v4279 = vrcp.pop %v4229
  %v4280 = vmul.f32 1.0, %v4279
  %v4281 = vrcp.pop %v4230
  %v4282 = vmul.f32 1.0, %v4281
  %v4283 = vrcp.pop %v4231
  %v4284 = vmul.f32 1.0, %v4283
  %v4285 = vrcp.pop %v4232
  %v4286 = vmul.f32 1.0, %v4285
  %v4287 = vrcp.pop %v4233
  %v4288 = vmul.f32 1.0, %v4287
  %v4289 = vrcp.pop %v4234
  %v4290 = vmul.f32 1.0, %v4289
  %v4291 = vrcp.pop %v4235
  %v4292 = vmul.f32 1.0, %v4291
  %v4293 = vrcp.pop %v4236
  %v4294 = vmul.f32 1.0, %v4293
  %v4295 = vrcp.pop %v4237
  %v4296 = vmul.f32 1.0, %v4295
  %v4297 = vrcp.pop %v4238
  %v4298 = vmul.f32 1.0, %v4297
  %v4299 = vrcp.pop %v4239
  %v4300 = vmul.f32 1.0, %v4299
  %v4301 = vrcp.pop %v4240
  %v4302 = vmul.f32 1.0, %v4301
  %v4303 = vrcp.pop %v4241
  %v4304 = vmul.f32 1.0, %v4303
  %v4305 = vrcp.pop %v4242
  %v4306 = vmul.f32 1.0, %v4305
  %v4307 = vmul.f32 %v3989, %v4244
  %v4308 = vmul.f32 %v3992, %v4246
  %v4309 = vmul.f32 %v3997, %v4248
  %v4310 = vmul.f32 %v4000, %v4250
  %v4311 = vmul.f32 %v4005, %v4252
  %v4312 = vmul.f32 %v4008, %v4254
  %v4313 = vmul.f32 %v4013, %v4256
  %v4314 = vmul.f32 %v4016, %v4258
  %v4315 = vmul.f32 %v4021, %v4260
  %v4316 = vmul.f32 %v4024, %v4262
  %v4317 = vmul.f32 %v4029, %v4264
  %v4318 = vmul.f32 %v4032, %v4266
  %v4319 = vmul.f32 %v4037, %v4268
  %v4320 = vmul.f32 %v4040, %v4270
  %v4321 = vmul.f32 %v4045, %v4272
  %v4322 = vmul.f32 %v4048, %v4274
  %v4323 = vmul.f32 %v4053, %v4276
  %v4324 = vmul.f32 %v4056, %v4278
  %v4325 = vmul.f32 %v4061, %v4280
  %v4326 = vmul.f32 %v4064, %v4282
  %v4327 = vmul.f32 %v4069, %v4284
  %v4328 = vmul.f32 %v4072, %v4286
  %v4329 = vmul.f32 %v4077, %v4288
  %v4330 = vmul.f32 %v4080, %v4290
  %v4331 = vmul.f32 %v4085, %v4292
  %v4332 = vmul.f32 %v4088, %v4294
  %v4333 = vmul.f32 %v4093, %v4296
  %v4334 = vmul.f32 %v4096, %v4298
  %v4335 = vmul.f32 %v4101, %v4300
  %v4336 = vmul.f32 %v4104, %v4302
  %v4337 = vmul.f32 %v4109, %v4304
  %v4338 = vmul.f32 %v4112, %v4306
  %v4339 = vsel %vm581, %v4307, 0.0
  %v4340 = vsel %vm581, %v4308, 0.0
  %v4341 = vadd.f32 %v4339, %v4340
  %v4342 = vsel %vm581, %v4309, 0.0
  %v4343 = vadd.f32 %v4341, %v4342
  %v4344 = vsel %vm581, %v4310, 0.0
  %v4345 = vadd.f32 %v4343, %v4344
  %v4346 = vsel %vm581, %v4311, 0.0
  %v4347 = vadd.f32 %v4345, %v4346
  %v4348 = vsel %vm581, %v4312, 0.0
  %v4349 = vadd.f32 %v4347, %v4348
  %v4350 = vsel %vm581, %v4313, 0.0
  %v4351 = vadd.f32 %v4349, %v4350
  %v4352 = vsel %vm581, %v4314, 0.0
  %v4353 = vadd.f32 %v4351, %v4352
  %v4354 = vsel %vm581, %v4315, 0.0
  %v4355 = vadd.f32 %v4353, %v4354
  %v4356 = vsel %vm581, %v4316, 0.0
  %v4357 = vadd.f32 %v4355, %v4356
  %v4358 = vsel %vm581, %v4317, 0.0
  %v4359 = vadd.f32 %v4357, %v4358
  %v4360 = vsel %vm581, %v4318, 0.0
  %v4361 = vadd.f32 %v4359, %v4360
  %v4362 = vsel %vm581, %v4319, 0.0
  %v4363 = vadd.f32 %v4361, %v4362
  %v4364 = vsel %vm581, %v4320, 0.0
  %v4365 = vadd.f32 %v4363, %v4364
  %v4366 = vsel %vm581, %v4321, 0.0
  %v4367 = vadd.f32 %v4365, %v4366
  %v4368 = vsel %vm581, %v4322, 0.0
  %v4369 = vadd.f32 %v4367, %v4368
  %v4370 = vsel %vm581, %v4323, 0.0
  %v4371 = vadd.f32 %v4369, %v4370
  %v4372 = vsel %vm581, %v4324, 0.0
  %v4373 = vadd.f32 %v4371, %v4372
  %v4374 = vsel %vm581, %v4325, 0.0
  %v4375 = vadd.f32 %v4373, %v4374
  %v4376 = vsel %vm581, %v4326, 0.0
  %v4377 = vadd.f32 %v4375, %v4376
  %v4378 = vsel %vm581, %v4327, 0.0
  %v4379 = vadd.f32 %v4377, %v4378
  %v4380 = vsel %vm581, %v4328, 0.0
  %v4381 = vadd.f32 %v4379, %v4380
  %v4382 = vsel %vm581, %v4329, 0.0
  %v4383 = vadd.f32 %v4381, %v4382
  %v4384 = vsel %vm581, %v4330, 0.0
  %v4385 = vadd.f32 %v4383, %v4384
  %v4386 = vsel %vm581, %v4331, 0.0
  %v4387 = vadd.f32 %v4385, %v4386
  %v4388 = vsel %vm581, %v4332, 0.0
  %v4389 = vadd.f32 %v4387, %v4388
  %v4390 = vsel %vm581, %v4333, 0.0
  %v4391 = vadd.f32 %v4389, %v4390
  %v4392 = vsel %vm581, %v4334, 0.0
  %v4393 = vadd.f32 %v4391, %v4392
  %v4394 = vsel %vm581, %v4335, 0.0
  %v4395 = vadd.f32 %v4393, %v4394
  %v4396 = vsel %vm581, %v4336, 0.0
  %v4397 = vadd.f32 %v4395, %v4396
  %v4398 = vsel %vm581, %v4337, 0.0
  %v4399 = vadd.f32 %v4397, %v4398
  %v4400 = vsel %vm581, %v4338, 0.0
  %v4401 = vadd.f32 %v4399, %v4400
  %v4402 = vrot.slane %v4401, 4
  %v4403 = vadd.f32 %v4401, %v4402
  %v4404 = vrot.slane %v4403, 2
  %v4405 = vadd.f32 %v4403, %v4404
  %v4406 = vrot.slane %v4405, 1
  %v4407 = vadd.f32 %v4405, %v4406
  %v4408 = vmul.f32 %v4407, 0.00390625
  %4409 = vst.msk [vmem:[#allocation2 + $0x6] sm:$0x1] %vm652, %v4408
  %v4410 = vld [vmem:[%s0 + $0x380] sm:$0xf]
  %v4411 = vld [vmem:[%s0 + $0x384] sm:$0xf]
  %v4412 = vld [vmem:[%s0 + $0x388] sm:$0xf]
  %v4413 = vld [vmem:[%s0 + $0x38c] sm:$0xf]
  %v4414 = vld [vmem:[%s0 + $0x390] sm:$0xf]
  %v4415 = vld [vmem:[%s0 + $0x394] sm:$0xf]
  %v4416 = vld [vmem:[%s0 + $0x398] sm:$0xf]
  %v4417 = vld [vmem:[%s0 + $0x39c] sm:$0xf]
  %v4418 = vld [vmem:[%s0 + $0x3a0] sm:$0xf]
  %v4419 = vld [vmem:[%s0 + $0x3a4] sm:$0xf]
  %v4420 = vld [vmem:[%s0 + $0x3a8] sm:$0xf]
  %v4421 = vld [vmem:[%s0 + $0x3ac] sm:$0xf]
  %v4422 = vld [vmem:[%s0 + $0x3b0] sm:$0xf]
  %v4423 = vld [vmem:[%s0 + $0x3b4] sm:$0xf]
  %v4424 = vld [vmem:[%s0 + $0x3b8] sm:$0xf]
  %v4425 = vld [vmem:[%s0 + $0x3bc] sm:$0xf]
  %v4426 = vld [vmem:[%s0 + $0x3c0] sm:$0xf]
  %v4427 = vld [vmem:[%s0 + $0x3c4] sm:$0xf]
  %v4428 = vld [vmem:[%s0 + $0x3c8] sm:$0xf]
  %v4429 = vld [vmem:[%s0 + $0x3cc] sm:$0xf]
  %v4430 = vld [vmem:[%s0 + $0x3d0] sm:$0xf]
  %v4431 = vld [vmem:[%s0 + $0x3d4] sm:$0xf]
  %v4432 = vld [vmem:[%s0 + $0x3d8] sm:$0xf]
  %v4433 = vld [vmem:[%s0 + $0x3dc] sm:$0xf]
  %v4434 = vld [vmem:[%s0 + $0x3e0] sm:$0xf]
  %v4435 = vld [vmem:[%s0 + $0x3e4] sm:$0xf]
  %v4436 = vld [vmem:[%s0 + $0x3e8] sm:$0xf]
  %v4437 = vld [vmem:[%s0 + $0x3ec] sm:$0xf]
  %v4438 = vld [vmem:[%s0 + $0x3f0] sm:$0xf]
  %v4439 = vld [vmem:[%s0 + $0x3f4] sm:$0xf]
  %v4440 = vld [vmem:[%s0 + $0x3f8] sm:$0xf]
  %v4441 = vld [vmem:[%s0 + $0x3fc] sm:$0xf]
  %v4442 = vld [vmem:[%s1] sm:$0xf]
  %v4443 = vld [vmem:[%s1 + $0x4] sm:$0x1]
  %v4476 = vunpack.c.l.b16 %v4410
  %v4477 = vunpack.c.l.b16 %v4411
  %v4478 = vunpack.c.l.b16 %v4412
  %v4479 = vunpack.c.l.b16 %v4413
  %v4480 = vunpack.c.l.b16 %v4414
  %v4481 = vunpack.c.l.b16 %v4415
  %v4482 = vunpack.c.l.b16 %v4416
  %v4483 = vunpack.c.l.b16 %v4417
  %v4484 = vunpack.c.l.b16 %v4418
  %v4485 = vunpack.c.l.b16 %v4419
  %v4486 = vunpack.c.l.b16 %v4420
  %v4487 = vunpack.c.l.b16 %v4421
  %v4488 = vunpack.c.l.b16 %v4422
  %v4489 = vunpack.c.l.b16 %v4423
  %v4490 = vunpack.c.l.b16 %v4424
  %v4491 = vunpack.c.l.b16 %v4425
  %v4492 = vunpack.c.l.b16 %v4426
  %v4493 = vunpack.c.l.b16 %v4427
  %v4494 = vunpack.c.l.b16 %v4428
  %v4495 = vunpack.c.l.b16 %v4429
  %v4496 = vunpack.c.l.b16 %v4430
  %v4497 = vunpack.c.l.b16 %v4431
  %v4498 = vunpack.c.l.b16 %v4432
  %v4499 = vunpack.c.l.b16 %v4433
  %v4500 = vunpack.c.l.b16 %v4434
  %v4501 = vunpack.c.l.b16 %v4435
  %v4502 = vunpack.c.l.b16 %v4436
  %v4503 = vunpack.c.l.b16 %v4437
  %v4504 = vunpack.c.l.b16 %v4438
  %v4505 = vunpack.c.l.b16 %v4439
  %v4506 = vunpack.c.l.b16 %v4440
  %v4507 = vunpack.c.l.b16 %v4441
  %v4508 = vpack.c.b16 %v4477, %v4476
  %v4509 = vpack.c.b16 %v4479, %v4478
  %v4510 = vpack.c.b16 %v4481, %v4480
  %v4511 = vpack.c.b16 %v4483, %v4482
  %v4512 = vpack.c.b16 %v4485, %v4484
  %v4513 = vpack.c.b16 %v4487, %v4486
  %v4514 = vpack.c.b16 %v4489, %v4488
  %v4515 = vpack.c.b16 %v4491, %v4490
  %v4516 = vpack.c.b16 %v4493, %v4492
  %v4517 = vpack.c.b16 %v4495, %v4494
  %v4518 = vpack.c.b16 %v4497, %v4496
  %v4519 = vpack.c.b16 %v4499, %v4498
  %v4520 = vpack.c.b16 %v4501, %v4500
  %v4521 = vpack.c.b16 %v4503, %v4502
  %v4522 = vpack.c.b16 %v4505, %v4504
  %v4523 = vpack.c.b16 %v4507, %v4506
  %v4526 = vunpack.c.l.b16 %v4442
  %v4527 = vunpack.c.l.b16 %v4443
  %v4528 = vpack.c.b16 %v4527, %v4526
  %v4530 = vsel %vm140, %v4508, 0
  %v4533 = vsel %vm140, %v4509, 0
  %v4536 = vsel %vm140, %v4510, 0
  %v4539 = vsel %vm140, %v4511, 0
  %v4542 = vsel %vm140, %v4512, 0
  %v4545 = vsel %vm140, %v4513, 0
  %v4548 = vsel %vm140, %v4514, 0
  %v4551 = vsel %vm140, %v4515, 0
  %v4554 = vsel %vm140, %v4516, 0
  %v4557 = vsel %vm140, %v4517, 0
  %v4560 = vsel %vm140, %v4518, 0
  %v4563 = vsel %vm140, %v4519, 0
  %v4566 = vsel %vm140, %v4520, 0
  %v4569 = vsel %vm140, %v4521, 0
  %v4572 = vsel %vm140, %v4522, 0
  %v4575 = vsel %vm140, %v4523, 0
  %v4578 = vand.u32 %v4528, %v192
  %4580 = vmatprep.subr.bf16.mxu0 0
  %4581 = vmatpush1.bf16.msra.mxu0 0
  %4582 = vmatprep.subr.bf16.mxu0 0
  %4583 = vmatpush1.bf16.msra.mxu0 0
  %4584 = vmatprep.subr.bf16.mxu0 0
  %4585 = vmatpush1.bf16.msra.mxu0 0
  %4586 = vmatprep.subr.bf16.mxu0 0
  %4587 = vmatpush1.bf16.msra.mxu0 0
  %4588 = vmatprep.subr.bf16.mxu0 0
  %4589 = vmatpush1.bf16.msra.mxu0 0
  %4590 = vmatprep.subr.bf16.mxu0 0
  %4591 = vmatpush1.bf16.msra.mxu0 0
  %4592 = vmatprep.subr.bf16.mxu0 0
  %4593 = vmatpush1.bf16.msra.mxu0 0
  %4594 = vmatprep.subr.bf16.mxu0 0
  %4595 = vmatpush1.bf16.msra.mxu0 %v4578
  %4596 = vmatprep.subr.bf16.mxu0 0
  %4597 = vmatpush2.bf16.msra.mxu0 0
  %4598 = vmatprep.subr.bf16.mxu0 0
  %4599 = vmatpush2.bf16.msra.mxu0 0
  %4600 = vmatprep.subr.bf16.mxu0 0
  %4601 = vmatpush2.bf16.msra.mxu0 0
  %4602 = vmatprep.subr.bf16.mxu0 0
  %4603 = vmatpush2.bf16.msra.mxu0 0
  %4604 = vmatprep.subr.bf16.mxu0 0
  %4605 = vmatpush2.bf16.msra.mxu0 0
  %4606 = vmatprep.subr.bf16.mxu0 0
  %4607 = vmatpush2.bf16.msra.mxu0 0
  %4608 = vmatprep.subr.bf16.mxu0 0
  %4609 = vmatpush2.bf16.msra.mxu0 0
  %4610 = vmatprep.subr.bf16.mxu0 0
  %4611 = vmatpush2.bf16.msra.mxu0 0
  %4612 = vmatprep.mubr.bf16.mxu0 0
  %4613 = vmatmul.mubr.bf16.gmra.mxu0 %v4530
  %v4614 = vpop.f32.mrf.mxu0
  %v4615 = vadd.f32 0.0, %v4614
  %v4616 = vpop.f32.mrf.mxu0
  %v4617 = vpop.f32.mrf.mxu0
  %v4618 = vadd.f32 0.0, %v4617
  %v4619 = vpop.f32.mrf.mxu0
  %4620 = vmatprep.mubr.bf16.mxu0 0
  %4621 = vmatmul.mubr.bf16.gmra.mxu0 %v4533
  %v4622 = vpop.f32.mrf.mxu0
  %v4623 = vadd.f32 0.0, %v4622
  %v4624 = vpop.f32.mrf.mxu0
  %v4625 = vpop.f32.mrf.mxu0
  %v4626 = vadd.f32 0.0, %v4625
  %v4627 = vpop.f32.mrf.mxu0
  %4628 = vmatprep.mubr.bf16.mxu0 0
  %4629 = vmatmul.mubr.bf16.gmra.mxu0 %v4536
  %v4630 = vpop.f32.mrf.mxu0
  %v4631 = vadd.f32 0.0, %v4630
  %v4632 = vpop.f32.mrf.mxu0
  %v4633 = vpop.f32.mrf.mxu0
  %v4634 = vadd.f32 0.0, %v4633
  %v4635 = vpop.f32.mrf.mxu0
  %4636 = vmatprep.mubr.bf16.mxu0 0
  %4637 = vmatmul.mubr.bf16.gmra.mxu0 %v4539
  %v4638 = vpop.f32.mrf.mxu0
  %v4639 = vadd.f32 0.0, %v4638
  %v4640 = vpop.f32.mrf.mxu0
  %v4641 = vpop.f32.mrf.mxu0
  %v4642 = vadd.f32 0.0, %v4641
  %v4643 = vpop.f32.mrf.mxu0
  %4644 = vmatprep.mubr.bf16.mxu0 0
  %4645 = vmatmul.mubr.bf16.gmra.mxu0 %v4542
  %v4646 = vpop.f32.mrf.mxu0
  %v4647 = vadd.f32 0.0, %v4646
  %v4648 = vpop.f32.mrf.mxu0
  %v4649 = vpop.f32.mrf.mxu0
  %v4650 = vadd.f32 0.0, %v4649
  %v4651 = vpop.f32.mrf.mxu0
  %4652 = vmatprep.mubr.bf16.mxu0 0
  %4653 = vmatmul.mubr.bf16.gmra.mxu0 %v4545
  %v4654 = vpop.f32.mrf.mxu0
  %v4655 = vadd.f32 0.0, %v4654
  %v4656 = vpop.f32.mrf.mxu0
  %v4657 = vpop.f32.mrf.mxu0
  %v4658 = vadd.f32 0.0, %v4657
  %v4659 = vpop.f32.mrf.mxu0
  %4660 = vmatprep.mubr.bf16.mxu0 0
  %4661 = vmatmul.mubr.bf16.gmra.mxu0 %v4548
  %v4662 = vpop.f32.mrf.mxu0
  %v4663 = vadd.f32 0.0, %v4662
  %v4664 = vpop.f32.mrf.mxu0
  %v4665 = vpop.f32.mrf.mxu0
  %v4666 = vadd.f32 0.0, %v4665
  %v4667 = vpop.f32.mrf.mxu0
  %4668 = vmatprep.mubr.bf16.mxu0 0
  %4669 = vmatmul.mubr.bf16.gmra.mxu0 %v4551
  %v4670 = vpop.f32.mrf.mxu0
  %v4671 = vadd.f32 0.0, %v4670
  %v4672 = vpop.f32.mrf.mxu0
  %v4673 = vpop.f32.mrf.mxu0
  %v4674 = vadd.f32 0.0, %v4673
  %v4675 = vpop.f32.mrf.mxu0
  %4676 = vmatprep.mubr.bf16.mxu0 0
  %4677 = vmatmul.mubr.bf16.gmra.mxu0 %v4554
  %v4678 = vpop.f32.mrf.mxu0
  %v4679 = vadd.f32 0.0, %v4678
  %v4680 = vpop.f32.mrf.mxu0
  %v4681 = vpop.f32.mrf.mxu0
  %v4682 = vadd.f32 0.0, %v4681
  %v4683 = vpop.f32.mrf.mxu0
  %4684 = vmatprep.mubr.bf16.mxu0 0
  %4685 = vmatmul.mubr.bf16.gmra.mxu0 %v4557
  %v4686 = vpop.f32.mrf.mxu0
  %v4687 = vadd.f32 0.0, %v4686
  %v4688 = vpop.f32.mrf.mxu0
  %v4689 = vpop.f32.mrf.mxu0
  %v4690 = vadd.f32 0.0, %v4689
  %v4691 = vpop.f32.mrf.mxu0
  %4692 = vmatprep.mubr.bf16.mxu0 0
  %4693 = vmatmul.mubr.bf16.gmra.mxu0 %v4560
  %v4694 = vpop.f32.mrf.mxu0
  %v4695 = vadd.f32 0.0, %v4694
  %v4696 = vpop.f32.mrf.mxu0
  %v4697 = vpop.f32.mrf.mxu0
  %v4698 = vadd.f32 0.0, %v4697
  %v4699 = vpop.f32.mrf.mxu0
  %4700 = vmatprep.mubr.bf16.mxu0 0
  %4701 = vmatmul.mubr.bf16.gmra.mxu0 %v4563
  %v4702 = vpop.f32.mrf.mxu0
  %v4703 = vadd.f32 0.0, %v4702
  %v4704 = vpop.f32.mrf.mxu0
  %v4705 = vpop.f32.mrf.mxu0
  %v4706 = vadd.f32 0.0, %v4705
  %v4707 = vpop.f32.mrf.mxu0
  %4708 = vmatprep.mubr.bf16.mxu0 0
  %4709 = vmatmul.mubr.bf16.gmra.mxu0 %v4566
  %v4710 = vpop.f32.mrf.mxu0
  %v4711 = vadd.f32 0.0, %v4710
  %v4712 = vpop.f32.mrf.mxu0
  %v4713 = vpop.f32.mrf.mxu0
  %v4714 = vadd.f32 0.0, %v4713
  %v4715 = vpop.f32.mrf.mxu0
  %4716 = vmatprep.mubr.bf16.mxu0 0
  %4717 = vmatmul.mubr.bf16.gmra.mxu0 %v4569
  %v4718 = vpop.f32.mrf.mxu0
  %v4719 = vadd.f32 0.0, %v4718
  %v4720 = vpop.f32.mrf.mxu0
  %v4721 = vpop.f32.mrf.mxu0
  %v4722 = vadd.f32 0.0, %v4721
  %v4723 = vpop.f32.mrf.mxu0
  %4724 = vmatprep.mubr.bf16.mxu0 0
  %4725 = vmatmul.mubr.bf16.gmra.mxu0 %v4572
  %v4726 = vpop.f32.mrf.mxu0
  %v4727 = vadd.f32 0.0, %v4726
  %v4728 = vpop.f32.mrf.mxu0
  %v4729 = vpop.f32.mrf.mxu0
  %v4730 = vadd.f32 0.0, %v4729
  %v4731 = vpop.f32.mrf.mxu0
  %4732 = vmatprep.mubr.bf16.mxu0 0
  %4733 = vmatmul.mubr.bf16.gmra.mxu0 %v4575
  %v4734 = vpop.f32.mrf.mxu0
  %v4735 = vadd.f32 0.0, %v4734
  %v4736 = vpop.f32.mrf.mxu0
  %v4737 = vpop.f32.mrf.mxu0
  %v4738 = vadd.f32 0.0, %v4737
  %v4739 = vpop.f32.mrf.mxu0
  %4740 = vdwg.mxu0
  %v4741 = vxor.u32 %v4615, 2147483648
  %v4742 = vxor.u32 %v4618, 2147483648
  %v4743 = vxor.u32 %v4623, 2147483648
  %v4744 = vxor.u32 %v4626, 2147483648
  %v4745 = vxor.u32 %v4631, 2147483648
  %v4746 = vxor.u32 %v4634, 2147483648
  %v4747 = vxor.u32 %v4639, 2147483648
  %v4748 = vxor.u32 %v4642, 2147483648
  %v4749 = vxor.u32 %v4647, 2147483648
  %v4750 = vxor.u32 %v4650, 2147483648
  %v4751 = vxor.u32 %v4655, 2147483648
  %v4752 = vxor.u32 %v4658, 2147483648
  %v4753 = vxor.u32 %v4663, 2147483648
  %v4754 = vxor.u32 %v4666, 2147483648
  %v4755 = vxor.u32 %v4671, 2147483648
  %v4756 = vxor.u32 %v4674, 2147483648
  %v4757 = vxor.u32 %v4679, 2147483648
  %v4758 = vxor.u32 %v4682, 2147483648
  %v4759 = vxor.u32 %v4687, 2147483648
  %v4760 = vxor.u32 %v4690, 2147483648
  %v4761 = vxor.u32 %v4695, 2147483648
  %v4762 = vxor.u32 %v4698, 2147483648
  %v4763 = vxor.u32 %v4703, 2147483648
  %v4764 = vxor.u32 %v4706, 2147483648
  %v4765 = vxor.u32 %v4711, 2147483648
  %v4766 = vxor.u32 %v4714, 2147483648
  %v4767 = vxor.u32 %v4719, 2147483648
  %v4768 = vxor.u32 %v4722, 2147483648
  %v4769 = vxor.u32 %v4727, 2147483648
  %v4770 = vxor.u32 %v4730, 2147483648
  %v4771 = vxor.u32 %v4735, 2147483648
  %v4772 = vxor.u32 %v4738, 2147483648
  %v4773 = vmul.f32 %v4741, 1.442695
  %v4774 = vpow.pop %v4773
  %v4775 = vmul.f32 %v4742, 1.442695
  %v4776 = vpow.pop %v4775
  %v4777 = vmul.f32 %v4743, 1.442695
  %v4778 = vpow.pop %v4777
  %v4779 = vmul.f32 %v4744, 1.442695
  %v4780 = vpow.pop %v4779
  %v4781 = vmul.f32 %v4745, 1.442695
  %v4782 = vpow.pop %v4781
  %v4783 = vmul.f32 %v4746, 1.442695
  %v4784 = vpow.pop %v4783
  %v4785 = vmul.f32 %v4747, 1.442695
  %v4786 = vpow.pop %v4785
  %v4787 = vmul.f32 %v4748, 1.442695
  %v4788 = vpow.pop %v4787
  %v4789 = vmul.f32 %v4749, 1.442695
  %v4790 = vpow.pop %v4789
  %v4791 = vmul.f32 %v4750, 1.442695
  %v4792 = vpow.pop %v4791
  %v4793 = vmul.f32 %v4751, 1.442695
  %v4794 = vpow.pop %v4793
  %v4795 = vmul.f32 %v4752, 1.442695
  %v4796 = vpow.pop %v4795
  %v4797 = vmul.f32 %v4753, 1.442695
  %v4798 = vpow.pop %v4797
  %v4799 = vmul.f32 %v4754, 1.442695
  %v4800 = vpow.pop %v4799
  %v4801 = vmul.f32 %v4755, 1.442695
  %v4802 = vpow.pop %v4801
  %v4803 = vmul.f32 %v4756, 1.442695
  %v4804 = vpow.pop %v4803
  %v4805 = vmul.f32 %v4757, 1.442695
  %v4806 = vpow.pop %v4805
  %v4807 = vmul.f32 %v4758, 1.442695
  %v4808 = vpow.pop %v4807
  %v4809 = vmul.f32 %v4759, 1.442695
  %v4810 = vpow.pop %v4809
  %v4811 = vmul.f32 %v4760, 1.442695
  %v4812 = vpow.pop %v4811
  %v4813 = vmul.f32 %v4761, 1.442695
  %v4814 = vpow.pop %v4813
  %v4815 = vmul.f32 %v4762, 1.442695
  %v4816 = vpow.pop %v4815
  %v4817 = vmul.f32 %v4763, 1.442695
  %v4818 = vpow.pop %v4817
  %v4819 = vmul.f32 %v4764, 1.442695
  %v4820 = vpow.pop %v4819
  %v4821 = vmul.f32 %v4765, 1.442695
  %v4822 = vpow.pop %v4821
  %v4823 = vmul.f32 %v4766, 1.442695
  %v4824 = vpow.pop %v4823
  %v4825 = vmul.f32 %v4767, 1.442695
  %v4826 = vpow.pop %v4825
  %v4827 = vmul.f32 %v4768, 1.442695
  %v4828 = vpow.pop %v4827
  %v4829 = vmul.f32 %v4769, 1.442695
  %v4830 = vpow.pop %v4829
  %v4831 = vmul.f32 %v4770, 1.442695
  %v4832 = vpow.pop %v4831
  %v4833 = vmul.f32 %v4771, 1.442695
  %v4834 = vpow.pop %v4833
  %v4835 = vmul.f32 %v4772, 1.442695
  %v4836 = vpow.pop %v4835
  %v4837 = vadd.f32 %v4774, 1.0
  %v4838 = vadd.f32 %v4776, 1.0
  %v4839 = vadd.f32 %v4778, 1.0
  %v4840 = vadd.f32 %v4780, 1.0
  %v4841 = vadd.f32 %v4782, 1.0
  %v4842 = vadd.f32 %v4784, 1.0
  %v4843 = vadd.f32 %v4786, 1.0
  %v4844 = vadd.f32 %v4788, 1.0
  %v4845 = vadd.f32 %v4790, 1.0
  %v4846 = vadd.f32 %v4792, 1.0
  %v4847 = vadd.f32 %v4794, 1.0
  %v4848 = vadd.f32 %v4796, 1.0
  %v4849 = vadd.f32 %v4798, 1.0
  %v4850 = vadd.f32 %v4800, 1.0
  %v4851 = vadd.f32 %v4802, 1.0
  %v4852 = vadd.f32 %v4804, 1.0
  %v4853 = vadd.f32 %v4806, 1.0
  %v4854 = vadd.f32 %v4808, 1.0
  %v4855 = vadd.f32 %v4810, 1.0
  %v4856 = vadd.f32 %v4812, 1.0
  %v4857 = vadd.f32 %v4814, 1.0
  %v4858 = vadd.f32 %v4816, 1.0
  %v4859 = vadd.f32 %v4818, 1.0
  %v4860 = vadd.f32 %v4820, 1.0
  %v4861 = vadd.f32 %v4822, 1.0
  %v4862 = vadd.f32 %v4824, 1.0
  %v4863 = vadd.f32 %v4826, 1.0
  %v4864 = vadd.f32 %v4828, 1.0
  %v4865 = vadd.f32 %v4830, 1.0
  %v4866 = vadd.f32 %v4832, 1.0
  %v4867 = vadd.f32 %v4834, 1.0
  %v4868 = vadd.f32 %v4836, 1.0
  %v4869 = vrcp.pop %v4837
  %v4870 = vmul.f32 1.0, %v4869
  %v4871 = vrcp.pop %v4838
  %v4872 = vmul.f32 1.0, %v4871
  %v4873 = vrcp.pop %v4839
  %v4874 = vmul.f32 1.0, %v4873
  %v4875 = vrcp.pop %v4840
  %v4876 = vmul.f32 1.0, %v4875
  %v4877 = vrcp.pop %v4841
  %v4878 = vmul.f32 1.0, %v4877
  %v4879 = vrcp.pop %v4842
  %v4880 = vmul.f32 1.0, %v4879
  %v4881 = vrcp.pop %v4843
  %v4882 = vmul.f32 1.0, %v4881
  %v4883 = vrcp.pop %v4844
  %v4884 = vmul.f32 1.0, %v4883
  %v4885 = vrcp.pop %v4845
  %v4886 = vmul.f32 1.0, %v4885
  %v4887 = vrcp.pop %v4846
  %v4888 = vmul.f32 1.0, %v4887
  %v4889 = vrcp.pop %v4847
  %v4890 = vmul.f32 1.0, %v4889
  %v4891 = vrcp.pop %v4848
  %v4892 = vmul.f32 1.0, %v4891
  %v4893 = vrcp.pop %v4849
  %v4894 = vmul.f32 1.0, %v4893
  %v4895 = vrcp.pop %v4850
  %v4896 = vmul.f32 1.0, %v4895
  %v4897 = vrcp.pop %v4851
  %v4898 = vmul.f32 1.0, %v4897
  %v4899 = vrcp.pop %v4852
  %v4900 = vmul.f32 1.0, %v4899
  %v4901 = vrcp.pop %v4853
  %v4902 = vmul.f32 1.0, %v4901
  %v4903 = vrcp.pop %v4854
  %v4904 = vmul.f32 1.0, %v4903
  %v4905 = vrcp.pop %v4855
  %v4906 = vmul.f32 1.0, %v4905
  %v4907 = vrcp.pop %v4856
  %v4908 = vmul.f32 1.0, %v4907
  %v4909 = vrcp.pop %v4857
  %v4910 = vmul.f32 1.0, %v4909
  %v4911 = vrcp.pop %v4858
  %v4912 = vmul.f32 1.0, %v4911
  %v4913 = vrcp.pop %v4859
  %v4914 = vmul.f32 1.0, %v4913
  %v4915 = vrcp.pop %v4860
  %v4916 = vmul.f32 1.0, %v4915
  %v4917 = vrcp.pop %v4861
  %v4918 = vmul.f32 1.0, %v4917
  %v4919 = vrcp.pop %v4862
  %v4920 = vmul.f32 1.0, %v4919
  %v4921 = vrcp.pop %v4863
  %v4922 = vmul.f32 1.0, %v4921
  %v4923 = vrcp.pop %v4864
  %v4924 = vmul.f32 1.0, %v4923
  %v4925 = vrcp.pop %v4865
  %v4926 = vmul.f32 1.0, %v4925
  %v4927 = vrcp.pop %v4866
  %v4928 = vmul.f32 1.0, %v4927
  %v4929 = vrcp.pop %v4867
  %v4930 = vmul.f32 1.0, %v4929
  %v4931 = vrcp.pop %v4868
  %v4932 = vmul.f32 1.0, %v4931
  %v4933 = vmul.f32 %v4615, %v4870
  %v4934 = vmul.f32 %v4618, %v4872
  %v4935 = vmul.f32 %v4623, %v4874
  %v4936 = vmul.f32 %v4626, %v4876
  %v4937 = vmul.f32 %v4631, %v4878
  %v4938 = vmul.f32 %v4634, %v4880
  %v4939 = vmul.f32 %v4639, %v4882
  %v4940 = vmul.f32 %v4642, %v4884
  %v4941 = vmul.f32 %v4647, %v4886
  %v4942 = vmul.f32 %v4650, %v4888
  %v4943 = vmul.f32 %v4655, %v4890
  %v4944 = vmul.f32 %v4658, %v4892
  %v4945 = vmul.f32 %v4663, %v4894
  %v4946 = vmul.f32 %v4666, %v4896
  %v4947 = vmul.f32 %v4671, %v4898
  %v4948 = vmul.f32 %v4674, %v4900
  %v4949 = vmul.f32 %v4679, %v4902
  %v4950 = vmul.f32 %v4682, %v4904
  %v4951 = vmul.f32 %v4687, %v4906
  %v4952 = vmul.f32 %v4690, %v4908
  %v4953 = vmul.f32 %v4695, %v4910
  %v4954 = vmul.f32 %v4698, %v4912
  %v4955 = vmul.f32 %v4703, %v4914
  %v4956 = vmul.f32 %v4706, %v4916
  %v4957 = vmul.f32 %v4711, %v4918
  %v4958 = vmul.f32 %v4714, %v4920
  %v4959 = vmul.f32 %v4719, %v4922
  %v4960 = vmul.f32 %v4722, %v4924
  %v4961 = vmul.f32 %v4727, %v4926
  %v4962 = vmul.f32 %v4730, %v4928
  %v4963 = vmul.f32 %v4735, %v4930
  %v4964 = vmul.f32 %v4738, %v4932
  %v4965 = vsel %vm581, %v4933, 0.0
  %v4966 = vsel %vm581, %v4934, 0.0
  %v4967 = vadd.f32 %v4965, %v4966
  %v4968 = vsel %vm581, %v4935, 0.0
  %v4969 = vadd.f32 %v4967, %v4968
  %v4970 = vsel %vm581, %v4936, 0.0
  %v4971 = vadd.f32 %v4969, %v4970
  %v4972 = vsel %vm581, %v4937, 0.0
  %v4973 = vadd.f32 %v4971, %v4972
  %v4974 = vsel %vm581, %v4938, 0.0
  %v4975 = vadd.f32 %v4973, %v4974
  %v4976 = vsel %vm581, %v4939, 0.0
  %v4977 = vadd.f32 %v4975, %v4976
  %v4978 = vsel %vm581, %v4940, 0.0
  %v4979 = vadd.f32 %v4977, %v4978
  %v4980 = vsel %vm581, %v4941, 0.0
  %v4981 = vadd.f32 %v4979, %v4980
  %v4982 = vsel %vm581, %v4942, 0.0
  %v4983 = vadd.f32 %v4981, %v4982
  %v4984 = vsel %vm581, %v4943, 0.0
  %v4985 = vadd.f32 %v4983, %v4984
  %v4986 = vsel %vm581, %v4944, 0.0
  %v4987 = vadd.f32 %v4985, %v4986
  %v4988 = vsel %vm581, %v4945, 0.0
  %v4989 = vadd.f32 %v4987, %v4988
  %v4990 = vsel %vm581, %v4946, 0.0
  %v4991 = vadd.f32 %v4989, %v4990
  %v4992 = vsel %vm581, %v4947, 0.0
  %v4993 = vadd.f32 %v4991, %v4992
  %v4994 = vsel %vm581, %v4948, 0.0
  %v4995 = vadd.f32 %v4993, %v4994
  %v4996 = vsel %vm581, %v4949, 0.0
  %v4997 = vadd.f32 %v4995, %v4996
  %v4998 = vsel %vm581, %v4950, 0.0
  %v4999 = vadd.f32 %v4997, %v4998
  %v5000 = vsel %vm581, %v4951, 0.0
  %v5001 = vadd.f32 %v4999, %v5000
  %v5002 = vsel %vm581, %v4952, 0.0
  %v5003 = vadd.f32 %v5001, %v5002
  %v5004 = vsel %vm581, %v4953, 0.0
  %v5005 = vadd.f32 %v5003, %v5004
  %v5006 = vsel %vm581, %v4954, 0.0
  %v5007 = vadd.f32 %v5005, %v5006
  %v5008 = vsel %vm581, %v4955, 0.0
  %v5009 = vadd.f32 %v5007, %v5008
  %v5010 = vsel %vm581, %v4956, 0.0
  %v5011 = vadd.f32 %v5009, %v5010
  %v5012 = vsel %vm581, %v4957, 0.0
  %v5013 = vadd.f32 %v5011, %v5012
  %v5014 = vsel %vm581, %v4958, 0.0
  %v5015 = vadd.f32 %v5013, %v5014
  %v5016 = vsel %vm581, %v4959, 0.0
  %v5017 = vadd.f32 %v5015, %v5016
  %v5018 = vsel %vm581, %v4960, 0.0
  %v5019 = vadd.f32 %v5017, %v5018
  %v5020 = vsel %vm581, %v4961, 0.0
  %v5021 = vadd.f32 %v5019, %v5020
  %v5022 = vsel %vm581, %v4962, 0.0
  %v5023 = vadd.f32 %v5021, %v5022
  %v5024 = vsel %vm581, %v4963, 0.0
  %v5025 = vadd.f32 %v5023, %v5024
  %v5026 = vsel %vm581, %v4964, 0.0
  %v5027 = vadd.f32 %v5025, %v5026
  %v5028 = vrot.slane %v5027, 4
  %v5029 = vadd.f32 %v5027, %v5028
  %v5030 = vrot.slane %v5029, 2
  %v5031 = vadd.f32 %v5029, %v5030
  %v5032 = vrot.slane %v5031, 1
  %v5033 = vadd.f32 %v5031, %v5032
  %v5034 = vmul.f32 %v5033, 0.00390625
  %5035 = vst.msk [vmem:[#allocation2 + $0x7] sm:$0x1] %vm652, %v5034
  %v5036 = vld [vmem:[#allocation2] sm:$0xff]
  %v5037 = vpack.c.bf16 %v5036, %v5036
  %v5038 = vld [vmem:[%s2] sm:$0xff]
  %v5039 = vld [vmem:[%s2 + $0x8] sm:$0xff]
  %v5040 = vld [vmem:[%s2 + $0x10] sm:$0xff]
  %v5041 = vld [vmem:[%s2 + $0x18] sm:$0xff]
  %v5042 = vld [vmem:[%s2 + $0x20] sm:$0xff]
  %v5043 = vld [vmem:[%s2 + $0x28] sm:$0xff]
  %v5044 = vld [vmem:[%s2 + $0x30] sm:$0xff]
  %v5045 = vld [vmem:[%s2 + $0x38] sm:$0xff]
  %v5046 = vld [vmem:[%s2 + $0x40] sm:$0xff]
  %v5047 = vld [vmem:[%s2 + $0x48] sm:$0xff]
  %v5048 = vld [vmem:[%s2 + $0x50] sm:$0xff]
  %v5049 = vld [vmem:[%s2 + $0x58] sm:$0xff]
  %v5050 = vld [vmem:[%s2 + $0x60] sm:$0xff]
  %v5051 = vld [vmem:[%s2 + $0x68] sm:$0xff]
  %v5052 = vld [vmem:[%s2 + $0x70] sm:$0xff]
  %v5053 = vld [vmem:[%s2 + $0x78] sm:$0xff]
  %v5054 = vld [vmem:[%s2 + $0x80] sm:$0xff]
  %v5055 = vld [vmem:[%s2 + $0x88] sm:$0xff]
  %v5056 = vld [vmem:[%s2 + $0x90] sm:$0xff]
  %v5057 = vld [vmem:[%s2 + $0x98] sm:$0xff]
  %v5078 = vunpack.c.l.b16 %v5038
  %v5079 = vunpack.c.h.b16 %v5038
  %v5080 = vunpack.c.l.b16 %v5039
  %v5081 = vunpack.c.h.b16 %v5039
  %v5082 = vunpack.c.l.b16 %v5040
  %v5083 = vunpack.c.h.b16 %v5040
  %v5084 = vunpack.c.l.b16 %v5041
  %v5085 = vunpack.c.h.b16 %v5041
  %v5086 = vunpack.c.l.b16 %v5042
  %v5087 = vunpack.c.h.b16 %v5042
  %v5088 = vunpack.c.l.b16 %v5043
  %v5089 = vunpack.c.h.b16 %v5043
  %v5090 = vunpack.c.l.b16 %v5044
  %v5091 = vunpack.c.h.b16 %v5044
  %v5092 = vunpack.c.l.b16 %v5045
  %v5093 = vunpack.c.h.b16 %v5045
  %v5094 = vunpack.c.l.b16 %v5046
  %v5095 = vunpack.c.h.b16 %v5046
  %v5096 = vunpack.c.l.b16 %v5047
  %v5097 = vunpack.c.h.b16 %v5047
  %v5098 = vunpack.c.l.b16 %v5048
  %v5099 = vunpack.c.h.b16 %v5048
  %v5100 = vunpack.c.l.b16 %v5049
  %v5101 = vunpack.c.h.b16 %v5049
  %v5102 = vunpack.c.l.b16 %v5050
  %v5103 = vunpack.c.h.b16 %v5050
  %v5104 = vunpack.c.l.b16 %v5051
  %v5105 = vunpack.c.h.b16 %v5051
  %v5106 = vunpack.c.l.b16 %v5052
  %v5107 = vunpack.c.h.b16 %v5052
  %v5108 = vunpack.c.l.b16 %v5053
  %v5109 = vunpack.c.h.b16 %v5053
  %v5110 = vunpack.c.l.b16 %v5054
  %v5111 = vunpack.c.h.b16 %v5054
  %v5112 = vunpack.c.l.b16 %v5055
  %v5113 = vunpack.c.h.b16 %v5055
  %v5114 = vunpack.c.l.b16 %v5056
  %v5115 = vunpack.c.h.b16 %v5056
  %v5116 = vunpack.c.l.b16 %v5057
  %v5117 = vunpack.c.h.b16 %v5057
  %v5118 = vpack.c.b16 %v5088, %v5078
  %v5119 = vpack.c.b16 %v5089, %v5079
  %v5120 = vpack.c.b16 %v5090, %v5080
  %v5121 = vpack.c.b16 %v5091, %v5081
  %v5122 = vpack.c.b16 %v5092, %v5082
  %v5123 = vpack.c.b16 %v5093, %v5083
  %v5124 = vpack.c.b16 %v5094, %v5084
  %v5125 = vpack.c.b16 %v5095, %v5085
  %v5126 = vpack.c.b16 %v5096, %v5086
  %v5127 = vpack.c.b16 %v5097, %v5087
  %v5128 = vpack.c.b16 %v5108, %v5098
  %v5129 = vpack.c.b16 %v5109, %v5099
  %v5130 = vpack.c.b16 %v5110, %v5100
  %v5131 = vpack.c.b16 %v5111, %v5101
  %v5132 = vpack.c.b16 %v5112, %v5102
  %v5133 = vpack.c.b16 %v5113, %v5103
  %v5134 = vpack.c.b16 %v5114, %v5104
  %v5135 = vpack.c.b16 %v5115, %v5105
  %v5136 = vpack.c.b16 %v5116, %v5106
  %v5137 = vpack.c.b16 %v5117, %v5107
  %v5159 = vsel %vm581, %v5037, 0
  %5161 = vmatprep.subr.bf16.mxu0 0
  %5162 = vmatpush1.bf16.msra.mxu0 0
  %5163 = vmatprep.subr.bf16.mxu0 0
  %5164 = vmatpush1.bf16.msra.mxu0 0
  %5165 = vmatprep.subr.bf16.mxu0 0
  %5166 = vmatpush1.bf16.msra.mxu0 0
  %5167 = vmatprep.subr.bf16.mxu0 0
  %5168 = vmatpush1.bf16.msra.mxu0 0
  %5169 = vmatprep.subr.bf16.mxu0 0
  %5170 = vmatpush1.bf16.msra.mxu0 0
  %5171 = vmatprep.subr.bf16.mxu0 0
  %5172 = vmatpush1.bf16.msra.mxu0 0
  %5173 = vmatprep.subr.bf16.mxu0 %v5129
  %5174 = vmatpush1.bf16.msra.mxu0 %v5128
  %5175 = vmatprep.subr.bf16.mxu0 %v5119
  %5176 = vmatpush1.bf16.msra.mxu0 %v5118
  %5177 = vmatprep.subr.bf16.mxu0 0
  %5178 = vmatpush2.bf16.msra.mxu0 0
  %5179 = vmatprep.subr.bf16.mxu0 0
  %5180 = vmatpush2.bf16.msra.mxu0 0
  %5181 = vmatprep.subr.bf16.mxu0 0
  %5182 = vmatpush2.bf16.msra.mxu0 0
  %5183 = vmatprep.subr.bf16.mxu0 0
  %5184 = vmatpush2.bf16.msra.mxu0 0
  %5185 = vmatprep.subr.bf16.mxu0 0
  %5186 = vmatpush2.bf16.msra.mxu0 0
  %5187 = vmatprep.subr.bf16.mxu0 0
  %5188 = vmatpush2.bf16.msra.mxu0 0
  %5189 = vmatprep.subr.bf16.mxu0 0
  %5190 = vmatpush2.bf16.msra.mxu0 0
  %5191 = vmatprep.subr.bf16.mxu0 0
  %5192 = vmatpush2.bf16.msra.mxu0 0
  %5193 = vmatprep.mubr.bf16.mxu0 0
  %5194 = vmatmul.mubr.bf16.gmra.mxu0 %v5159
  %v5195 = vpop.f32.mrf.mxu0
  %v5196 = vadd.f32 0.0, %v5195
  %v5197 = vpop.f32.mrf.mxu0
  %v5198 = vadd.f32 0.0, %v5197
  %v5199 = vpop.f32.mrf.mxu0
  %v5200 = vpop.f32.mrf.mxu0
  %5201 = vdwg.mxu0
  %5202 = vmatprep.subr.bf16.mxu0 0
  %5203 = vmatpush1.bf16.msra.mxu0 0
  %5204 = vmatprep.subr.bf16.mxu0 0
  %5205 = vmatpush1.bf16.msra.mxu0 0
  %5206 = vmatprep.subr.bf16.mxu0 0
  %5207 = vmatpush1.bf16.msra.mxu0 0
  %5208 = vmatprep.subr.bf16.mxu0 0
  %5209 = vmatpush1.bf16.msra.mxu0 0
  %5210 = vmatprep.subr.bf16.mxu0 0
  %5211 = vmatpush1.bf16.msra.mxu0 0
  %5212 = vmatprep.subr.bf16.mxu0 0
  %5213 = vmatpush1.bf16.msra.mxu0 0
  %5214 = vmatprep.subr.bf16.mxu0 %v5131
  %5215 = vmatpush1.bf16.msra.mxu0 %v5130
  %5216 = vmatprep.subr.bf16.mxu0 %v5121
  %5217 = vmatpush1.bf16.msra.mxu0 %v5120
  %5218 = vmatprep.subr.bf16.mxu0 0
  %5219 = vmatpush2.bf16.msra.mxu0 0
  %5220 = vmatprep.subr.bf16.mxu0 0
  %5221 = vmatpush2.bf16.msra.mxu0 0
  %5222 = vmatprep.subr.bf16.mxu0 0
  %5223 = vmatpush2.bf16.msra.mxu0 0
  %5224 = vmatprep.subr.bf16.mxu0 0
  %5225 = vmatpush2.bf16.msra.mxu0 0
  %5226 = vmatprep.subr.bf16.mxu0 0
  %5227 = vmatpush2.bf16.msra.mxu0 0
  %5228 = vmatprep.subr.bf16.mxu0 0
  %5229 = vmatpush2.bf16.msra.mxu0 0
  %5230 = vmatprep.subr.bf16.mxu0 0
  %5231 = vmatpush2.bf16.msra.mxu0 0
  %5232 = vmatprep.subr.bf16.mxu0 0
  %5233 = vmatpush2.bf16.msra.mxu0 0
  %5234 = vmatprep.mubr.bf16.mxu0 0
  %5235 = vmatmul.mubr.bf16.gmra.mxu0 %v5159
  %v5236 = vpop.f32.mrf.mxu0
  %v5237 = vadd.f32 0.0, %v5236
  %v5238 = vpop.f32.mrf.mxu0
  %v5239 = vadd.f32 0.0, %v5238
  %v5240 = vpop.f32.mrf.mxu0
  %v5241 = vpop.f32.mrf.mxu0
  %5242 = vdwg.mxu0
  %5243 = vmatprep.subr.bf16.mxu0 0
  %5244 = vmatpush1.bf16.msra.mxu0 0
  %5245 = vmatprep.subr.bf16.mxu0 0
  %5246 = vmatpush1.bf16.msra.mxu0 0
  %5247 = vmatprep.subr.bf16.mxu0 0
  %5248 = vmatpush1.bf16.msra.mxu0 0
  %5249 = vmatprep.subr.bf16.mxu0 0
  %5250 = vmatpush1.bf16.msra.mxu0 0
  %5251 = vmatprep.subr.bf16.mxu0 0
  %5252 = vmatpush1.bf16.msra.mxu0 0
  %5253 = vmatprep.subr.bf16.mxu0 0
  %5254 = vmatpush1.bf16.msra.mxu0 0
  %5255 = vmatprep.subr.bf16.mxu0 %v5133
  %5256 = vmatpush1.bf16.msra.mxu0 %v5132
  %5257 = vmatprep.subr.bf16.mxu0 %v5123
  %5258 = vmatpush1.bf16.msra.mxu0 %v5122
  %5259 = vmatprep.subr.bf16.mxu0 0
  %5260 = vmatpush2.bf16.msra.mxu0 0
  %5261 = vmatprep.subr.bf16.mxu0 0
  %5262 = vmatpush2.bf16.msra.mxu0 0
  %5263 = vmatprep.subr.bf16.mxu0 0
  %5264 = vmatpush2.bf16.msra.mxu0 0
  %5265 = vmatprep.subr.bf16.mxu0 0
  %5266 = vmatpush2.bf16.msra.mxu0 0
  %5267 = vmatprep.subr.bf16.mxu0 0
  %5268 = vmatpush2.bf16.msra.mxu0 0
  %5269 = vmatprep.subr.bf16.mxu0 0
  %5270 = vmatpush2.bf16.msra.mxu0 0
  %5271 = vmatprep.subr.bf16.mxu0 0
  %5272 = vmatpush2.bf16.msra.mxu0 0
  %5273 = vmatprep.subr.bf16.mxu0 0
  %5274 = vmatpush2.bf16.msra.mxu0 0
  %5275 = vmatprep.mubr.bf16.mxu0 0
  %5276 = vmatmul.mubr.bf16.gmra.mxu0 %v5159
  %v5277 = vpop.f32.mrf.mxu0
  %v5278 = vadd.f32 0.0, %v5277
  %v5279 = vpop.f32.mrf.mxu0
  %v5280 = vadd.f32 0.0, %v5279
  %v5281 = vpop.f32.mrf.mxu0
  %v5282 = vpop.f32.mrf.mxu0
  %5283 = vdwg.mxu0
  %5284 = vmatprep.subr.bf16.mxu0 0
  %5285 = vmatpush1.bf16.msra.mxu0 0
  %5286 = vmatprep.subr.bf16.mxu0 0
  %5287 = vmatpush1.bf16.msra.mxu0 0
  %5288 = vmatprep.subr.bf16.mxu0 0
  %5289 = vmatpush1.bf16.msra.mxu0 0
  %5290 = vmatprep.subr.bf16.mxu0 0
  %5291 = vmatpush1.bf16.msra.mxu0 0
  %5292 = vmatprep.subr.bf16.mxu0 0
  %5293 = vmatpush1.bf16.msra.mxu0 0
  %5294 = vmatprep.subr.bf16.mxu0 0
  %5295 = vmatpush1.bf16.msra.mxu0 0
  %5296 = vmatprep.subr.bf16.mxu0 %v5135
  %5297 = vmatpush1.bf16.msra.mxu0 %v5134
  %5298 = vmatprep.subr.bf16.mxu0 %v5125
  %5299 = vmatpush1.bf16.msra.mxu0 %v5124
  %5300 = vmatprep.subr.bf16.mxu0 0
  %5301 = vmatpush2.bf16.msra.mxu0 0
  %5302 = vmatprep.subr.bf16.mxu0 0
  %5303 = vmatpush2.bf16.msra.mxu0 0
  %5304 = vmatprep.subr.bf16.mxu0 0
  %5305 = vmatpush2.bf16.msra.mxu0 0
  %5306 = vmatprep.subr.bf16.mxu0 0
  %5307 = vmatpush2.bf16.msra.mxu0 0
  %5308 = vmatprep.subr.bf16.mxu0 0
  %5309 = vmatpush2.bf16.msra.mxu0 0
  %5310 = vmatprep.subr.bf16.mxu0 0
  %5311 = vmatpush2.bf16.msra.mxu0 0
  %5312 = vmatprep.subr.bf16.mxu0 0
  %5313 = vmatpush2.bf16.msra.mxu0 0
  %5314 = vmatprep.subr.bf16.mxu0 0
  %5315 = vmatpush2.bf16.msra.mxu0 0
  %5316 = vmatprep.mubr.bf16.mxu0 0
  %5317 = vmatmul.mubr.bf16.gmra.mxu0 %v5159
  %v5318 = vpop.f32.mrf.mxu0
  %v5319 = vadd.f32 0.0, %v5318
  %v5320 = vpop.f32.mrf.mxu0
  %v5321 = vadd.f32 0.0, %v5320
  %v5322 = vpop.f32.mrf.mxu0
  %v5323 = vpop.f32.mrf.mxu0
  %5324 = vdwg.mxu0
  %5325 = vmatprep.subr.bf16.mxu0 0
  %5326 = vmatpush1.bf16.msra.mxu0 0
  %5327 = vmatprep.subr.bf16.mxu0 0
  %5328 = vmatpush1.bf16.msra.mxu0 0
  %5329 = vmatprep.subr.bf16.mxu0 0
  %5330 = vmatpush1.bf16.msra.mxu0 0
  %5331 = vmatprep.subr.bf16.mxu0 0
  %5332 = vmatpush1.bf16.msra.mxu0 0
  %5333 = vmatprep.subr.bf16.mxu0 0
  %5334 = vmatpush1.bf16.msra.mxu0 0
  %5335 = vmatprep.subr.bf16.mxu0 0
  %5336 = vmatpush1.bf16.msra.mxu0 0
  %5337 = vmatprep.subr.bf16.mxu0 %v5137
  %5338 = vmatpush1.bf16.msra.mxu0 %v5136
  %5339 = vmatprep.subr.bf16.mxu0 %v5127
  %5340 = vmatpush1.bf16.msra.mxu0 %v5126
  %5341 = vmatprep.subr.bf16.mxu0 0
  %5342 = vmatpush2.bf16.msra.mxu0 0
  %5343 = vmatprep.subr.bf16.mxu0 0
  %5344 = vmatpush2.bf16.msra.mxu0 0
  %5345 = vmatprep.subr.bf16.mxu0 0
  %5346 = vmatpush2.bf16.msra.mxu0 0
  %5347 = vmatprep.subr.bf16.mxu0 0
  %5348 = vmatpush2.bf16.msra.mxu0 0
  %5349 = vmatprep.subr.bf16.mxu0 0
  %5350 = vmatpush2.bf16.msra.mxu0 0
  %5351 = vmatprep.subr.bf16.mxu0 0
  %5352 = vmatpush2.bf16.msra.mxu0 0
  %5353 = vmatprep.subr.bf16.mxu0 0
  %5354 = vmatpush2.bf16.msra.mxu0 0
  %5355 = vmatprep.subr.bf16.mxu0 0
  %5356 = vmatpush2.bf16.msra.mxu0 0
  %5357 = vmatprep.mubr.bf16.mxu0 0
  %5358 = vmatmul.mubr.bf16.gmra.mxu0 %v5159
  %v5359 = vpop.f32.mrf.mxu0
  %v5360 = vadd.f32 0.0, %v5359
  %v5361 = vpop.f32.mrf.mxu0
  %v5362 = vadd.f32 0.0, %v5361
  %v5363 = vpop.f32.mrf.mxu0
  %v5364 = vpop.f32.mrf.mxu0
  %5365 = vdwg.mxu0
  %v5366 = vxor.u32 %v5196, 2147483648
  %v5367 = vxor.u32 %v5198, 2147483648
  %v5368 = vxor.u32 %v5237, 2147483648
  %v5369 = vxor.u32 %v5239, 2147483648
  %v5370 = vxor.u32 %v5278, 2147483648
  %v5371 = vxor.u32 %v5280, 2147483648
  %v5372 = vxor.u32 %v5319, 2147483648
  %v5373 = vxor.u32 %v5321, 2147483648
  %v5374 = vxor.u32 %v5360, 2147483648
  %v5375 = vxor.u32 %v5362, 2147483648
  %v5376 = vmul.f32 %v5366, 1.442695
  %v5377 = vpow.pop %v5376
  %v5378 = vmul.f32 %v5367, 1.442695
  %v5379 = vpow.pop %v5378
  %v5380 = vmul.f32 %v5368, 1.442695
  %v5381 = vpow.pop %v5380
  %v5382 = vmul.f32 %v5369, 1.442695
  %v5383 = vpow.pop %v5382
  %v5384 = vmul.f32 %v5370, 1.442695
  %v5385 = vpow.pop %v5384
  %v5386 = vmul.f32 %v5371, 1.442695
  %v5387 = vpow.pop %v5386
  %v5388 = vmul.f32 %v5372, 1.442695
  %v5389 = vpow.pop %v5388
  %v5390 = vmul.f32 %v5373, 1.442695
  %v5391 = vpow.pop %v5390
  %v5392 = vmul.f32 %v5374, 1.442695
  %v5393 = vpow.pop %v5392
  %v5394 = vmul.f32 %v5375, 1.442695
  %v5395 = vpow.pop %v5394
  %v5396 = vadd.f32 %v5377, 1.0
  %v5397 = vadd.f32 %v5379, 1.0
  %v5398 = vadd.f32 %v5381, 1.0
  %v5399 = vadd.f32 %v5383, 1.0
  %v5400 = vadd.f32 %v5385, 1.0
  %v5401 = vadd.f32 %v5387, 1.0
  %v5402 = vadd.f32 %v5389, 1.0
  %v5403 = vadd.f32 %v5391, 1.0
  %v5404 = vadd.f32 %v5393, 1.0
  %v5405 = vadd.f32 %v5395, 1.0
  %v5406 = vrcp.pop %v5396
  %v5407 = vmul.f32 1.0, %v5406
  %v5408 = vrcp.pop %v5397
  %v5409 = vmul.f32 1.0, %v5408
  %v5410 = vrcp.pop %v5398
  %v5411 = vmul.f32 1.0, %v5410
  %v5412 = vrcp.pop %v5399
  %v5413 = vmul.f32 1.0, %v5412
  %v5414 = vrcp.pop %v5400
  %v5415 = vmul.f32 1.0, %v5414
  %v5416 = vrcp.pop %v5401
  %v5417 = vmul.f32 1.0, %v5416
  %v5418 = vrcp.pop %v5402
  %v5419 = vmul.f32 1.0, %v5418
  %v5420 = vrcp.pop %v5403
  %v5421 = vmul.f32 1.0, %v5420
  %v5422 = vrcp.pop %v5404
  %v5423 = vmul.f32 1.0, %v5422
  %v5424 = vrcp.pop %v5405
  %v5425 = vmul.f32 1.0, %v5424
  %v5426 = vmul.f32 %v5196, %v5407
  %v5427 = vmul.f32 %v5198, %v5409
  %v5428 = vmul.f32 %v5237, %v5411
  %v5429 = vmul.f32 %v5239, %v5413
  %v5430 = vmul.f32 %v5278, %v5415
  %v5431 = vmul.f32 %v5280, %v5417
  %v5432 = vmul.f32 %v5319, %v5419
  %v5433 = vmul.f32 %v5321, %v5421
  %v5434 = vmul.f32 %v5360, %v5423
  %v5435 = vmul.f32 %v5362, %v5425
  %v5436 = vpack.c.bf16 %v5426, %v5426
  %v5437 = vpack.c.bf16 %v5427, %v5427
  %v5438 = vpack.c.bf16 %v5428, %v5428
  %v5439 = vpack.c.bf16 %v5429, %v5429
  %v5440 = vpack.c.bf16 %v5430, %v5430
  %v5441 = vpack.c.bf16 %v5431, %v5431
  %v5442 = vpack.c.bf16 %v5432, %v5432
  %v5443 = vpack.c.bf16 %v5433, %v5433
  %v5444 = vpack.c.bf16 %v5434, %v5434
  %v5445 = vpack.c.bf16 %v5435, %v5435
  %v5446 = vld [vmem:[%s3] sm:$0xf]
  %v5447 = vld [vmem:[%s3 + $0x4] sm:$0xf]
  %v5448 = vld [vmem:[%s3 + $0x8] sm:$0xf]
  %v5449 = vld [vmem:[%s3 + $0xc] sm:$0xf]
  %v5450 = vld [vmem:[%s3 + $0x10] sm:$0xf]
  %v5451 = vld [vmem:[%s3 + $0x14] sm:$0xf]
  %v5452 = vld [vmem:[%s3 + $0x18] sm:$0xf]
  %v5453 = vld [vmem:[%s3 + $0x1c] sm:$0xf]
  %v5454 = vld [vmem:[%s3 + $0x20] sm:$0xf]
  %v5455 = vld [vmem:[%s3 + $0x24] sm:$0xf]
  %v5456 = vld [vmem:[%s3 + $0x28] sm:$0xf]
  %v5457 = vld [vmem:[%s3 + $0x2c] sm:$0xf]
  %v5458 = vld [vmem:[%s3 + $0x30] sm:$0xf]
  %v5459 = vld [vmem:[%s3 + $0x34] sm:$0xf]
  %v5460 = vld [vmem:[%s3 + $0x38] sm:$0xf]
  %v5461 = vld [vmem:[%s3 + $0x3c] sm:$0xf]
  %v5462 = vld [vmem:[%s3 + $0x40] sm:$0xf]
  %v5463 = vld [vmem:[%s3 + $0x44] sm:$0xf]
  %v5464 = vld [vmem:[%s3 + $0x48] sm:$0xf]
  %v5465 = vld [vmem:[%s3 + $0x4c] sm:$0xf]
  %v5466 = vld [vmem:[%s3 + $0x50] sm:$0xf]
  %v5467 = vld [vmem:[%s3 + $0x54] sm:$0xf]
  %v5468 = vld [vmem:[%s3 + $0x58] sm:$0xf]
  %v5469 = vld [vmem:[%s3 + $0x5c] sm:$0xf]
  %v5470 = vld [vmem:[%s3 + $0x60] sm:$0xf]
  %v5471 = vld [vmem:[%s3 + $0x64] sm:$0xf]
  %v5472 = vld [vmem:[%s3 + $0x68] sm:$0xf]
  %v5473 = vld [vmem:[%s3 + $0x6c] sm:$0xf]
  %v5474 = vld [vmem:[%s3 + $0x70] sm:$0xf]
  %v5475 = vld [vmem:[%s3 + $0x74] sm:$0xf]
  %v5476 = vld [vmem:[%s3 + $0x78] sm:$0xf]
  %v5477 = vld [vmem:[%s3 + $0x7c] sm:$0xf]
  %v5478 = vld [vmem:[%s3 + $0x80] sm:$0xf]
  %v5479 = vld [vmem:[%s3 + $0x84] sm:$0xf]
  %v5480 = vld [vmem:[%s3 + $0x88] sm:$0xf]
  %v5481 = vld [vmem:[%s3 + $0x8c] sm:$0xf]
  %v5482 = vld [vmem:[%s3 + $0x90] sm:$0xf]
  %v5483 = vld [vmem:[%s3 + $0x94] sm:$0xf]
  %v5484 = vld [vmem:[%s3 + $0x98] sm:$0xf]
  %v5485 = vld [vmem:[%s3 + $0x9c] sm:$0xf]
  %v5486 = vld [vmem:[%s3 + $0xa0] sm:$0xf]
  %v5487 = vld [vmem:[%s3 + $0xa4] sm:$0xf]
  %v5488 = vld [vmem:[%s3 + $0xa8] sm:$0xf]
  %v5489 = vld [vmem:[%s3 + $0xac] sm:$0xf]
  %v5490 = vld [vmem:[%s3 + $0xb0] sm:$0xf]
  %v5491 = vld [vmem:[%s3 + $0xb4] sm:$0xf]
  %v5492 = vld [vmem:[%s3 + $0xb8] sm:$0xf]
  %v5493 = vld [vmem:[%s3 + $0xbc] sm:$0xf]
  %v5494 = vld [vmem:[%s3 + $0xc0] sm:$0xf]
  %v5495 = vld [vmem:[%s3 + $0xc4] sm:$0xf]
  %v5496 = vld [vmem:[%s3 + $0xc8] sm:$0xf]
  %v5497 = vld [vmem:[%s3 + $0xcc] sm:$0xf]
  %v5498 = vld [vmem:[%s3 + $0xd0] sm:$0xf]
  %v5499 = vld [vmem:[%s3 + $0xd4] sm:$0xf]
  %v5500 = vld [vmem:[%s3 + $0xd8] sm:$0xf]
  %v5501 = vld [vmem:[%s3 + $0xdc] sm:$0xf]
  %v5502 = vld [vmem:[%s3 + $0xe0] sm:$0xf]
  %v5503 = vld [vmem:[%s3 + $0xe4] sm:$0xf]
  %v5504 = vld [vmem:[%s3 + $0xe8] sm:$0xf]
  %v5505 = vld [vmem:[%s3 + $0xec] sm:$0xf]
  %v5506 = vld [vmem:[%s3 + $0xf0] sm:$0xf]
  %v5507 = vld [vmem:[%s3 + $0xf4] sm:$0xf]
  %v5508 = vld [vmem:[%s3 + $0xf8] sm:$0xf]
  %v5509 = vld [vmem:[%s3 + $0xfc] sm:$0xf]
  %v5510 = vld [vmem:[%s3 + $0x100] sm:$0xf]
  %v5511 = vld [vmem:[%s3 + $0x104] sm:$0xf]
  %v5512 = vld [vmem:[%s3 + $0x108] sm:$0xf]
  %v5513 = vld [vmem:[%s3 + $0x10c] sm:$0xf]
  %v5514 = vld [vmem:[%s3 + $0x110] sm:$0xf]
  %v5515 = vld [vmem:[%s3 + $0x114] sm:$0xf]
  %v5516 = vld [vmem:[%s3 + $0x118] sm:$0xf]
  %v5517 = vld [vmem:[%s3 + $0x11c] sm:$0xf]
  %v5518 = vld [vmem:[%s3 + $0x120] sm:$0xf]
  %v5519 = vld [vmem:[%s3 + $0x124] sm:$0xf]
  %v5520 = vld [vmem:[%s3 + $0x128] sm:$0xf]
  %v5521 = vld [vmem:[%s3 + $0x12c] sm:$0xf]
  %v5522 = vld [vmem:[%s3 + $0x130] sm:$0xf]
  %v5523 = vld [vmem:[%s3 + $0x134] sm:$0xf]
  %v5524 = vld [vmem:[%s3 + $0x138] sm:$0xf]
  %v5525 = vld [vmem:[%s3 + $0x13c] sm:$0xf]
  %v5526 = vld [vmem:[%s3 + $0x140] sm:$0xf]
  %v5527 = vld [vmem:[%s3 + $0x144] sm:$0xf]
  %v5528 = vld [vmem:[%s3 + $0x148] sm:$0xf]
  %v5529 = vld [vmem:[%s3 + $0x14c] sm:$0xf]
  %v5530 = vld [vmem:[%s3 + $0x150] sm:$0xf]
  %v5531 = vld [vmem:[%s3 + $0x154] sm:$0xf]
  %v5532 = vld [vmem:[%s3 + $0x158] sm:$0xf]
  %v5533 = vld [vmem:[%s3 + $0x15c] sm:$0xf]
  %v5534 = vld [vmem:[%s3 + $0x160] sm:$0xf]
  %v5535 = vld [vmem:[%s3 + $0x164] sm:$0xf]
  %v5536 = vld [vmem:[%s3 + $0x168] sm:$0xf]
  %v5537 = vld [vmem:[%s3 + $0x16c] sm:$0xf]
  %v5538 = vld [vmem:[%s3 + $0x170] sm:$0xf]
  %v5539 = vld [vmem:[%s3 + $0x174] sm:$0xf]
  %v5540 = vld [vmem:[%s3 + $0x178] sm:$0xf]
  %v5541 = vld [vmem:[%s3 + $0x17c] sm:$0xf]
  %v5542 = vld [vmem:[%s3 + $0x180] sm:$0xf]
  %v5543 = vld [vmem:[%s3 + $0x184] sm:$0xf]
  %v5544 = vld [vmem:[%s3 + $0x188] sm:$0xf]
  %v5545 = vld [vmem:[%s3 + $0x18c] sm:$0xf]
  %v5546 = vld [vmem:[%s3 + $0x190] sm:$0xf]
  %v5547 = vld [vmem:[%s3 + $0x194] sm:$0xf]
  %v5548 = vld [vmem:[%s3 + $0x198] sm:$0xf]
  %v5549 = vld [vmem:[%s3 + $0x19c] sm:$0xf]
  %v5550 = vld [vmem:[%s3 + $0x1a0] sm:$0xf]
  %v5551 = vld [vmem:[%s3 + $0x1a4] sm:$0xf]
  %v5552 = vld [vmem:[%s3 + $0x1a8] sm:$0xf]
  %v5553 = vld [vmem:[%s3 + $0x1ac] sm:$0xf]
  %v5554 = vld [vmem:[%s3 + $0x1b0] sm:$0xf]
  %v5555 = vld [vmem:[%s3 + $0x1b4] sm:$0xf]
  %v5556 = vld [vmem:[%s3 + $0x1b8] sm:$0xf]
  %v5557 = vld [vmem:[%s3 + $0x1bc] sm:$0xf]
  %v5558 = vld [vmem:[%s3 + $0x1c0] sm:$0xf]
  %v5559 = vld [vmem:[%s3 + $0x1c4] sm:$0xf]
  %v5560 = vld [vmem:[%s3 + $0x1c8] sm:$0xf]
  %v5561 = vld [vmem:[%s3 + $0x1cc] sm:$0xf]
  %v5562 = vld [vmem:[%s3 + $0x1d0] sm:$0xf]
  %v5563 = vld [vmem:[%s3 + $0x1d4] sm:$0xf]
  %v5564 = vld [vmem:[%s3 + $0x1d8] sm:$0xf]
  %v5565 = vld [vmem:[%s3 + $0x1dc] sm:$0xf]
  %v5566 = vld [vmem:[%s3 + $0x1e0] sm:$0xf]
  %v5567 = vld [vmem:[%s3 + $0x1e4] sm:$0xf]
  %v5568 = vld [vmem:[%s3 + $0x1e8] sm:$0xf]
  %v5569 = vld [vmem:[%s3 + $0x1ec] sm:$0xf]
  %v5570 = vld [vmem:[%s3 + $0x1f0] sm:$0xf]
  %v5571 = vld [vmem:[%s3 + $0x1f4] sm:$0xf]
  %v5572 = vld [vmem:[%s3 + $0x1f8] sm:$0xf]
  %v5573 = vld [vmem:[%s3 + $0x1fc] sm:$0xf]
  %v5574 = vld [vmem:[%s3 + $0x200] sm:$0xf]
  %v5575 = vld [vmem:[%s3 + $0x204] sm:$0xf]
  %v5576 = vld [vmem:[%s3 + $0x208] sm:$0xf]
  %v5577 = vld [vmem:[%s3 + $0x20c] sm:$0xf]
  %v5578 = vld [vmem:[%s3 + $0x210] sm:$0xf]
  %v5579 = vld [vmem:[%s3 + $0x214] sm:$0xf]
  %v5580 = vld [vmem:[%s3 + $0x218] sm:$0xf]
  %v5581 = vld [vmem:[%s3 + $0x21c] sm:$0xf]
  %v5582 = vld [vmem:[%s3 + $0x220] sm:$0xf]
  %v5583 = vld [vmem:[%s3 + $0x224] sm:$0xf]
  %v5584 = vld [vmem:[%s3 + $0x228] sm:$0xf]
  %v5585 = vld [vmem:[%s3 + $0x22c] sm:$0xf]
  %v5586 = vld [vmem:[%s3 + $0x230] sm:$0xf]
  %v5587 = vld [vmem:[%s3 + $0x234] sm:$0xf]
  %v5588 = vld [vmem:[%s3 + $0x238] sm:$0xf]
  %v5589 = vld [vmem:[%s3 + $0x23c] sm:$0xf]
  %v5590 = vld [vmem:[%s3 + $0x240] sm:$0xf]
  %v5591 = vld [vmem:[%s3 + $0x244] sm:$0xf]
  %v5592 = vld [vmem:[%s3 + $0x248] sm:$0xf]
  %v5593 = vld [vmem:[%s3 + $0x24c] sm:$0xf]
  %v5594 = vld [vmem:[%s3 + $0x250] sm:$0xf]
  %v5595 = vld [vmem:[%s3 + $0x254] sm:$0xf]
  %v5596 = vld [vmem:[%s3 + $0x258] sm:$0xf]
  %v5597 = vld [vmem:[%s3 + $0x25c] sm:$0xf]
  %v5598 = vld [vmem:[%s3 + $0x260] sm:$0xf]
  %v5599 = vld [vmem:[%s3 + $0x264] sm:$0xf]
  %v5600 = vld [vmem:[%s3 + $0x268] sm:$0xf]
  %v5601 = vld [vmem:[%s3 + $0x26c] sm:$0xf]
  %v5602 = vld [vmem:[%s3 + $0x270] sm:$0xf]
  %v5603 = vld [vmem:[%s3 + $0x274] sm:$0xf]
  %v5604 = vld [vmem:[%s3 + $0x278] sm:$0xf]
  %v5605 = vld [vmem:[%s3 + $0x27c] sm:$0xf]
  %v5606 = vld [vmem:[%s4] sm:$0x1]
  %v5608 = vlaneseq
  %v5609 = vshrl.u32 %v5608, 7
  %v5610 = vsub.s32 0, %v5609
  %v5611 = vrot.slane %v5606, %v5610
  %v5773 = vunpack.c.l.b16 %v5446
  %v5774 = vunpack.c.l.b16 %v5447
  %v5775 = vunpack.c.l.b16 %v5448
  %v5776 = vunpack.c.l.b16 %v5449
  %v5777 = vunpack.c.l.b16 %v5450
  %v5778 = vunpack.c.l.b16 %v5451
  %v5779 = vunpack.c.l.b16 %v5452
  %v5780 = vunpack.c.l.b16 %v5453
  %v5781 = vunpack.c.l.b16 %v5454
  %v5782 = vunpack.c.l.b16 %v5455
  %v5783 = vunpack.c.l.b16 %v5456
  %v5784 = vunpack.c.l.b16 %v5457
  %v5785 = vunpack.c.l.b16 %v5458
  %v5786 = vunpack.c.l.b16 %v5459
  %v5787 = vunpack.c.l.b16 %v5460
  %v5788 = vunpack.c.l.b16 %v5461
  %v5789 = vunpack.c.l.b16 %v5462
  %v5790 = vunpack.c.l.b16 %v5463
  %v5791 = vunpack.c.l.b16 %v5464
  %v5792 = vunpack.c.l.b16 %v5465
  %v5793 = vunpack.c.l.b16 %v5466
  %v5794 = vunpack.c.l.b16 %v5467
  %v5795 = vunpack.c.l.b16 %v5468
  %v5796 = vunpack.c.l.b16 %v5469
  %v5797 = vunpack.c.l.b16 %v5470
  %v5798 = vunpack.c.l.b16 %v5471
  %v5799 = vunpack.c.l.b16 %v5472
  %v5800 = vunpack.c.l.b16 %v5473
  %v5801 = vunpack.c.l.b16 %v5474
  %v5802 = vunpack.c.l.b16 %v5475
  %v5803 = vunpack.c.l.b16 %v5476
  %v5804 = vunpack.c.l.b16 %v5477
  %v5805 = vunpack.c.l.b16 %v5478
  %v5806 = vunpack.c.l.b16 %v5479
  %v5807 = vunpack.c.l.b16 %v5480
  %v5808 = vunpack.c.l.b16 %v5481
  %v5809 = vunpack.c.l.b16 %v5482
  %v5810 = vunpack.c.l.b16 %v5483
  %v5811 = vunpack.c.l.b16 %v5484
  %v5812 = vunpack.c.l.b16 %v5485
  %v5813 = vunpack.c.l.b16 %v5486
  %v5814 = vunpack.c.l.b16 %v5487
  %v5815 = vunpack.c.l.b16 %v5488
  %v5816 = vunpack.c.l.b16 %v5489
  %v5817 = vunpack.c.l.b16 %v5490
  %v5818 = vunpack.c.l.b16 %v5491
  %v5819 = vunpack.c.l.b16 %v5492
  %v5820 = vunpack.c.l.b16 %v5493
  %v5821 = vunpack.c.l.b16 %v5494
  %v5822 = vunpack.c.l.b16 %v5495
  %v5823 = vunpack.c.l.b16 %v5496
  %v5824 = vunpack.c.l.b16 %v5497
  %v5825 = vunpack.c.l.b16 %v5498
  %v5826 = vunpack.c.l.b16 %v5499
  %v5827 = vunpack.c.l.b16 %v5500
  %v5828 = vunpack.c.l.b16 %v5501
  %v5829 = vunpack.c.l.b16 %v5502
  %v5830 = vunpack.c.l.b16 %v5503
  %v5831 = vunpack.c.l.b16 %v5504
  %v5832 = vunpack.c.l.b16 %v5505
  %v5833 = vunpack.c.l.b16 %v5506
  %v5834 = vunpack.c.l.b16 %v5507
  %v5835 = vunpack.c.l.b16 %v5508
  %v5836 = vunpack.c.l.b16 %v5509
  %v5837 = vunpack.c.l.b16 %v5510
  %v5838 = vunpack.c.l.b16 %v5511
  %v5839 = vunpack.c.l.b16 %v5512
  %v5840 = vunpack.c.l.b16 %v5513
  %v5841 = vunpack.c.l.b16 %v5514
  %v5842 = vunpack.c.l.b16 %v5515
  %v5843 = vunpack.c.l.b16 %v5516
  %v5844 = vunpack.c.l.b16 %v5517
  %v5845 = vunpack.c.l.b16 %v5518
  %v5846 = vunpack.c.l.b16 %v5519
  %v5847 = vunpack.c.l.b16 %v5520
  %v5848 = vunpack.c.l.b16 %v5521
  %v5849 = vunpack.c.l.b16 %v5522
  %v5850 = vunpack.c.l.b16 %v5523
  %v5851 = vunpack.c.l.b16 %v5524
  %v5852 = vunpack.c.l.b16 %v5525
  %v5853 = vunpack.c.l.b16 %v5526
  %v5854 = vunpack.c.l.b16 %v5527
  %v5855 = vunpack.c.l.b16 %v5528
  %v5856 = vunpack.c.l.b16 %v5529
  %v5857 = vunpack.c.l.b16 %v5530
  %v5858 = vunpack.c.l.b16 %v5531
  %v5859 = vunpack.c.l.b16 %v5532
  %v5860 = vunpack.c.l.b16 %v5533
  %v5861 = vunpack.c.l.b16 %v5534
  %v5862 = vunpack.c.l.b16 %v5535
  %v5863 = vunpack.c.l.b16 %v5536
  %v5864 = vunpack.c.l.b16 %v5537
  %v5865 = vunpack.c.l.b16 %v5538
  %v5866 = vunpack.c.l.b16 %v5539
  %v5867 = vunpack.c.l.b16 %v5540
  %v5868 = vunpack.c.l.b16 %v5541
  %v5869 = vunpack.c.l.b16 %v5542
  %v5870 = vunpack.c.l.b16 %v5543
  %v5871 = vunpack.c.l.b16 %v5544
  %v5872 = vunpack.c.l.b16 %v5545
  %v5873 = vunpack.c.l.b16 %v5546
  %v5874 = vunpack.c.l.b16 %v5547
  %v5875 = vunpack.c.l.b16 %v5548
  %v5876 = vunpack.c.l.b16 %v5549
  %v5877 = vunpack.c.l.b16 %v5550
  %v5878 = vunpack.c.l.b16 %v5551
  %v5879 = vunpack.c.l.b16 %v5552
  %v5880 = vunpack.c.l.b16 %v5553
  %v5881 = vunpack.c.l.b16 %v5554
  %v5882 = vunpack.c.l.b16 %v5555
  %v5883 = vunpack.c.l.b16 %v5556
  %v5884 = vunpack.c.l.b16 %v5557
  %v5885 = vunpack.c.l.b16 %v5558
  %v5886 = vunpack.c.l.b16 %v5559
  %v5887 = vunpack.c.l.b16 %v5560
  %v5888 = vunpack.c.l.b16 %v5561
  %v5889 = vunpack.c.l.b16 %v5562
  %v5890 = vunpack.c.l.b16 %v5563
  %v5891 = vunpack.c.l.b16 %v5564
  %v5892 = vunpack.c.l.b16 %v5565
  %v5893 = vunpack.c.l.b16 %v5566
  %v5894 = vunpack.c.l.b16 %v5567
  %v5895 = vunpack.c.l.b16 %v5568
  %v5896 = vunpack.c.l.b16 %v5569
  %v5897 = vunpack.c.l.b16 %v5570
  %v5898 = vunpack.c.l.b16 %v5571
  %v5899 = vunpack.c.l.b16 %v5572
  %v5900 = vunpack.c.l.b16 %v5573
  %v5901 = vunpack.c.l.b16 %v5574
  %v5902 = vunpack.c.l.b16 %v5575
  %v5903 = vunpack.c.l.b16 %v5576
  %v5904 = vunpack.c.l.b16 %v5577
  %v5905 = vunpack.c.l.b16 %v5578
  %v5906 = vunpack.c.l.b16 %v5579
  %v5907 = vunpack.c.l.b16 %v5580
  %v5908 = vunpack.c.l.b16 %v5581
  %v5909 = vunpack.c.l.b16 %v5582
  %v5910 = vunpack.c.l.b16 %v5583
  %v5911 = vunpack.c.l.b16 %v5584
  %v5912 = vunpack.c.l.b16 %v5585
  %v5913 = vunpack.c.l.b16 %v5586
  %v5914 = vunpack.c.l.b16 %v5587
  %v5915 = vunpack.c.l.b16 %v5588
  %v5916 = vunpack.c.l.b16 %v5589
  %v5917 = vunpack.c.l.b16 %v5590
  %v5918 = vunpack.c.l.b16 %v5591
  %v5919 = vunpack.c.l.b16 %v5592
  %v5920 = vunpack.c.l.b16 %v5593
  %v5921 = vunpack.c.l.b16 %v5594
  %v5922 = vunpack.c.l.b16 %v5595
  %v5923 = vunpack.c.l.b16 %v5596
  %v5924 = vunpack.c.l.b16 %v5597
  %v5925 = vunpack.c.l.b16 %v5598
  %v5926 = vunpack.c.l.b16 %v5599
  %v5927 = vunpack.c.l.b16 %v5600
  %v5928 = vunpack.c.l.b16 %v5601
  %v5929 = vunpack.c.l.b16 %v5602
  %v5930 = vunpack.c.l.b16 %v5603
  %v5931 = vunpack.c.l.b16 %v5604
  %v5932 = vunpack.c.l.b16 %v5605
  %v5933 = vpack.c.b16 %v5774, %v5773
  %v5934 = vpack.c.b16 %v5776, %v5775
  %v5935 = vpack.c.b16 %v5778, %v5777
  %v5936 = vpack.c.b16 %v5780, %v5779
  %v5937 = vpack.c.b16 %v5782, %v5781
  %v5938 = vpack.c.b16 %v5784, %v5783
  %v5939 = vpack.c.b16 %v5786, %v5785
  %v5940 = vpack.c.b16 %v5788, %v5787
  %v5941 = vpack.c.b16 %v5790, %v5789
  %v5942 = vpack.c.b16 %v5792, %v5791
  %v5943 = vpack.c.b16 %v5794, %v5793
  %v5944 = vpack.c.b16 %v5796, %v5795
  %v5945 = vpack.c.b16 %v5798, %v5797
  %v5946 = vpack.c.b16 %v5800, %v5799
  %v5947 = vpack.c.b16 %v5802, %v5801
  %v5948 = vpack.c.b16 %v5804, %v5803
  %v5949 = vpack.c.b16 %v5806, %v5805
  %v5950 = vpack.c.b16 %v5808, %v5807
  %v5951 = vpack.c.b16 %v5810, %v5809
  %v5952 = vpack.c.b16 %v5812, %v5811
  %v5953 = vpack.c.b16 %v5814, %v5813
  %v5954 = vpack.c.b16 %v5816, %v5815
  %v5955 = vpack.c.b16 %v5818, %v5817
  %v5956 = vpack.c.b16 %v5820, %v5819
  %v5957 = vpack.c.b16 %v5822, %v5821
  %v5958 = vpack.c.b16 %v5824, %v5823
  %v5959 = vpack.c.b16 %v5826, %v5825
  %v5960 = vpack.c.b16 %v5828, %v5827
  %v5961 = vpack.c.b16 %v5830, %v5829
  %v5962 = vpack.c.b16 %v5832, %v5831
  %v5963 = vpack.c.b16 %v5834, %v5833
  %v5964 = vpack.c.b16 %v5836, %v5835
  %v5965 = vpack.c.b16 %v5838, %v5837
  %v5966 = vpack.c.b16 %v5840, %v5839
  %v5967 = vpack.c.b16 %v5842, %v5841
  %v5968 = vpack.c.b16 %v5844, %v5843
  %v5969 = vpack.c.b16 %v5846, %v5845
  %v5970 = vpack.c.b16 %v5848, %v5847
  %v5971 = vpack.c.b16 %v5850, %v5849
  %v5972 = vpack.c.b16 %v5852, %v5851
  %v5973 = vpack.c.b16 %v5854, %v5853
  %v5974 = vpack.c.b16 %v5856, %v5855
  %v5975 = vpack.c.b16 %v5858, %v5857
  %v5976 = vpack.c.b16 %v5860, %v5859
  %v5977 = vpack.c.b16 %v5862, %v5861
  %v5978 = vpack.c.b16 %v5864, %v5863
  %v5979 = vpack.c.b16 %v5866, %v5865
  %v5980 = vpack.c.b16 %v5868, %v5867
  %v5981 = vpack.c.b16 %v5870, %v5869
  %v5982 = vpack.c.b16 %v5872, %v5871
  %v5983 = vpack.c.b16 %v5874, %v5873
  %v5984 = vpack.c.b16 %v5876, %v5875
  %v5985 = vpack.c.b16 %v5878, %v5877
  %v5986 = vpack.c.b16 %v5880, %v5879
  %v5987 = vpack.c.b16 %v5882, %v5881
  %v5988 = vpack.c.b16 %v5884, %v5883
  %v5989 = vpack.c.b16 %v5886, %v5885
  %v5990 = vpack.c.b16 %v5888, %v5887
  %v5991 = vpack.c.b16 %v5890, %v5889
  %v5992 = vpack.c.b16 %v5892, %v5891
  %v5993 = vpack.c.b16 %v5894, %v5893
  %v5994 = vpack.c.b16 %v5896, %v5895
  %v5995 = vpack.c.b16 %v5898, %v5897
  %v5996 = vpack.c.b16 %v5900, %v5899
  %v5997 = vpack.c.b16 %v5902, %v5901
  %v5998 = vpack.c.b16 %v5904, %v5903
  %v5999 = vpack.c.b16 %v5906, %v5905
  %v6000 = vpack.c.b16 %v5908, %v5907
  %v6001 = vpack.c.b16 %v5910, %v5909
  %v6002 = vpack.c.b16 %v5912, %v5911
  %v6003 = vpack.c.b16 %v5914, %v5913
  %v6004 = vpack.c.b16 %v5916, %v5915
  %v6005 = vpack.c.b16 %v5918, %v5917
  %v6006 = vpack.c.b16 %v5920, %v5919
  %v6007 = vpack.c.b16 %v5922, %v5921
  %v6008 = vpack.c.b16 %v5924, %v5923
  %v6009 = vpack.c.b16 %v5926, %v5925
  %v6010 = vpack.c.b16 %v5928, %v5927
  %v6011 = vpack.c.b16 %v5930, %v5929
  %v6012 = vpack.c.b16 %v5932, %v5931
  %6093 = vmatprep.subr.bf16.mxu0 0
  %6094 = vmatpush1.bf16.msra.mxu0 %v5940
  %6095 = vmatprep.subr.bf16.mxu0 0
  %6096 = vmatpush1.bf16.msra.mxu0 %v5939
  %6097 = vmatprep.subr.bf16.mxu0 0
  %6098 = vmatpush1.bf16.msra.mxu0 %v5938
  %6099 = vmatprep.subr.bf16.mxu0 0
  %6100 = vmatpush1.bf16.msra.mxu0 %v5937
  %6101 = vmatprep.subr.bf16.mxu0 0
  %6102 = vmatpush1.bf16.msra.mxu0 %v5936
  %6103 = vmatprep.subr.bf16.mxu0 0
  %6104 = vmatpush1.bf16.msra.mxu0 %v5935
  %6105 = vmatprep.subr.bf16.mxu0 0
  %6106 = vmatpush1.bf16.msra.mxu0 %v5934
  %6107 = vmatprep.subr.bf16.mxu0 0
  %6108 = vmatpush1.bf16.msra.mxu0 %v5933
  %6109 = vmatprep.subr.bf16.mxu0 0
  %6110 = vmatpush2.bf16.msra.mxu0 %v5948
  %6111 = vmatprep.subr.bf16.mxu0 0
  %6112 = vmatpush2.bf16.msra.mxu0 %v5947
  %6113 = vmatprep.subr.bf16.mxu0 0
  %6114 = vmatpush2.bf16.msra.mxu0 %v5946
  %6115 = vmatprep.subr.bf16.mxu0 0
  %6116 = vmatpush2.bf16.msra.mxu0 %v5945
  %6117 = vmatprep.subr.bf16.mxu0 0
  %6118 = vmatpush2.bf16.msra.mxu0 %v5944
  %6119 = vmatprep.subr.bf16.mxu0 0
  %6120 = vmatpush2.bf16.msra.mxu0 %v5943
  %6121 = vmatprep.subr.bf16.mxu0 0
  %6122 = vmatpush2.bf16.msra.mxu0 %v5942
  %6123 = vmatprep.subr.bf16.mxu0 0
  %6124 = vmatpush2.bf16.msra.mxu0 %v5941
  %6125 = vmatprep.mubr.bf16.mxu0 %v5437
  %6126 = vmatmul.mubr.bf16.gmra.mxu0 %v5436
  %v6127 = vpop.f32.mrf.mxu0
  %v6128 = vadd.f32 %v5611, %v6127
  %v6129 = vpop.f32.mrf.mxu0
  %v6130 = vpop.f32.mrf.mxu0
  %v6131 = vpop.f32.mrf.mxu0
  %6132 = vdwg.mxu0
  %6133 = vmatprep.subr.bf16.mxu0 0
  %6134 = vmatpush1.bf16.msra.mxu0 %v5956
  %6135 = vmatprep.subr.bf16.mxu0 0
  %6136 = vmatpush1.bf16.msra.mxu0 %v5955
  %6137 = vmatprep.subr.bf16.mxu0 0
  %6138 = vmatpush1.bf16.msra.mxu0 %v5954
  %6139 = vmatprep.subr.bf16.mxu0 0
  %6140 = vmatpush1.bf16.msra.mxu0 %v5953
  %6141 = vmatprep.subr.bf16.mxu0 0
  %6142 = vmatpush1.bf16.msra.mxu0 %v5952
  %6143 = vmatprep.subr.bf16.mxu0 0
  %6144 = vmatpush1.bf16.msra.mxu0 %v5951
  %6145 = vmatprep.subr.bf16.mxu0 0
  %6146 = vmatpush1.bf16.msra.mxu0 %v5950
  %6147 = vmatprep.subr.bf16.mxu0 0
  %6148 = vmatpush1.bf16.msra.mxu0 %v5949
  %6149 = vmatprep.subr.bf16.mxu0 0
  %6150 = vmatpush2.bf16.msra.mxu0 %v5964
  %6151 = vmatprep.subr.bf16.mxu0 0
  %6152 = vmatpush2.bf16.msra.mxu0 %v5963
  %6153 = vmatprep.subr.bf16.mxu0 0
  %6154 = vmatpush2.bf16.msra.mxu0 %v5962
  %6155 = vmatprep.subr.bf16.mxu0 0
  %6156 = vmatpush2.bf16.msra.mxu0 %v5961
  %6157 = vmatprep.subr.bf16.mxu0 0
  %6158 = vmatpush2.bf16.msra.mxu0 %v5960
  %6159 = vmatprep.subr.bf16.mxu0 0
  %6160 = vmatpush2.bf16.msra.mxu0 %v5959
  %6161 = vmatprep.subr.bf16.mxu0 0
  %6162 = vmatpush2.bf16.msra.mxu0 %v5958
  %6163 = vmatprep.subr.bf16.mxu0 0
  %6164 = vmatpush2.bf16.msra.mxu0 %v5957
  %6165 = vmatprep.mubr.bf16.mxu0 %v5439
  %6166 = vmatmul.mubr.bf16.gmra.mxu0 %v5438
  %v6167 = vpop.f32.mrf.mxu0
  %v6168 = vadd.f32 %v6128, %v6167
  %v6169 = vpop.f32.mrf.mxu0
  %v6170 = vpop.f32.mrf.mxu0
  %v6171 = vpop.f32.mrf.mxu0
  %6172 = vdwg.mxu0
  %6173 = vmatprep.subr.bf16.mxu0 0
  %6174 = vmatpush1.bf16.msra.mxu0 %v5972
  %6175 = vmatprep.subr.bf16.mxu0 0
  %6176 = vmatpush1.bf16.msra.mxu0 %v5971
  %6177 = vmatprep.subr.bf16.mxu0 0
  %6178 = vmatpush1.bf16.msra.mxu0 %v5970
  %6179 = vmatprep.subr.bf16.mxu0 0
  %6180 = vmatpush1.bf16.msra.mxu0 %v5969
  %6181 = vmatprep.subr.bf16.mxu0 0
  %6182 = vmatpush1.bf16.msra.mxu0 %v5968
  %6183 = vmatprep.subr.bf16.mxu0 0
  %6184 = vmatpush1.bf16.msra.mxu0 %v5967
  %6185 = vmatprep.subr.bf16.mxu0 0
  %6186 = vmatpush1.bf16.msra.mxu0 %v5966
  %6187 = vmatprep.subr.bf16.mxu0 0
  %6188 = vmatpush1.bf16.msra.mxu0 %v5965
  %6189 = vmatprep.subr.bf16.mxu0 0
  %6190 = vmatpush2.bf16.msra.mxu0 %v5980
  %6191 = vmatprep.subr.bf16.mxu0 0
  %6192 = vmatpush2.bf16.msra.mxu0 %v5979
  %6193 = vmatprep.subr.bf16.mxu0 0
  %6194 = vmatpush2.bf16.msra.mxu0 %v5978
  %6195 = vmatprep.subr.bf16.mxu0 0
  %6196 = vmatpush2.bf16.msra.mxu0 %v5977
  %6197 = vmatprep.subr.bf16.mxu0 0
  %6198 = vmatpush2.bf16.msra.mxu0 %v5976
  %6199 = vmatprep.subr.bf16.mxu0 0
  %6200 = vmatpush2.bf16.msra.mxu0 %v5975
  %6201 = vmatprep.subr.bf16.mxu0 0
  %6202 = vmatpush2.bf16.msra.mxu0 %v5974
  %6203 = vmatprep.subr.bf16.mxu0 0
  %6204 = vmatpush2.bf16.msra.mxu0 %v5973
  %6205 = vmatprep.mubr.bf16.mxu0 %v5441
  %6206 = vmatmul.mubr.bf16.gmra.mxu0 %v5440
  %v6207 = vpop.f32.mrf.mxu0
  %v6208 = vadd.f32 %v6168, %v6207
  %v6209 = vpop.f32.mrf.mxu0
  %v6210 = vpop.f32.mrf.mxu0
  %v6211 = vpop.f32.mrf.mxu0
  %6212 = vdwg.mxu0
  %6213 = vmatprep.subr.bf16.mxu0 0
  %6214 = vmatpush1.bf16.msra.mxu0 %v5988
  %6215 = vmatprep.subr.bf16.mxu0 0
  %6216 = vmatpush1.bf16.msra.mxu0 %v5987
  %6217 = vmatprep.subr.bf16.mxu0 0
  %6218 = vmatpush1.bf16.msra.mxu0 %v5986
  %6219 = vmatprep.subr.bf16.mxu0 0
  %6220 = vmatpush1.bf16.msra.mxu0 %v5985
  %6221 = vmatprep.subr.bf16.mxu0 0
  %6222 = vmatpush1.bf16.msra.mxu0 %v5984
  %6223 = vmatprep.subr.bf16.mxu0 0
  %6224 = vmatpush1.bf16.msra.mxu0 %v5983
  %6225 = vmatprep.subr.bf16.mxu0 0
  %6226 = vmatpush1.bf16.msra.mxu0 %v5982
  %6227 = vmatprep.subr.bf16.mxu0 0
  %6228 = vmatpush1.bf16.msra.mxu0 %v5981
  %6229 = vmatprep.subr.bf16.mxu0 0
  %6230 = vmatpush2.bf16.msra.mxu0 %v5996
  %6231 = vmatprep.subr.bf16.mxu0 0
  %6232 = vmatpush2.bf16.msra.mxu0 %v5995
  %6233 = vmatprep.subr.bf16.mxu0 0
  %6234 = vmatpush2.bf16.msra.mxu0 %v5994
  %6235 = vmatprep.subr.bf16.mxu0 0
  %6236 = vmatpush2.bf16.msra.mxu0 %v5993
  %6237 = vmatprep.subr.bf16.mxu0 0
  %6238 = vmatpush2.bf16.msra.mxu0 %v5992
  %6239 = vmatprep.subr.bf16.mxu0 0
  %6240 = vmatpush2.bf16.msra.mxu0 %v5991
  %6241 = vmatprep.subr.bf16.mxu0 0
  %6242 = vmatpush2.bf16.msra.mxu0 %v5990
  %6243 = vmatprep.subr.bf16.mxu0 0
  %6244 = vmatpush2.bf16.msra.mxu0 %v5989
  %6245 = vmatprep.mubr.bf16.mxu0 %v5443
  %6246 = vmatmul.mubr.bf16.gmra.mxu0 %v5442
  %v6247 = vpop.f32.mrf.mxu0
  %v6248 = vadd.f32 %v6208, %v6247
  %v6249 = vpop.f32.mrf.mxu0
  %v6250 = vpop.f32.mrf.mxu0
  %v6251 = vpop.f32.mrf.mxu0
  %6252 = vdwg.mxu0
  %6253 = vmatprep.subr.bf16.mxu0 0
  %6254 = vmatpush1.bf16.msra.mxu0 %v6004
  %6255 = vmatprep.subr.bf16.mxu0 0
  %6256 = vmatpush1.bf16.msra.mxu0 %v6003
  %6257 = vmatprep.subr.bf16.mxu0 0
  %6258 = vmatpush1.bf16.msra.mxu0 %v6002
  %6259 = vmatprep.subr.bf16.mxu0 0
  %6260 = vmatpush1.bf16.msra.mxu0 %v6001
  %6261 = vmatprep.subr.bf16.mxu0 0
  %6262 = vmatpush1.bf16.msra.mxu0 %v6000
  %6263 = vmatprep.subr.bf16.mxu0 0
  %6264 = vmatpush1.bf16.msra.mxu0 %v5999
  %6265 = vmatprep.subr.bf16.mxu0 0
  %6266 = vmatpush1.bf16.msra.mxu0 %v5998
  %6267 = vmatprep.subr.bf16.mxu0 0
  %6268 = vmatpush1.bf16.msra.mxu0 %v5997
  %6269 = vmatprep.subr.bf16.mxu0 0
  %6270 = vmatpush2.bf16.msra.mxu0 %v6012
  %6271 = vmatprep.subr.bf16.mxu0 0
  %6272 = vmatpush2.bf16.msra.mxu0 %v6011
  %6273 = vmatprep.subr.bf16.mxu0 0
  %6274 = vmatpush2.bf16.msra.mxu0 %v6010
  %6275 = vmatprep.subr.bf16.mxu0 0
  %6276 = vmatpush2.bf16.msra.mxu0 %v6009
  %6277 = vmatprep.subr.bf16.mxu0 0
  %6278 = vmatpush2.bf16.msra.mxu0 %v6008
  %6279 = vmatprep.subr.bf16.mxu0 0
  %6280 = vmatpush2.bf16.msra.mxu0 %v6007
  %6281 = vmatprep.subr.bf16.mxu0 0
  %6282 = vmatpush2.bf16.msra.mxu0 %v6006
  %6283 = vmatprep.subr.bf16.mxu0 0
  %6284 = vmatpush2.bf16.msra.mxu0 %v6005
  %6285 = vmatprep.mubr.bf16.mxu0 %v5445
  %6286 = vmatmul.mubr.bf16.gmra.mxu0 %v5444
  %v6287 = vpop.f32.mrf.mxu0
  %v6288 = vadd.f32 %v6248, %v6287
  %v6289 = vpop.f32.mrf.mxu0
  %v6290 = vpop.f32.mrf.mxu0
  %v6291 = vpop.f32.mrf.mxu0
  %6292 = vdwg.mxu0
  %6293 = vst [vmem:[%s5] sm:$0xff] %v6288
  // Predicated region
  $region22: #{multi_head_classifier_forward.1} parent=0 // pred_check
    _
  $region23: #{multi_head_classifier_forward.1} parent=0 // pred_check_branch
    %6295 = sbr.rel (0) target = $region25
  $region24: #{multi_head_classifier_forward.1} parent=0 // pred_region
    _
  $region25: #{multi_head_classifier_forward.1} parent=0 // pred_fallthru
    _
  // Predicated region
  $region26: #{multi_head_classifier_forward.1} parent=0 // pred_check
    _
  $region27: #{multi_head_classifier_forward.1} parent=0 // pred_check_branch
    %6297 = sbr.rel (0) target = $region29
  $region28: #{multi_head_classifier_forward.1} parent=0 // pred_region
    _
  $region29: #{multi_head_classifier_forward.1} parent=0 // pred_fallthru
    _

</llo_original>
